<compile_context>
chip_gen: v7x
topology: tpu7x:2x2x1
jax: 0.10.0
libtpu: 0.0.40
codegen_flags: <defaults>
</compile_context>

<pallas_src>
import functools
import math

import jax
import jax.numpy as jnp
from jax import lax
from jax.experimental import pallas as pl
from jax.experimental.pallas import tpu as pltpu

LN_EPS = 1e-5   # PyTorch LayerNorm / TransformerEncoderLayer default
LANES = 128


def _round_up(v, m):
    return -(-v // m) * m


def _pack_params(params, input_dim, d, heads, ff, proto_dim, out_cols):
    """Pack all weights/biases into one (R, slab_w) f32 slab.

    Every segment is padded to a multiple of 8 rows so it starts on an (8,128)
    sublane-tile boundary. Matrices are stored in "x @ W" orientation (already
    transposed from torch's (out,in) layout). Returns (slab, offsets) with
    offsets[name] = (row_start, n_rows, n_cols).
    """
    f32 = jnp.float32
    sqrt_d = math.sqrt(d)
    Dh = d // heads

    wenc_T = jnp.asarray(params["wenc"], f32).T            # (input_dim, d)
    benc = jnp.asarray(params["benc"], f32)                # (d,)
    in_w = jnp.asarray(params["in_proj_w"], f32)           # (3d, d) torch layout
    in_b = jnp.asarray(params["in_proj_b"], f32)           # (3d,)
    wq_T = in_w[0:d].T                                     # (d, d)
    wkv_T = in_w[d:3 * d].T                                # (d, 2d)  [K | V]
    bq = in_b[0:d]
    bkv = in_b[d:3 * d]

    # Fused row-0 projection: one matmul gives [seq0 | q0 | k0 | v0].
    #   seq0 = (x @ wenc^T + benc) * sqrt(d)
    #   q0/k0/v0 = seq0 @ W{q,kv}^T + b{q,kv}
    w_seq = sqrt_d * wenc_T                                # (input_dim, d)
    b_seq = sqrt_d * benc                                  # (d,)
    wfx = jnp.concatenate([w_seq, w_seq @ wq_T, w_seq @ wkv_T], axis=1)     # (in, 4d)
    bfx = jnp.concatenate([b_seq, b_seq @ wq_T + bq,
                           b_seq @ wkv_T + bkv]).reshape(1, 4 * d)          # (1, 4d)

    # Block-diagonal head-sum (d,H) / head-expand (H,d) masks, host-computed.
    rid = jnp.arange(d)[:, None] // Dh
    head_sum = (rid == jnp.arange(heads)[None, :]).astype(f32)              # (d, H)
    head_exp = head_sum.T                                                   # (H, d)

    # Decoder padded to a lane-dense 128-column output.
    wdec_T = jnp.asarray(params["wdec"], f32).T                             # (d, proto_dim)
    wdec_p = jnp.pad(wdec_T, ((0, 0), (0, out_cols - proto_dim)))
    bdec_p = jnp.pad(jnp.asarray(params["bdec"], f32),
                     (0, out_cols - proto_dim)).reshape(1, out_cols)

    segs = [
        ("wfx",   wfx),                                           # (input_dim, 4d)
        ("wkv_s", sqrt_d * wkv_T),                                 # (d, 2d): sqrt(d) folded in
        ("wo",    jnp.asarray(params["wo"], f32).T),               # (d, d)
        ("w1",    jnp.asarray(params["w1"], f32).T),               # (d, ff)
        ("w2",    jnp.asarray(params["w2"], f32).T),               # (ff, d)
        ("wdec",  wdec_p),                                         # (d, out_cols)
        ("hsum",  head_sum),                                       # (d, H)
        ("hexp",  head_exp),                                       # (H, d)
        ("bfx",   bfx),                                            # (1, 4d)
        ("bkv",   bkv.reshape(1, 2 * d)),
        ("bo",    jnp.asarray(params["bo"], f32).reshape(1, d)),
        ("ln1_g", jnp.asarray(params["ln1_g"], f32).reshape(1, d)),
        ("ln1_b", jnp.asarray(params["ln1_b"], f32).reshape(1, d)),
        ("b1",    jnp.asarray(params["b1"], f32).reshape(1, ff)),
        ("b2",    jnp.asarray(params["b2"], f32).reshape(1, d)),
        ("ln2_g", jnp.asarray(params["ln2_g"], f32).reshape(1, d)),
        ("ln2_b", jnp.asarray(params["ln2_b"], f32).reshape(1, d)),
        ("bdec",  bdec_p),                                         # (1, out_cols)
    ]

    slab_w = _round_up(max(a.shape[1] for _, a in segs), LANES)
    offsets, blocks, r = {}, [], 0
    for name, a in segs:
        nr, nc = a.shape
        offsets[name] = (r, nr, nc)
        nr8 = _round_up(nr, 8)                       # 8-row sublane alignment
        blocks.append(jnp.pad(a, ((0, nr8 - nr), (0, slab_w - nc))))
        r += nr8
    return jnp.concatenate(blocks, axis=0), offsets


def _make_kernel(offsets, *, d, heads, Sp, TB):
    H = heads
    Dh = d // heads
    scale = float(1.0 / math.sqrt(Dh))

    def seg(slab_ref, name):
        r0, nr, nc = offsets[name]
        return slab_ref[r0:r0 + nr, 0:nc]

    def layer_norm(z, g, b):
        mu = jnp.mean(z, axis=-1, keepdims=True)
        zc = z - mu
        var = jnp.mean(zc * zc, axis=-1, keepdims=True)
        return zc * lax.rsqrt(var + LN_EPS) * g + b

    def kernel(x_ref, ps_ref, slab_ref, out_ref):
        f32 = jnp.float32
        w = functools.partial(seg, slab_ref)

        # --- fused row-0 projection: [seq0 | q0 | k0 | v0] in one matmul ---
        fx = jnp.dot(x_ref[...], w("wfx"), preferred_element_type=f32) + w("bfx")
        seq0 = fx[:, 0:d]                      # (TB, d) = x_enc * sqrt(d_model)
        q0   = fx[:, d:2 * d]                  # (TB, d)
        k0   = fx[:, 2 * d:3 * d]              # (TB, d)
        v0   = fx[:, 3 * d:4 * d]              # (TB, d)

        # --- K/V for proto rows; sqrt(d_model) folded into wkv_s at pack time ---
        kv = jnp.dot(ps_ref[...].reshape(TB * Sp, d), w("wkv_s"),
                     preferred_element_type=f32) + w("bkv")          # (TB*Sp, 2d)
        kp = kv[:, 0:d].reshape(TB, Sp, d)
        vp = kv[:, d:2 * d].reshape(TB, Sp, d)

        head_sum = w("hsum")                   # (d, H) block-diagonal per-head sum
        head_exp = w("hexp")                   # (H, d) per-head expand

        # --- per-head scores for row 0's query against all S = 1 + Sp keys ---
        s0 = jnp.dot(q0 * k0, head_sum, preferred_element_type=f32) * scale   # (TB, H)
        prod = q0[:, None, :] * kp                                            # (TB, Sp, d)
        sp_ = jnp.dot(prod.reshape(TB * Sp, d), head_sum,
                      preferred_element_type=f32).reshape(TB, Sp, H) * scale  # (TB, Sp, H)

        # --- softmax over keys ---
        m = jnp.maximum(s0, jnp.max(sp_, axis=1))                             # (TB, H)
        p0 = jnp.exp(s0 - m)
        pp = jnp.exp(sp_ - m[:, None, :])
        inv = pl.reciprocal(p0 + jnp.sum(pp, axis=1), approx=True)            # EUP
        p0 = p0 * inv
        pp = pp * inv[:, None, :]

        # --- context (concat of per-head contexts) ---
        p0e = jnp.dot(p0, head_exp, preferred_element_type=f32)               # (TB, d)
        ppe = jnp.dot(pp.reshape(TB * Sp, H), head_exp,
                      preferred_element_type=f32).reshape(TB, Sp, d)
        ctx = p0e * v0 + jnp.sum(ppe * vp, axis=1)                            # (TB, d)

        attn0 = jnp.dot(ctx, w("wo"), preferred_element_type=f32) + w("bo")

        # --- post-norm encoder layer (row 0 only; exact for n_layer == 1) ---
        h1 = layer_norm(seq0 + attn0, w("ln1_g"), w("ln1_b"))
        ffv = jnp.maximum(jnp.dot(h1, w("w1"), preferred_element_type=f32) + w("b1"), 0.0)
        ffv = jnp.dot(ffv, w("w2"), preferred_element_type=f32) + w("b2")
        h2 = layer_norm(h1 + ffv, w("ln2_g"), w("ln2_b"))

        # --- decoder, lane-dense (TB, 128) store; wrapper slices proto_dim ---
        out_ref[...] = jnp.dot(h2, w("wdec"), preferred_element_type=f32) + w("bdec")

    return kernel


def transformer_proto_predictor(x, proto_snap, params, heads, *, block_b=512):
    """Pallas wrapper. x: (B, input_dim), proto_snap: (B, Sp, d) -> (B, proto_dim)."""
    f32 = jnp.float32
    B, input_dim = x.shape
    _, Sp, d = proto_snap.shape
    assert d % heads == 0
    ff = params["w1"].shape[0]
    proto_dim = params["wdec"].shape[0]
    out_cols = _round_up(proto_dim, LANES)       # lane-dense output columns

    # Batch blocking: large TB amortizes per-step overhead; if the whole batch
    # fits in one block, split in two so the "parallel" grid axis can shard
    # across v7x's two TensorCores (neutral on v5e/v6e).
    B8 = _round_up(B, 8)
    TB = min(_round_up(block_b, 8), B8)
    if TB == B8 and B8 >= 16 and B8 % 16 == 0:
        TB = B8 // 2
    n_blocks = -(-B8 // TB)
    B_pad = n_blocks * TB

    # Only pad the ragged batch tail (padded rows are zeros -> finite math,
    # discarded); no extra HBM copy when B is already a block multiple.
    if B_pad != B:
        x_in = jnp.pad(x.astype(f32), ((0, B_pad - B), (0, 0)))
        ps_in = jnp.pad(proto_snap.astype(f32), ((0, B_pad - B), (0, 0), (0, 0)))
    else:
        x_in = x.astype(f32)
        ps_in = proto_snap.astype(f32)

    slab, offsets = _pack_params(params, input_dim, d, heads, ff, proto_dim, out_cols)
    kernel = _make_kernel(offsets, d=d, heads=heads, Sp=Sp, TB=TB)

    out = pl.pallas_call(
        kernel,
        out_shape=jax.ShapeDtypeStruct((B_pad, out_cols), f32),
        grid_spec=pltpu.PrefetchScalarGridSpec(
            num_scalar_prefetch=0,
            grid=(n_blocks,),
            in_specs=[
                pl.BlockSpec((TB, input_dim), lambda b: (b, 0)),
                pl.BlockSpec((TB, Sp, d), lambda b: (b, 0, 0)),
                # grid-invariant packed weight slab (constant block index ->
                # fetched once; ~170 KB)
                pl.BlockSpec(slab.shape, lambda b: (0, 0)),
            ],
            out_specs=pl.BlockSpec((TB, out_cols), lambda b: (b, 0)),
        ),
        compiler_params=pltpu.CompilerParams(
            dimension_semantics=("parallel",),       # independent batch blocks
            vmem_limit_bytes=32 * 1024 * 1024,       # safe on v5e/v6e/v7x
        ),
    )(x_in, ps_in, slab)
    return out[:B, :proto_dim]


def init_params(key, input_dim, d, heads, ff, proto_dim):
    """Deterministic synthetic parameters (torch layouts: Linear weight = (out, in))."""
    ks = iter(jax.random.split(key, 12))
    u = lambda k, shape, r: jax.random.uniform(k, shape, jnp.float32, -r, r)
    return {
        "wenc": u(next(ks), (d, input_dim), 0.1),          # encoder.weight ~ U(-0.1, 0.1)
        "benc": u(next(ks), (d,), 0.05),
        "in_proj_w": u(next(ks), (3 * d, d), 1.0 / math.sqrt(d)),
        "in_proj_b": u(next(ks), (3 * d,), 0.05),
        "wo": u(next(ks), (d, d), 1.0 / math.sqrt(d)),
        "bo": u(next(ks), (d,), 0.05),
        "ln1_g": jnp.ones((d,), jnp.float32),
        "ln1_b": jnp.zeros((d,), jnp.float32),
        "w1": u(next(ks), (ff, d), 1.0 / math.sqrt(d)),
        "b1": u(next(ks), (ff,), 0.05),
        "w2": u(next(ks), (d, ff), 1.0 / math.sqrt(ff)),
        "b2": u(next(ks), (d,), 0.05),
        "ln2_g": jnp.ones((d,), jnp.float32),
        "ln2_b": jnp.zeros((d,), jnp.float32),
        "wdec": u(next(ks), (proto_dim, d), 0.1),           # decoder.weight ~ U(-0.1, 0.1)
        "bdec": jnp.zeros((proto_dim,), jnp.float32),       # decoder.bias = 0
    }


def reference(x, proto_snap, params, heads):
    """Pure-JAX reference of the PyTorch forward (eval mode)."""
    B, _ = x.shape
    _, Sp, d = proto_snap.shape
    S = Sp + 1
    Dh = d // heads
    xe = x @ params["wenc"].T + params["benc"]
    seq = jnp.concatenate([xe[:, None, :], proto_snap], axis=1) * math.sqrt(d)
    wq, wk, wv = jnp.split(params["in_proj_w"], 3, axis=0)
    bq, bk, bv = jnp.split(params["in_proj_b"], 3, axis=0)
    q, k, v = seq @ wq.T + bq, seq @ wk.T + bk, seq @ wv.T + bv
    sp = lambda t: t.reshape(B, S, heads, Dh).transpose(0, 2, 1, 3)
    qh, kh, vh = sp(q), sp(k), sp(v)
    s = jnp.einsum("bhqd,bhkd->bhqk", qh, kh) / math.sqrt(Dh)
    p = jax.nn.softmax(s, axis=-1)
    ctx = jnp.einsum("bhqk,bhkd->bhqd", p, vh).transpose(0, 2, 1, 3).reshape(B, S, d)
    attn = ctx @ params["wo"].T + params["bo"]

    def layer_norm(z, g, b):
        mu = z.mean(-1, keepdims=True)
        var = ((z - mu) ** 2).mean(-1, keepdims=True)
        return (z - mu) / jnp.sqrt(var + LN_EPS) * g + b

    h1 = layer_norm(seq + attn, params["ln1_g"], params["ln1_b"])
    ffv = jnp.maximum(h1 @ params["w1"].T + params["b1"], 0.0)
    ffv = ffv @ params["w2"].T + params["b2"]
    h2 = layer_norm(h1 + ffv, params["ln2_g"], params["ln2_b"])
    return h2[:, 0] @ params["wdec"].T + params["bdec"]


if __name__ == "__main__":
    # Module config: query_dim=32, heads=4, dim_feedforward=64, n_layer=1,
    # proto_dim=16, use_encoder=True, input_dim=24, pos_encoder=None.
    B, input_dim, d, heads, ff, proto_dim, Sp = 2, 24, 32, 4, 64, 16, 7

    key = jax.random.PRNGKey(0)
    kx, kp, kw = jax.random.split(key, 3)
    x = jax.random.normal(kx, (B, input_dim), jnp.float32)
    proto_snap = jax.random.normal(kp, (B, Sp, d), jnp.float32)
    params = init_params(kw, input_dim, d, heads, ff, proto_dim)

    out = transformer_proto_predictor(x, proto_snap, params, heads)
    out = jax.block_until_ready(out)

    ref = reference(x, proto_snap, params, heads)
    assert out.shape == (B, proto_dim)
    assert jnp.allclose(out, ref, rtol=2e-3, atol=2e-3), (out, ref)
    print("KERNEL_OK")
</pallas_src>

<mosaic_0001>
module attributes {stable_mosaic.version = 11 : i64} {
  func.func @kernel(%arg0: i32, %arg1: memref<8x24xf32, #tpu.memory_space<vmem>>, %arg2: memref<8x7x32xf32, #tpu.memory_space<vmem>>, %arg3: memref<336x128xf32, #tpu.memory_space<vmem>>, %arg4: memref<8x128xf32, #tpu.memory_space<vmem>>) attributes {dimension_semantics = [#tpu.dimension_semantics<parallel>], iteration_bounds = array<i64: 1>, scalar_prefetch = 0 : i64, scratch_operands = 0 : i64, tpu.core_type = #tpu.core_type<tc>, window_params = [{transform_indices = @transform_0, window_bounds = array<i64: 8, 24>}, {transform_indices = @transform_1, window_bounds = array<i64: 8, 7, 32>}, {pipeline_mode = #tpu.pipeline_mode<synchronous>, transform_indices = @transform_2, window_bounds = array<i64: 336, 128>}, {transform_indices = @transform_3, window_bounds = array<i64: 8, 128>}]} {
    %c0 = arith.constant 0 : index
    %c0_0 = arith.constant 0 : index
    %0 = vector.load %arg1[%c0, %c0_0] : memref<8x24xf32, #tpu.memory_space<vmem>>, vector<8x24xf32>
    %c0_1 = arith.constant 0 : index
    %c0_2 = arith.constant 0 : index
    %1 = vector.load %arg3[%c0_1, %c0_2] : memref<336x128xf32, #tpu.memory_space<vmem>>, vector<24x128xf32>
    %cst = arith.constant dense<0.000000e+00> : vector<8x128xf32>
    %2 = tpu.matmul %0, %1, %cst {dimension_numbers = #tpu.dot_dimension_numbers<[1], [0], [0], [1], [0, 0, 1, 1], [], []>} : vector<8x24xf32>, vector<24x128xf32>, vector<8x128xf32> -> vector<8x128xf32>
    %c256 = arith.constant 256 : index
    %c0_3 = arith.constant 0 : index
    %3 = vector.load %arg3[%c256, %c0_3] : memref<336x128xf32, #tpu.memory_space<vmem>>, vector<1x128xf32>
    %4 = vector.broadcast %3 : vector<1x128xf32> to vector<8x128xf32>
    %5 = arith.addf %2, %4 : vector<8x128xf32>
    %6 = vector.extract_strided_slice %5 {offsets = [0, 0], sizes = [8, 32], strides = [1, 1]} : vector<8x128xf32> to vector<8x32xf32>
    %7 = vector.extract_strided_slice %5 {offsets = [0, 32], sizes = [8, 32], strides = [1, 1]} : vector<8x128xf32> to vector<8x32xf32>
    %8 = vector.extract_strided_slice %5 {offsets = [0, 64], sizes = [8, 32], strides = [1, 1]} : vector<8x128xf32> to vector<8x32xf32>
    %9 = vector.extract_strided_slice %5 {offsets = [0, 96], sizes = [8, 32], strides = [1, 1]} : vector<8x128xf32> to vector<8x32xf32>
    %c0_4 = arith.constant 0 : index
    %c0_5 = arith.constant 0 : index
    %c0_6 = arith.constant 0 : index
    %10 = vector.load %arg2[%c0_4, %c0_5, %c0_6] : memref<8x7x32xf32, #tpu.memory_space<vmem>>, vector<8x7x32xf32>
    %11 = vector.shape_cast %10 : vector<8x7x32xf32> to vector<56x32xf32>
    %c24 = arith.constant 24 : index
    %c0_7 = arith.constant 0 : index
    %12 = vector.load %arg3[%c24, %c0_7] : memref<336x128xf32, #tpu.memory_space<vmem>>, vector<32x64xf32>
    %cst_8 = arith.constant dense<0.000000e+00> : vector<56x64xf32>
    %13 = tpu.matmul %11, %12, %cst_8 {dimension_numbers = #tpu.dot_dimension_numbers<[1], [0], [0], [1], [0, 0, 1, 1], [], []>} : vector<56x32xf32>, vector<32x64xf32>, vector<56x64xf32> -> vector<56x64xf32>
    %c264 = arith.constant 264 : index
    %c0_9 = arith.constant 0 : index
    %14 = vector.load %arg3[%c264, %c0_9] : memref<336x128xf32, #tpu.memory_space<vmem>>, vector<1x64xf32>
    %15 = vector.broadcast %14 : vector<1x64xf32> to vector<56x64xf32>
    %16 = arith.addf %13, %15 : vector<56x64xf32>
    %17 = vector.extract_strided_slice %16 {offsets = [0, 0], sizes = [56, 32], strides = [1, 1]} : vector<56x64xf32> to vector<56x32xf32>
    %18 = vector.shape_cast %17 : vector<56x32xf32> to vector<8x7x32xf32>
    %19 = vector.extract_strided_slice %16 {offsets = [0, 32], sizes = [56, 32], strides = [1, 1]} : vector<56x64xf32> to vector<56x32xf32>
    %20 = vector.shape_cast %19 : vector<56x32xf32> to vector<8x7x32xf32>
    %c216 = arith.constant 216 : index
    %c0_10 = arith.constant 0 : index
    %21 = vector.load %arg3[%c216, %c0_10] : memref<336x128xf32, #tpu.memory_space<vmem>>, vector<32x4xf32>
    %c248 = arith.constant 248 : index
    %c0_11 = arith.constant 0 : index
    %22 = vector.load %arg3[%c248, %c0_11] : memref<336x128xf32, #tpu.memory_space<vmem>>, vector<4x32xf32>
    %23 = arith.mulf %7, %8 : vector<8x32xf32>
    %cst_12 = arith.constant dense<0.000000e+00> : vector<8x4xf32>
    %24 = tpu.matmul %23, %21, %cst_12 {dimension_numbers = #tpu.dot_dimension_numbers<[1], [0], [0], [1], [0, 0, 1, 1], [], []>} : vector<8x32xf32>, vector<32x4xf32>, vector<8x4xf32> -> vector<8x4xf32>
    %cst_13 = arith.constant 0.353553385 : f32
    %25 = vector.broadcast %cst_13 : f32 to vector<8x4xf32>
    %26 = arith.mulf %24, %25 : vector<8x4xf32>
    %27 = vector.shape_cast %7 : vector<8x32xf32> to vector<8x1x32xf32>
    %28 = vector.broadcast %27 : vector<8x1x32xf32> to vector<8x7x32xf32>
    %29 = arith.mulf %28, %18 : vector<8x7x32xf32>
    %30 = vector.shape_cast %29 : vector<8x7x32xf32> to vector<56x32xf32>
    %cst_14 = arith.constant dense<0.000000e+00> : vector<56x4xf32>
    %31 = tpu.matmul %30, %21, %cst_14 {dimension_numbers = #tpu.dot_dimension_numbers<[1], [0], [0], [1], [0, 0, 1, 1], [], []>} : vector<56x32xf32>, vector<32x4xf32>, vector<56x4xf32> -> vector<56x4xf32>
    %32 = vector.shape_cast %31 : vector<56x4xf32> to vector<8x7x4xf32>
    %cst_15 = arith.constant 0.353553385 : f32
    %33 = vector.broadcast %cst_15 : f32 to vector<8x7x4xf32>
    %34 = arith.mulf %32, %33 : vector<8x7x4xf32>
    %cst_16 = arith.constant dense<0xFF800000> : vector<8x4xf32>
    %35 = vector.multi_reduction <maximumf>, %34, %cst_16 [1] : vector<8x7x4xf32> to vector<8x4xf32>
    %36 = arith.maximumf %26, %35 : vector<8x4xf32>
    %37 = arith.subf %26, %36 : vector<8x4xf32>
    %38 = math.exp %37 : vector<8x4xf32>
    %39 = vector.shape_cast %36 : vector<8x4xf32> to vector<8x1x4xf32>
    %40 = vector.broadcast %39 : vector<8x1x4xf32> to vector<8x7x4xf32>
    %41 = arith.subf %34, %40 : vector<8x7x4xf32>
    %42 = math.exp %41 : vector<8x7x4xf32>
    %cst_17 = arith.constant dense<0.000000e+00> : vector<8x4xf32>
    %43 = vector.multi_reduction <add>, %42, %cst_17 [1] : vector<8x7x4xf32> to vector<8x4xf32>
    %44 = arith.addf %38, %43 : vector<8x4xf32>
    %45 = tpu.reciprocal %44 {approx = true} : vector<8x4xf32> -> vector<8x4xf32>
    %46 = arith.mulf %38, %45 : vector<8x4xf32>
    %47 = vector.shape_cast %45 : vector<8x4xf32> to vector<8x1x4xf32>
    %48 = vector.broadcast %47 : vector<8x1x4xf32> to vector<8x7x4xf32>
    %49 = arith.mulf %42, %48 : vector<8x7x4xf32>
    %cst_18 = arith.constant dense<0.000000e+00> : vector<8x32xf32>
    %50 = tpu.matmul %46, %22, %cst_18 {dimension_numbers = #tpu.dot_dimension_numbers<[1], [0], [0], [1], [0, 0, 1, 1], [], []>} : vector<8x4xf32>, vector<4x32xf32>, vector<8x32xf32> -> vector<8x32xf32>
    %51 = vector.shape_cast %49 : vector<8x7x4xf32> to vector<56x4xf32>
    %cst_19 = arith.constant dense<0.000000e+00> : vector<56x32xf32>
    %52 = tpu.matmul %51, %22, %cst_19 {dimension_numbers = #tpu.dot_dimension_numbers<[1], [0], [0], [1], [0, 0, 1, 1], [], []>} : vector<56x4xf32>, vector<4x32xf32>, vector<56x32xf32> -> vector<56x32xf32>
    %53 = vector.shape_cast %52 : vector<56x32xf32> to vector<8x7x32xf32>
    %54 = arith.mulf %50, %9 : vector<8x32xf32>
    %55 = arith.mulf %53, %20 : vector<8x7x32xf32>
    %cst_20 = arith.constant dense<0.000000e+00> : vector<8x32xf32>
    %56 = vector.multi_reduction <add>, %55, %cst_20 [1] : vector<8x7x32xf32> to vector<8x32xf32>
    %57 = arith.addf %54, %56 : vector<8x32xf32>
    %c56 = arith.constant 56 : index
    %c0_21 = arith.constant 0 : index
    %58 = vector.load %arg3[%c56, %c0_21] : memref<336x128xf32, #tpu.memory_space<vmem>>, vector<32x32xf32>
    %cst_22 = arith.constant dense<0.000000e+00> : vector<8x32xf32>
    %59 = tpu.matmul %57, %58, %cst_22 {dimension_numbers = #tpu.dot_dimension_numbers<[1], [0], [0], [1], [0, 0, 1, 1], [], []>} : vector<8x32xf32>, vector<32x32xf32>, vector<8x32xf32> -> vector<8x32xf32>
    %c272 = arith.constant 272 : index
    %c0_23 = arith.constant 0 : index
    %60 = vector.load %arg3[%c272, %c0_23] : memref<336x128xf32, #tpu.memory_space<vmem>>, vector<1x32xf32>
    %61 = vector.broadcast %60 : vector<1x32xf32> to vector<8x32xf32>
    %62 = arith.addf %59, %61 : vector<8x32xf32>
    %63 = arith.addf %6, %62 : vector<8x32xf32>
    %c280 = arith.constant 280 : index
    %c0_24 = arith.constant 0 : index
    %64 = vector.load %arg3[%c280, %c0_24] : memref<336x128xf32, #tpu.memory_space<vmem>>, vector<1x32xf32>
    %c288 = arith.constant 288 : index
    %c0_25 = arith.constant 0 : index
    %65 = vector.load %arg3[%c288, %c0_25] : memref<336x128xf32, #tpu.memory_space<vmem>>, vector<1x32xf32>
    %cst_26 = arith.constant dense<0.000000e+00> : vector<8xf32>
    %66 = vector.multi_reduction <add>, %63, %cst_26 [1] : vector<8x32xf32> to vector<8xf32>
    %67 = vector.shape_cast %66 : vector<8xf32> to vector<8x1xf32>
    %cst_27 = arith.constant 3.200000e+01 : f32
    %68 = vector.broadcast %cst_27 : f32 to vector<8x1xf32>
    %69 = arith.divf %67, %68 : vector<8x1xf32>
    %70 = vector.broadcast %69 : vector<8x1xf32> to vector<8x32xf32>
    %71 = arith.subf %63, %70 : vector<8x32xf32>
    %72 = arith.mulf %71, %71 : vector<8x32xf32>
    %cst_28 = arith.constant dense<0.000000e+00> : vector<8xf32>
    %73 = vector.multi_reduction <add>, %72, %cst_28 [1] : vector<8x32xf32> to vector<8xf32>
    %74 = vector.shape_cast %73 : vector<8xf32> to vector<8x1xf32>
    %cst_29 = arith.constant 3.200000e+01 : f32
    %75 = vector.broadcast %cst_29 : f32 to vector<8x1xf32>
    %76 = arith.divf %74, %75 : vector<8x1xf32>
    %cst_30 = arith.constant 9.99999974E-6 : f32
    %77 = vector.broadcast %cst_30 : f32 to vector<8x1xf32>
    %78 = arith.addf %76, %77 : vector<8x1xf32>
    %79 = math.rsqrt %78 : vector<8x1xf32>
    %80 = vector.broadcast %79 : vector<8x1xf32> to vector<8x32xf32>
    %81 = arith.mulf %71, %80 : vector<8x32xf32>
    %82 = vector.broadcast %64 : vector<1x32xf32> to vector<8x32xf32>
    %83 = arith.mulf %81, %82 : vector<8x32xf32>
    %84 = vector.broadcast %65 : vector<1x32xf32> to vector<8x32xf32>
    %85 = arith.addf %83, %84 : vector<8x32xf32>
    %c88 = arith.constant 88 : index
    %c0_31 = arith.constant 0 : index
    %86 = vector.load %arg3[%c88, %c0_31] : memref<336x128xf32, #tpu.memory_space<vmem>>, vector<32x64xf32>
    %cst_32 = arith.constant dense<0.000000e+00> : vector<8x64xf32>
    %87 = tpu.matmul %85, %86, %cst_32 {dimension_numbers = #tpu.dot_dimension_numbers<[1], [0], [0], [1], [0, 0, 1, 1], [], []>} : vector<8x32xf32>, vector<32x64xf32>, vector<8x64xf32> -> vector<8x64xf32>
    %c296 = arith.constant 296 : index
    %c0_33 = arith.constant 0 : index
    %88 = vector.load %arg3[%c296, %c0_33] : memref<336x128xf32, #tpu.memory_space<vmem>>, vector<1x64xf32>
    %89 = vector.broadcast %88 : vector<1x64xf32> to vector<8x64xf32>
    %90 = arith.addf %87, %89 : vector<8x64xf32>
    %cst_34 = arith.constant 0.000000e+00 : f32
    %91 = vector.broadcast %cst_34 : f32 to vector<8x64xf32>
    %92 = arith.maximumf %90, %91 : vector<8x64xf32>
    %c120 = arith.constant 120 : index
    %c0_35 = arith.constant 0 : index
    %93 = vector.load %arg3[%c120, %c0_35] : memref<336x128xf32, #tpu.memory_space<vmem>>, vector<64x32xf32>
    %cst_36 = arith.constant dense<0.000000e+00> : vector<8x32xf32>
    %94 = tpu.matmul %92, %93, %cst_36 {dimension_numbers = #tpu.dot_dimension_numbers<[1], [0], [0], [1], [0, 0, 1, 1], [], []>} : vector<8x64xf32>, vector<64x32xf32>, vector<8x32xf32> -> vector<8x32xf32>
    %c304 = arith.constant 304 : index
    %c0_37 = arith.constant 0 : index
    %95 = vector.load %arg3[%c304, %c0_37] : memref<336x128xf32, #tpu.memory_space<vmem>>, vector<1x32xf32>
    %96 = vector.broadcast %95 : vector<1x32xf32> to vector<8x32xf32>
    %97 = arith.addf %94, %96 : vector<8x32xf32>
    %98 = arith.addf %85, %97 : vector<8x32xf32>
    %c312 = arith.constant 312 : index
    %c0_38 = arith.constant 0 : index
    %99 = vector.load %arg3[%c312, %c0_38] : memref<336x128xf32, #tpu.memory_space<vmem>>, vector<1x32xf32>
    %c320 = arith.constant 320 : index
    %c0_39 = arith.constant 0 : index
    %100 = vector.load %arg3[%c320, %c0_39] : memref<336x128xf32, #tpu.memory_space<vmem>>, vector<1x32xf32>
    %cst_40 = arith.constant dense<0.000000e+00> : vector<8xf32>
    %101 = vector.multi_reduction <add>, %98, %cst_40 [1] : vector<8x32xf32> to vector<8xf32>
    %102 = vector.shape_cast %101 : vector<8xf32> to vector<8x1xf32>
    %cst_41 = arith.constant 3.200000e+01 : f32
    %103 = vector.broadcast %cst_41 : f32 to vector<8x1xf32>
    %104 = arith.divf %102, %103 : vector<8x1xf32>
    %105 = vector.broadcast %104 : vector<8x1xf32> to vector<8x32xf32>
    %106 = arith.subf %98, %105 : vector<8x32xf32>
    %107 = arith.mulf %106, %106 : vector<8x32xf32>
    %cst_42 = arith.constant dense<0.000000e+00> : vector<8xf32>
    %108 = vector.multi_reduction <add>, %107, %cst_42 [1] : vector<8x32xf32> to vector<8xf32>
    %109 = vector.shape_cast %108 : vector<8xf32> to vector<8x1xf32>
    %cst_43 = arith.constant 3.200000e+01 : f32
    %110 = vector.broadcast %cst_43 : f32 to vector<8x1xf32>
    %111 = arith.divf %109, %110 : vector<8x1xf32>
    %cst_44 = arith.constant 9.99999974E-6 : f32
    %112 = vector.broadcast %cst_44 : f32 to vector<8x1xf32>
    %113 = arith.addf %111, %112 : vector<8x1xf32>
    %114 = math.rsqrt %113 : vector<8x1xf32>
    %115 = vector.broadcast %114 : vector<8x1xf32> to vector<8x32xf32>
    %116 = arith.mulf %106, %115 : vector<8x32xf32>
    %117 = vector.broadcast %99 : vector<1x32xf32> to vector<8x32xf32>
    %118 = arith.mulf %116, %117 : vector<8x32xf32>
    %119 = vector.broadcast %100 : vector<1x32xf32> to vector<8x32xf32>
    %120 = arith.addf %118, %119 : vector<8x32xf32>
    %c184 = arith.constant 184 : index
    %c0_45 = arith.constant 0 : index
    %121 = vector.load %arg3[%c184, %c0_45] : memref<336x128xf32, #tpu.memory_space<vmem>>, vector<32x128xf32>
    %cst_46 = arith.constant dense<0.000000e+00> : vector<8x128xf32>
    %122 = tpu.matmul %120, %121, %cst_46 {dimension_numbers = #tpu.dot_dimension_numbers<[1], [0], [0], [1], [0, 0, 1, 1], [], []>} : vector<8x32xf32>, vector<32x128xf32>, vector<8x128xf32> -> vector<8x128xf32>
    %c328 = arith.constant 328 : index
    %c0_47 = arith.constant 0 : index
    %123 = vector.load %arg3[%c328, %c0_47] : memref<336x128xf32, #tpu.memory_space<vmem>>, vector<1x128xf32>
    %124 = vector.broadcast %123 : vector<1x128xf32> to vector<8x128xf32>
    %125 = arith.addf %122, %124 : vector<8x128xf32>
    %c0_48 = arith.constant 0 : index
    %c0_49 = arith.constant 0 : index
    %126 = vector.load %arg4[%c0_48, %c0_49] : memref<8x128xf32, #tpu.memory_space<vmem>>, vector<8x128xf32>
    tpu.vector_store %arg4[%c0_48, %c0_49], %125 {strides = array<i32>} : memref<8x128xf32, #tpu.memory_space<vmem>>, vector<8x128xf32>,
    return
  }
  func.func @transform_0(%arg0: i32) -> (i32, i32) {
    %c0_i32 = arith.constant 0 : i32
    %c0_i32_0 = arith.constant 0 : i32
    return %arg0, %c0_i32 : i32, i32
  }
  func.func @transform_1(%arg0: i32) -> (i32, i32, i32) {
    %c0_i32 = arith.constant 0 : i32
    %c0_i32_0 = arith.constant 0 : i32
    %c0_i32_1 = arith.constant 0 : i32
    return %arg0, %c0_i32, %c0_i32_0 : i32, i32, i32
  }
  func.func @transform_2(%arg0: i32) -> (i32, i32) {
    %c0_i32 = arith.constant 0 : i32
    %c0_i32_0 = arith.constant 0 : i32
    %c0_i32_1 = arith.constant 0 : i32
    return %c0_i32, %c0_i32_0 : i32, i32
  }
  func.func @transform_3(%arg0: i32) -> (i32, i32) {
    %c0_i32 = arith.constant 0 : i32
    %c0_i32_0 = arith.constant 0 : i32
    return %arg0, %c0_i32 : i32, i32
  }
}

</mosaic_0001>

<llo_original>
// kernel: tpu_custom_call.1
$region0: #{tpu_custom_call.1}
  #allocation0 [shape = 'u32[]', space=smem, size = 0x4, offset = 0x4, fixed_abs, tag = 'smem constant byte address 0x4 - core index']
  #allocation1 [shape = 'u32[144,128]{1,0:T(1,128)}', space=vmem, size = 0x12000, scoped, tag = 'internal scratch']
  %s0 = inlined_call_operand.vmem [shape: f32[8,24], index: 0, kind: input, shape index: {}]
  %s1 = inlined_call_operand.vmem [shape: f32[8,7,32], index: 1, kind: input, shape index: {}]
  %s2 = inlined_call_operand.hbm [shape: f32[336,128], index: 2, kind: input, shape index: {}]
  %s3 = inlined_call_operand.hbm [shape: f32[8,128], index: 3, kind: output, shape index: {}]
  %s4 = sld [smem:[#allocation0]]
  $region26: #{tpu_custom_call.1} parent=0
    _
  %s6 = ssub.s32 1, %s4
  %s7 = scalar_select 0, %s6, %s4
  $region1: #{tpu_custom_call.1} parent=0
    #allocation2 [shape = 'u8[172032]{0}', space=vmem, size = 0x2a000, scoped, tag = 'input window, operand 2, single buffered']
    #allocation3 [shape = 's32[1]{0}', space=sflag, size = 0x4, scoped, tag = 'scoped memory for tpu_custom_call.1']
    #allocation4 [shape = 's32[1]{0}', space=sflag, size = 0x4, scoped, tag = 'scoped memory for tpu_custom_call.1']
    #allocation5 [shape = 'u8[4096]{0}', space=vmem, size = 0x1000, scoped, tag = 'output window, operand 0, single buffered']
    %8 = vsyncpa [#allocation3], 0
    %9 = vsyncpa [#allocation4], 0
    // Predicated region
    $region2: #{tpu_custom_call.1} parent=1 // pred_check
      _
    $region3: #{tpu_custom_call.1} parent=1 // pred_check_branch
      %11 = sbr.rel (0) target = $region5
    $region4: #{tpu_custom_call.1} parent=1 // pred_region
      _
    $region5: #{tpu_custom_call.1} parent=1 // pred_fallthru
      _
    // Predicated region
    $region6: #{tpu_custom_call.1} parent=1 // pred_check
      _
    $region7: #{tpu_custom_call.1} parent=1 // pred_check_branch
      %13 = sbr.rel (0) target = $region9
    $region8: #{tpu_custom_call.1} parent=1 // pred_region
      _
    $region9: #{tpu_custom_call.1} parent=1 // pred_fallthru
      _
    // Predicated region
    $region10: #{tpu_custom_call.1} parent=1 // pred_check
      _
    $region11: #{tpu_custom_call.1} parent=1 // pred_check_branch
      %15 = sbr.rel (0) target = $region13
    $region12: #{tpu_custom_call.1} parent=1 // pred_region
      %s17 = ssub.s32 5376, 5376
      %18 = vsyncadd [#allocation3], %s17
      %s19 = sshll.u32 [#allocation2], 4
      %s20 = int_to_ptr.vmem [resolvable:$true] %s19
      %25 = dma.hbm_to_vmem [thread:$0]  %s2, 5376, %s20, [#allocation3], 128, 128, 8
    $region13: #{tpu_custom_call.1} parent=1 // pred_fallthru
      _
    // Predicated region
    $region14: #{tpu_custom_call.1} parent=1 // pred_check
      _
    $region15: #{tpu_custom_call.1} parent=1 // pred_check_branch
      %27 = sbr.rel (0) target = $region17
    $region16: #{tpu_custom_call.1} parent=1 // pred_region
      %28 = dma.done [#allocation3], 5376
    $region17: #{tpu_custom_call.1} parent=1 // pred_fallthru
      _
    %v29 = vld [vmem:[%s0] sm:$0xff]
    %v30 = vld [vmem:[#allocation2] sm:$0xff]
    %v31 = vld [vmem:[#allocation2 + $0x8] sm:$0xff]
    %v32 = vld [vmem:[#allocation2 + $0x10] sm:$0xff]
    %v33 = vld [vmem:[#allocation2 + $0x100] sm:$0x1]
    %v34 = vlaneseq
    %v35 = vshrl.u32 %v34, 7
    %v36 = vsub.s32 0, %v35
    %v37 = vrot.slane %v33, %v36
    %vm38 = vcmask 195584
    %v40 = vsel %vm38, %v29, 0
    %42 = vmatprep.subr.mxu0 0.0
    %43 = vmatpush1.msra.mxu0 %v30
    %44 = vmatprep.subr.mxu0 0.0
    %45 = vmatpush1.msra.mxu0 %v31
    %46 = vmatprep.subr.mxu0 0.0
    %47 = vmatpush1.msra.mxu0 %v32
    %48 = vmatprep.subr.mxu0 0.0
    %49 = vmatpush1.msra.mxu0 0.0
    %50 = vmatprep.subr.mxu0 0.0
    %51 = vmatpush1.msra.mxu0 0.0
    %52 = vmatprep.subr.mxu0 0.0
    %53 = vmatpush1.msra.mxu0 0.0
    %54 = vmatprep.subr.mxu0 0.0
    %55 = vmatpush1.msra.mxu0 0.0
    %56 = vmatprep.subr.mxu0 0.0
    %57 = vmatpush1.msra.mxu0 0.0
    %58 = vmatprep.subr.mxu0 0.0
    %59 = vmatpush1.msra.mxu0 0.0
    %60 = vmatprep.subr.mxu0 0.0
    %61 = vmatpush1.msra.mxu0 0.0
    %62 = vmatprep.subr.mxu0 0.0
    %63 = vmatpush1.msra.mxu0 0.0
    %64 = vmatprep.subr.mxu0 0.0
    %65 = vmatpush1.msra.mxu0 0.0
    %66 = vmatprep.subr.mxu0 0.0
    %67 = vmatpush1.msra.mxu0 0.0
    %68 = vmatprep.subr.mxu0 0.0
    %69 = vmatpush1.msra.mxu0 0.0
    %70 = vmatprep.subr.mxu0 0.0
    %71 = vmatpush1.msra.mxu0 0.0
    %72 = vmatprep.subr.mxu0 0.0
    %73 = vmatpush1.msra.mxu0 0.0
    %74 = vmatprep.subr.mxu0 0.0
    %75 = vmatpush1.msra.mxu0 0.0
    %76 = vmatprep.subr.mxu0 0.0
    %77 = vmatpush1.msra.mxu0 0.0
    %78 = vmatprep.subr.mxu0 0.0
    %79 = vmatpush1.msra.mxu0 0.0
    %80 = vmatprep.subr.mxu0 0.0
    %81 = vmatpush1.msra.mxu0 0.0
    %82 = vmatprep.subr.mxu0 0.0
    %83 = vmatpush1.msra.mxu0 0.0
    %84 = vmatprep.subr.mxu0 0.0
    %85 = vmatpush1.msra.mxu0 0.0
    %86 = vmatprep.subr.mxu0 0.0
    %87 = vmatpush1.msra.mxu0 0.0
    %88 = vmatprep.subr.mxu0 0.0
    %89 = vmatpush1.msra.mxu0 0.0
    %90 = vmatprep.subr.mxu0 0.0
    %91 = vmatpush1.msra.mxu0 0.0
    %92 = vmatprep.subr.mxu0 0.0
    %93 = vmatpush1.msra.mxu0 0.0
    %94 = vmatprep.subr.mxu0 0.0
    %95 = vmatpush1.msra.mxu0 0.0
    %96 = vmatprep.subr.mxu0 0.0
    %97 = vmatpush1.msra.mxu0 0.0
    %98 = vmatprep.subr.mxu0 0.0
    %99 = vmatpush1.msra.mxu0 0.0
    %100 = vmatprep.subr.mxu0 0.0
    %101 = vmatpush1.msra.mxu0 0.0
    %102 = vmatprep.subr.mxu0 0.0
    %103 = vmatpush1.msra.mxu0 0.0
    %104 = vmatprep.subr.mxu0 0.0
    %105 = vmatpush1.msra.mxu0 0.0
    %106 = vmatprep.mubr.f32.mxu0 0.0
    %107 = vmatmul.mubr.f32.gmra.mrb[0].mxu0 %v40
    %v108 = vpop.f32.mrb[0].mxu0
    %v109 = vadd.f32 %v37, %v108
    %v110 = vpop.f32.mrb[0].mxu0
    %111 = vdwg.mxu0
    %v112 = vld [vmem:[%s1] sm:$0x7f]
    %v113 = vld [vmem:[%s1 + $0x8] sm:$0x7f]
    %v114 = vld [vmem:[%s1 + $0x10] sm:$0x7f]
    %v115 = vld [vmem:[%s1 + $0x18] sm:$0x7f]
    %v116 = vld [vmem:[%s1 + $0x20] sm:$0x7f]
    %v117 = vld [vmem:[%s1 + $0x28] sm:$0x7f]
    %v118 = vld [vmem:[%s1 + $0x30] sm:$0x7f]
    %v119 = vld [vmem:[%s1 + $0x38] sm:$0x7f]
    %v128 = vcombine.high %v112, %v112
    %v130 = vunpack.c.l.s4 1966171168
    %v131 = vunpack.c.0.s8 %v130
    %v132 = vlaneseq
    %v133 = vshrl.u32 %v132, 7
    %v134 = vsub.s32 %v131, %v133
    %v135 = vrot.slane %v112, %v134
    %v137 = vunpack.c.l.s4 1966171168
    %v138 = vunpack.c.0.s8 %v137
    %v139 = vlaneseq
    %v140 = vshrl.u32 %v139, 7
    %v141 = vsub.s32 %v138, %v140
    %v142 = vrot.slane %v128, %v141
    %v143 = vcombine.high %v135, %v135
    %v144 = vcombine.high %v142, %v142
    %v146 = vunpack.c.l.s4 1966171168
    %v147 = vunpack.c.0.s8 %v146
    %v148 = vlaneseq
    %v149 = vshrl.u32 %v148, 7
    %v150 = vsub.s32 %v147, %v149
    %v151 = vrot.slane %v135, %v150
    %v153 = vunpack.c.l.s4 1966171168
    %v154 = vunpack.c.0.s8 %v153
    %v155 = vlaneseq
    %v156 = vshrl.u32 %v155, 7
    %v157 = vsub.s32 %v154, %v156
    %v158 = vrot.slane %v142, %v157
    %v160 = vunpack.c.l.s4 1966171168
    %v161 = vunpack.c.0.s8 %v160
    %v162 = vlaneseq
    %v163 = vshrl.u32 %v162, 7
    %v164 = vsub.s32 %v161, %v163
    %v165 = vrot.slane %v143, %v164
    %v167 = vunpack.c.l.s4 1966171168
    %v168 = vunpack.c.0.s8 %v167
    %v169 = vlaneseq
    %v170 = vshrl.u32 %v169, 7
    %v171 = vsub.s32 %v168, %v170
    %v172 = vrot.slane %v144, %v171
    %v173 = vcombine.high %v151, %v151
    %v174 = vcombine.high %v158, %v158
    %v175 = vcombine.high %v165, %v165
    %v176 = vcombine.high %v113, %v113
    %v178 = vunpack.c.l.s4 1966171168
    %v179 = vunpack.c.0.s8 %v178
    %v180 = vlaneseq
    %v181 = vshrl.u32 %v180, 7
    %v182 = vsub.s32 %v179, %v181
    %v183 = vrot.slane %v113, %v182
    %v185 = vunpack.c.l.s4 1966171168
    %v186 = vunpack.c.0.s8 %v185
    %v187 = vlaneseq
    %v188 = vshrl.u32 %v187, 7
    %v189 = vsub.s32 %v186, %v188
    %v190 = vrot.slane %v176, %v189
    %v191 = vcombine.high %v183, %v183
    %v192 = vcombine.high %v190, %v190
    %v194 = vunpack.c.l.s4 1966171168
    %v195 = vunpack.c.0.s8 %v194
    %v196 = vlaneseq
    %v197 = vshrl.u32 %v196, 7
    %v198 = vsub.s32 %v195, %v197
    %v199 = vrot.slane %v183, %v198
    %v201 = vunpack.c.l.s4 1966171168
    %v202 = vunpack.c.0.s8 %v201
    %v203 = vlaneseq
    %v204 = vshrl.u32 %v203, 7
    %v205 = vsub.s32 %v202, %v204
    %v206 = vrot.slane %v190, %v205
    %v208 = vunpack.c.l.s4 1966171168
    %v209 = vunpack.c.0.s8 %v208
    %v210 = vlaneseq
    %v211 = vshrl.u32 %v210, 7
    %v212 = vsub.s32 %v209, %v211
    %v213 = vrot.slane %v191, %v212
    %v215 = vunpack.c.l.s4 1966171168
    %v216 = vunpack.c.0.s8 %v215
    %v217 = vlaneseq
    %v218 = vshrl.u32 %v217, 7
    %v219 = vsub.s32 %v216, %v218
    %v220 = vrot.slane %v192, %v219
    %v221 = vcombine.high %v199, %v199
    %v222 = vcombine.high %v206, %v206
    %v223 = vcombine.high %v213, %v213
    %v224 = vcombine.high %v114, %v114
    %v226 = vunpack.c.l.s4 1966171168
    %v227 = vunpack.c.0.s8 %v226
    %v228 = vlaneseq
    %v229 = vshrl.u32 %v228, 7
    %v230 = vsub.s32 %v227, %v229
    %v231 = vrot.slane %v114, %v230
    %v233 = vunpack.c.l.s4 1966171168
    %v234 = vunpack.c.0.s8 %v233
    %v235 = vlaneseq
    %v236 = vshrl.u32 %v235, 7
    %v237 = vsub.s32 %v234, %v236
    %v238 = vrot.slane %v224, %v237
    %v239 = vcombine.high %v231, %v231
    %v240 = vcombine.high %v238, %v238
    %v242 = vunpack.c.l.s4 1966171168
    %v243 = vunpack.c.0.s8 %v242
    %v244 = vlaneseq
    %v245 = vshrl.u32 %v244, 7
    %v246 = vsub.s32 %v243, %v245
    %v247 = vrot.slane %v231, %v246
    %v249 = vunpack.c.l.s4 1966171168
    %v250 = vunpack.c.0.s8 %v249
    %v251 = vlaneseq
    %v252 = vshrl.u32 %v251, 7
    %v253 = vsub.s32 %v250, %v252
    %v254 = vrot.slane %v238, %v253
    %v256 = vunpack.c.l.s4 1966171168
    %v257 = vunpack.c.0.s8 %v256
    %v258 = vlaneseq
    %v259 = vshrl.u32 %v258, 7
    %v260 = vsub.s32 %v257, %v259
    %v261 = vrot.slane %v239, %v260
    %v263 = vunpack.c.l.s4 1966171168
    %v264 = vunpack.c.0.s8 %v263
    %v265 = vlaneseq
    %v266 = vshrl.u32 %v265, 7
    %v267 = vsub.s32 %v264, %v266
    %v268 = vrot.slane %v240, %v267
    %v269 = vcombine.high %v247, %v247
    %v270 = vcombine.high %v254, %v254
    %v271 = vcombine.high %v261, %v261
    %v272 = vcombine.high %v115, %v115
    %v274 = vunpack.c.l.s4 1966171168
    %v275 = vunpack.c.0.s8 %v274
    %v276 = vlaneseq
    %v277 = vshrl.u32 %v276, 7
    %v278 = vsub.s32 %v275, %v277
    %v279 = vrot.slane %v115, %v278
    %v281 = vunpack.c.l.s4 1966171168
    %v282 = vunpack.c.0.s8 %v281
    %v283 = vlaneseq
    %v284 = vshrl.u32 %v283, 7
    %v285 = vsub.s32 %v282, %v284
    %v286 = vrot.slane %v272, %v285
    %v287 = vcombine.high %v279, %v279
    %v288 = vcombine.high %v286, %v286
    %v290 = vunpack.c.l.s4 1966171168
    %v291 = vunpack.c.0.s8 %v290
    %v292 = vlaneseq
    %v293 = vshrl.u32 %v292, 7
    %v294 = vsub.s32 %v291, %v293
    %v295 = vrot.slane %v279, %v294
    %v297 = vunpack.c.l.s4 1966171168
    %v298 = vunpack.c.0.s8 %v297
    %v299 = vlaneseq
    %v300 = vshrl.u32 %v299, 7
    %v301 = vsub.s32 %v298, %v300
    %v302 = vrot.slane %v286, %v301
    %v304 = vunpack.c.l.s4 1966171168
    %v305 = vunpack.c.0.s8 %v304
    %v306 = vlaneseq
    %v307 = vshrl.u32 %v306, 7
    %v308 = vsub.s32 %v305, %v307
    %v309 = vrot.slane %v287, %v308
    %v311 = vunpack.c.l.s4 1966171168
    %v312 = vunpack.c.0.s8 %v311
    %v313 = vlaneseq
    %v314 = vshrl.u32 %v313, 7
    %v315 = vsub.s32 %v312, %v314
    %v316 = vrot.slane %v288, %v315
    %v317 = vcombine.high %v295, %v295
    %v318 = vcombine.high %v302, %v302
    %v319 = vcombine.high %v309, %v309
    %v320 = vcombine.high %v116, %v116
    %v322 = vunpack.c.l.s4 1966171168
    %v323 = vunpack.c.0.s8 %v322
    %v324 = vlaneseq
    %v325 = vshrl.u32 %v324, 7
    %v326 = vsub.s32 %v323, %v325
    %v327 = vrot.slane %v116, %v326
    %v329 = vunpack.c.l.s4 1966171168
    %v330 = vunpack.c.0.s8 %v329
    %v331 = vlaneseq
    %v332 = vshrl.u32 %v331, 7
    %v333 = vsub.s32 %v330, %v332
    %v334 = vrot.slane %v320, %v333
    %v335 = vcombine.high %v327, %v327
    %v336 = vcombine.high %v334, %v334
    %v338 = vunpack.c.l.s4 1966171168
    %v339 = vunpack.c.0.s8 %v338
    %v340 = vlaneseq
    %v341 = vshrl.u32 %v340, 7
    %v342 = vsub.s32 %v339, %v341
    %v343 = vrot.slane %v327, %v342
    %v345 = vunpack.c.l.s4 1966171168
    %v346 = vunpack.c.0.s8 %v345
    %v347 = vlaneseq
    %v348 = vshrl.u32 %v347, 7
    %v349 = vsub.s32 %v346, %v348
    %v350 = vrot.slane %v334, %v349
    %v352 = vunpack.c.l.s4 1966171168
    %v353 = vunpack.c.0.s8 %v352
    %v354 = vlaneseq
    %v355 = vshrl.u32 %v354, 7
    %v356 = vsub.s32 %v353, %v355
    %v357 = vrot.slane %v335, %v356
    %v359 = vunpack.c.l.s4 1966171168
    %v360 = vunpack.c.0.s8 %v359
    %v361 = vlaneseq
    %v362 = vshrl.u32 %v361, 7
    %v363 = vsub.s32 %v360, %v362
    %v364 = vrot.slane %v336, %v363
    %v365 = vcombine.high %v343, %v343
    %v366 = vcombine.high %v350, %v350
    %v367 = vcombine.high %v357, %v357
    %v368 = vcombine.high %v117, %v117
    %v370 = vunpack.c.l.s4 1966171168
    %v371 = vunpack.c.0.s8 %v370
    %v372 = vlaneseq
    %v373 = vshrl.u32 %v372, 7
    %v374 = vsub.s32 %v371, %v373
    %v375 = vrot.slane %v117, %v374
    %v377 = vunpack.c.l.s4 1966171168
    %v378 = vunpack.c.0.s8 %v377
    %v379 = vlaneseq
    %v380 = vshrl.u32 %v379, 7
    %v381 = vsub.s32 %v378, %v380
    %v382 = vrot.slane %v368, %v381
    %v383 = vcombine.high %v375, %v375
    %v384 = vcombine.high %v382, %v382
    %v386 = vunpack.c.l.s4 1966171168
    %v387 = vunpack.c.0.s8 %v386
    %v388 = vlaneseq
    %v389 = vshrl.u32 %v388, 7
    %v390 = vsub.s32 %v387, %v389
    %v391 = vrot.slane %v375, %v390
    %v393 = vunpack.c.l.s4 1966171168
    %v394 = vunpack.c.0.s8 %v393
    %v395 = vlaneseq
    %v396 = vshrl.u32 %v395, 7
    %v397 = vsub.s32 %v394, %v396
    %v398 = vrot.slane %v382, %v397
    %v400 = vunpack.c.l.s4 1966171168
    %v401 = vunpack.c.0.s8 %v400
    %v402 = vlaneseq
    %v403 = vshrl.u32 %v402, 7
    %v404 = vsub.s32 %v401, %v403
    %v405 = vrot.slane %v383, %v404
    %v407 = vunpack.c.l.s4 1966171168
    %v408 = vunpack.c.0.s8 %v407
    %v409 = vlaneseq
    %v410 = vshrl.u32 %v409, 7
    %v411 = vsub.s32 %v408, %v410
    %v412 = vrot.slane %v384, %v411
    %v413 = vcombine.high %v391, %v391
    %v414 = vcombine.high %v398, %v398
    %v415 = vcombine.high %v405, %v405
    %v416 = vcombine.high %v118, %v118
    %v418 = vunpack.c.l.s4 1966171168
    %v419 = vunpack.c.0.s8 %v418
    %v420 = vlaneseq
    %v421 = vshrl.u32 %v420, 7
    %v422 = vsub.s32 %v419, %v421
    %v423 = vrot.slane %v118, %v422
    %v425 = vunpack.c.l.s4 1966171168
    %v426 = vunpack.c.0.s8 %v425
    %v427 = vlaneseq
    %v428 = vshrl.u32 %v427, 7
    %v429 = vsub.s32 %v426, %v428
    %v430 = vrot.slane %v416, %v429
    %v431 = vcombine.high %v423, %v423
    %v432 = vcombine.high %v430, %v430
    %v434 = vunpack.c.l.s4 1966171168
    %v435 = vunpack.c.0.s8 %v434
    %v436 = vlaneseq
    %v437 = vshrl.u32 %v436, 7
    %v438 = vsub.s32 %v435, %v437
    %v439 = vrot.slane %v423, %v438
    %v441 = vunpack.c.l.s4 1966171168
    %v442 = vunpack.c.0.s8 %v441
    %v443 = vlaneseq
    %v444 = vshrl.u32 %v443, 7
    %v445 = vsub.s32 %v442, %v444
    %v446 = vrot.slane %v430, %v445
    %v448 = vunpack.c.l.s4 1966171168
    %v449 = vunpack.c.0.s8 %v448
    %v450 = vlaneseq
    %v451 = vshrl.u32 %v450, 7
    %v452 = vsub.s32 %v449, %v451
    %v453 = vrot.slane %v431, %v452
    %v455 = vunpack.c.l.s4 1966171168
    %v456 = vunpack.c.0.s8 %v455
    %v457 = vlaneseq
    %v458 = vshrl.u32 %v457, 7
    %v459 = vsub.s32 %v456, %v458
    %v460 = vrot.slane %v432, %v459
    %v461 = vcombine.high %v439, %v439
    %v462 = vcombine.high %v446, %v446
    %v463 = vcombine.high %v453, %v453
    %v464 = vcombine.high %v119, %v119
    %v466 = vunpack.c.l.s4 1966171168
    %v467 = vunpack.c.0.s8 %v466
    %v468 = vlaneseq
    %v469 = vshrl.u32 %v468, 7
    %v470 = vsub.s32 %v467, %v469
    %v471 = vrot.slane %v119, %v470
    %v473 = vunpack.c.l.s4 1966171168
    %v474 = vunpack.c.0.s8 %v473
    %v475 = vlaneseq
    %v476 = vshrl.u32 %v475, 7
    %v477 = vsub.s32 %v474, %v476
    %v478 = vrot.slane %v464, %v477
    %v479 = vcombine.high %v471, %v471
    %v480 = vcombine.high %v478, %v478
    %v482 = vunpack.c.l.s4 1966171168
    %v483 = vunpack.c.0.s8 %v482
    %v484 = vlaneseq
    %v485 = vshrl.u32 %v484, 7
    %v486 = vsub.s32 %v483, %v485
    %v487 = vrot.slane %v471, %v486
    %v489 = vunpack.c.l.s4 1966171168
    %v490 = vunpack.c.0.s8 %v489
    %v491 = vlaneseq
    %v492 = vshrl.u32 %v491, 7
    %v493 = vsub.s32 %v490, %v492
    %v494 = vrot.slane %v478, %v493
    %v496 = vunpack.c.l.s4 1966171168
    %v497 = vunpack.c.0.s8 %v496
    %v498 = vlaneseq
    %v499 = vshrl.u32 %v498, 7
    %v500 = vsub.s32 %v497, %v499
    %v501 = vrot.slane %v479, %v500
    %v503 = vunpack.c.l.s4 1966171168
    %v504 = vunpack.c.0.s8 %v503
    %v505 = vlaneseq
    %v506 = vshrl.u32 %v505, 7
    %v507 = vsub.s32 %v504, %v506
    %v508 = vrot.slane %v480, %v507
    %v509 = vcombine.high %v487, %v487
    %v510 = vcombine.high %v494, %v494
    %v511 = vcombine.high %v501, %v501
    %v512 = vld [vmem:[#allocation2 + $0x18] sm:$0xff]
    %v513 = vld [vmem:[#allocation2 + $0x20] sm:$0xff]
    %v514 = vld [vmem:[#allocation2 + $0x28] sm:$0xff]
    %v515 = vld [vmem:[#allocation2 + $0x30] sm:$0xff]
    %v516 = vld [vmem:[#allocation2 + $0x108] sm:$0x1]
    %v517 = vlaneseq
    %v518 = vshrl.u32 %v517, 7
    %v519 = vsub.s32 0, %v518
    %v520 = vrot.slane %v516, %v519
    %v521 = vcombine.low %v151, %v165
    %v522 = vcombine.low %v173, %v175
    %v523 = vcombine.low %v158, %v172
    %v524 = vcombine.low %v174, %v199
    %v526 = vunpack.c.l.s4 1966171168
    %v527 = vunpack.c.0.s8 %v526
    %v528 = vlaneseq
    %v529 = vshrl.u32 %v528, 7
    %v530 = vsub.s32 %v527, %v529
    %v531 = vrot.slane %v521, %v530
    %v533 = vunpack.c.l.s4 1966171168
    %v534 = vunpack.c.0.s8 %v533
    %v535 = vlaneseq
    %v536 = vshrl.u32 %v535, 7
    %v537 = vsub.s32 %v534, %v536
    %v538 = vrot.slane %v522, %v537
    %v540 = vunpack.c.l.s4 1966171168
    %v541 = vunpack.c.0.s8 %v540
    %v542 = vlaneseq
    %v543 = vshrl.u32 %v542, 7
    %v544 = vsub.s32 %v541, %v543
    %v545 = vrot.slane %v523, %v544
    %v547 = vunpack.c.l.s4 1966171168
    %v548 = vunpack.c.0.s8 %v547
    %v549 = vlaneseq
    %v550 = vshrl.u32 %v549, 7
    %v551 = vsub.s32 %v548, %v550
    %v552 = vrot.slane %v524, %v551
    %v553 = vcombine.low %v531, %v538
    %v554 = vcombine.low %v545, %v552
    %v556 = vunpack.c.l.s4 1966171168
    %v557 = vunpack.c.0.s8 %v556
    %v558 = vlaneseq
    %v559 = vshrl.u32 %v558, 7
    %v560 = vsub.s32 %v557, %v559
    %v561 = vrot.slane %v553, %v560
    %v563 = vunpack.c.l.s4 1966171168
    %v564 = vunpack.c.0.s8 %v563
    %v565 = vlaneseq
    %v566 = vshrl.u32 %v565, 7
    %v567 = vsub.s32 %v564, %v566
    %v568 = vrot.slane %v554, %v567
    %v569 = vcombine.low %v561, %v568
    %v570 = vcombine.low %v213, %v221
    %v571 = vcombine.low %v223, %v206
    %v572 = vcombine.low %v220, %v222
    %v573 = vcombine.low %v247, %v261
    %v575 = vunpack.c.l.s4 1966171168
    %v576 = vunpack.c.0.s8 %v575
    %v577 = vlaneseq
    %v578 = vshrl.u32 %v577, 7
    %v579 = vsub.s32 %v576, %v578
    %v580 = vrot.slane %v570, %v579
    %v582 = vunpack.c.l.s4 1966171168
    %v583 = vunpack.c.0.s8 %v582
    %v584 = vlaneseq
    %v585 = vshrl.u32 %v584, 7
    %v586 = vsub.s32 %v583, %v585
    %v587 = vrot.slane %v571, %v586
    %v589 = vunpack.c.l.s4 1966171168
    %v590 = vunpack.c.0.s8 %v589
    %v591 = vlaneseq
    %v592 = vshrl.u32 %v591, 7
    %v593 = vsub.s32 %v590, %v592
    %v594 = vrot.slane %v572, %v593
    %v596 = vunpack.c.l.s4 1966171168
    %v597 = vunpack.c.0.s8 %v596
    %v598 = vlaneseq
    %v599 = vshrl.u32 %v598, 7
    %v600 = vsub.s32 %v597, %v599
    %v601 = vrot.slane %v573, %v600
    %v602 = vcombine.low %v580, %v587
    %v603 = vcombine.low %v594, %v601
    %v605 = vunpack.c.l.s4 1966171168
    %v606 = vunpack.c.0.s8 %v605
    %v607 = vlaneseq
    %v608 = vshrl.u32 %v607, 7
    %v609 = vsub.s32 %v606, %v608
    %v610 = vrot.slane %v602, %v609
    %v612 = vunpack.c.l.s4 1966171168
    %v613 = vunpack.c.0.s8 %v612
    %v614 = vlaneseq
    %v615 = vshrl.u32 %v614, 7
    %v616 = vsub.s32 %v613, %v615
    %v617 = vrot.slane %v603, %v616
    %v618 = vcombine.low %v610, %v617
    %v619 = vcombine.low %v269, %v271
    %v620 = vcombine.low %v254, %v268
    %v621 = vcombine.low %v270, %v295
    %v622 = vcombine.low %v309, %v317
    %v624 = vunpack.c.l.s4 1966171168
    %v625 = vunpack.c.0.s8 %v624
    %v626 = vlaneseq
    %v627 = vshrl.u32 %v626, 7
    %v628 = vsub.s32 %v625, %v627
    %v629 = vrot.slane %v619, %v628
    %v631 = vunpack.c.l.s4 1966171168
    %v632 = vunpack.c.0.s8 %v631
    %v633 = vlaneseq
    %v634 = vshrl.u32 %v633, 7
    %v635 = vsub.s32 %v632, %v634
    %v636 = vrot.slane %v620, %v635
    %v638 = vunpack.c.l.s4 1966171168
    %v639 = vunpack.c.0.s8 %v638
    %v640 = vlaneseq
    %v641 = vshrl.u32 %v640, 7
    %v642 = vsub.s32 %v639, %v641
    %v643 = vrot.slane %v621, %v642
    %v645 = vunpack.c.l.s4 1966171168
    %v646 = vunpack.c.0.s8 %v645
    %v647 = vlaneseq
    %v648 = vshrl.u32 %v647, 7
    %v649 = vsub.s32 %v646, %v648
    %v650 = vrot.slane %v622, %v649
    %v651 = vcombine.low %v629, %v636
    %v652 = vcombine.low %v643, %v650
    %v654 = vunpack.c.l.s4 1966171168
    %v655 = vunpack.c.0.s8 %v654
    %v656 = vlaneseq
    %v657 = vshrl.u32 %v656, 7
    %v658 = vsub.s32 %v655, %v657
    %v659 = vrot.slane %v651, %v658
    %v661 = vunpack.c.l.s4 1966171168
    %v662 = vunpack.c.0.s8 %v661
    %v663 = vlaneseq
    %v664 = vshrl.u32 %v663, 7
    %v665 = vsub.s32 %v662, %v664
    %v666 = vrot.slane %v652, %v665
    %v667 = vcombine.low %v659, %v666
    %v668 = vcombine.low %v319, %v302
    %v669 = vcombine.low %v316, %v318
    %v670 = vcombine.low %v343, %v357
    %v671 = vcombine.low %v365, %v367
    %v673 = vunpack.c.l.s4 1966171168
    %v674 = vunpack.c.0.s8 %v673
    %v675 = vlaneseq
    %v676 = vshrl.u32 %v675, 7
    %v677 = vsub.s32 %v674, %v676
    %v678 = vrot.slane %v668, %v677
    %v680 = vunpack.c.l.s4 1966171168
    %v681 = vunpack.c.0.s8 %v680
    %v682 = vlaneseq
    %v683 = vshrl.u32 %v682, 7
    %v684 = vsub.s32 %v681, %v683
    %v685 = vrot.slane %v669, %v684
    %v687 = vunpack.c.l.s4 1966171168
    %v688 = vunpack.c.0.s8 %v687
    %v689 = vlaneseq
    %v690 = vshrl.u32 %v689, 7
    %v691 = vsub.s32 %v688, %v690
    %v692 = vrot.slane %v670, %v691
    %v694 = vunpack.c.l.s4 1966171168
    %v695 = vunpack.c.0.s8 %v694
    %v696 = vlaneseq
    %v697 = vshrl.u32 %v696, 7
    %v698 = vsub.s32 %v695, %v697
    %v699 = vrot.slane %v671, %v698
    %v700 = vcombine.low %v678, %v685
    %v701 = vcombine.low %v692, %v699
    %v703 = vunpack.c.l.s4 1966171168
    %v704 = vunpack.c.0.s8 %v703
    %v705 = vlaneseq
    %v706 = vshrl.u32 %v705, 7
    %v707 = vsub.s32 %v704, %v706
    %v708 = vrot.slane %v700, %v707
    %v710 = vunpack.c.l.s4 1966171168
    %v711 = vunpack.c.0.s8 %v710
    %v712 = vlaneseq
    %v713 = vshrl.u32 %v712, 7
    %v714 = vsub.s32 %v711, %v713
    %v715 = vrot.slane %v701, %v714
    %v716 = vcombine.low %v708, %v715
    %v717 = vcombine.low %v350, %v364
    %v718 = vcombine.low %v366, %v391
    %v719 = vcombine.low %v405, %v413
    %v720 = vcombine.low %v415, %v398
    %v722 = vunpack.c.l.s4 1966171168
    %v723 = vunpack.c.0.s8 %v722
    %v724 = vlaneseq
    %v725 = vshrl.u32 %v724, 7
    %v726 = vsub.s32 %v723, %v725
    %v727 = vrot.slane %v717, %v726
    %v729 = vunpack.c.l.s4 1966171168
    %v730 = vunpack.c.0.s8 %v729
    %v731 = vlaneseq
    %v732 = vshrl.u32 %v731, 7
    %v733 = vsub.s32 %v730, %v732
    %v734 = vrot.slane %v718, %v733
    %v736 = vunpack.c.l.s4 1966171168
    %v737 = vunpack.c.0.s8 %v736
    %v738 = vlaneseq
    %v739 = vshrl.u32 %v738, 7
    %v740 = vsub.s32 %v737, %v739
    %v741 = vrot.slane %v719, %v740
    %v743 = vunpack.c.l.s4 1966171168
    %v744 = vunpack.c.0.s8 %v743
    %v745 = vlaneseq
    %v746 = vshrl.u32 %v745, 7
    %v747 = vsub.s32 %v744, %v746
    %v748 = vrot.slane %v720, %v747
    %v749 = vcombine.low %v727, %v734
    %v750 = vcombine.low %v741, %v748
    %v752 = vunpack.c.l.s4 1966171168
    %v753 = vunpack.c.0.s8 %v752
    %v754 = vlaneseq
    %v755 = vshrl.u32 %v754, 7
    %v756 = vsub.s32 %v753, %v755
    %v757 = vrot.slane %v749, %v756
    %v759 = vunpack.c.l.s4 1966171168
    %v760 = vunpack.c.0.s8 %v759
    %v761 = vlaneseq
    %v762 = vshrl.u32 %v761, 7
    %v763 = vsub.s32 %v760, %v762
    %v764 = vrot.slane %v750, %v763
    %v765 = vcombine.low %v757, %v764
    %v766 = vcombine.low %v412, %v414
    %v767 = vcombine.low %v439, %v453
    %v768 = vcombine.low %v461, %v463
    %v769 = vcombine.low %v446, %v460
    %v771 = vunpack.c.l.s4 1966171168
    %v772 = vunpack.c.0.s8 %v771
    %v773 = vlaneseq
    %v774 = vshrl.u32 %v773, 7
    %v775 = vsub.s32 %v772, %v774
    %v776 = vrot.slane %v766, %v775
    %v778 = vunpack.c.l.s4 1966171168
    %v779 = vunpack.c.0.s8 %v778
    %v780 = vlaneseq
    %v781 = vshrl.u32 %v780, 7
    %v782 = vsub.s32 %v779, %v781
    %v783 = vrot.slane %v767, %v782
    %v785 = vunpack.c.l.s4 1966171168
    %v786 = vunpack.c.0.s8 %v785
    %v787 = vlaneseq
    %v788 = vshrl.u32 %v787, 7
    %v789 = vsub.s32 %v786, %v788
    %v790 = vrot.slane %v768, %v789
    %v792 = vunpack.c.l.s4 1966171168
    %v793 = vunpack.c.0.s8 %v792
    %v794 = vlaneseq
    %v795 = vshrl.u32 %v794, 7
    %v796 = vsub.s32 %v793, %v795
    %v797 = vrot.slane %v769, %v796
    %v798 = vcombine.low %v776, %v783
    %v799 = vcombine.low %v790, %v797
    %v801 = vunpack.c.l.s4 1966171168
    %v802 = vunpack.c.0.s8 %v801
    %v803 = vlaneseq
    %v804 = vshrl.u32 %v803, 7
    %v805 = vsub.s32 %v802, %v804
    %v806 = vrot.slane %v798, %v805
    %v808 = vunpack.c.l.s4 1966171168
    %v809 = vunpack.c.0.s8 %v808
    %v810 = vlaneseq
    %v811 = vshrl.u32 %v810, 7
    %v812 = vsub.s32 %v809, %v811
    %v813 = vrot.slane %v799, %v812
    %v814 = vcombine.low %v806, %v813
    %v815 = vcombine.low %v462, %v487
    %v816 = vcombine.low %v501, %v509
    %v817 = vcombine.low %v511, %v494
    %v818 = vcombine.low %v508, %v510
    %v820 = vunpack.c.l.s4 1966171168
    %v821 = vunpack.c.0.s8 %v820
    %v822 = vlaneseq
    %v823 = vshrl.u32 %v822, 7
    %v824 = vsub.s32 %v821, %v823
    %v825 = vrot.slane %v815, %v824
    %v827 = vunpack.c.l.s4 1966171168
    %v828 = vunpack.c.0.s8 %v827
    %v829 = vlaneseq
    %v830 = vshrl.u32 %v829, 7
    %v831 = vsub.s32 %v828, %v830
    %v832 = vrot.slane %v816, %v831
    %v834 = vunpack.c.l.s4 1966171168
    %v835 = vunpack.c.0.s8 %v834
    %v836 = vlaneseq
    %v837 = vshrl.u32 %v836, 7
    %v838 = vsub.s32 %v835, %v837
    %v839 = vrot.slane %v817, %v838
    %v841 = vunpack.c.l.s4 1966171168
    %v842 = vunpack.c.0.s8 %v841
    %v843 = vlaneseq
    %v844 = vshrl.u32 %v843, 7
    %v845 = vsub.s32 %v842, %v844
    %v846 = vrot.slane %v818, %v845
    %v847 = vcombine.low %v825, %v832
    %v848 = vcombine.low %v839, %v846
    %v850 = vunpack.c.l.s4 1966171168
    %v851 = vunpack.c.0.s8 %v850
    %v852 = vlaneseq
    %v853 = vshrl.u32 %v852, 7
    %v854 = vsub.s32 %v851, %v853
    %v855 = vrot.slane %v847, %v854
    %v857 = vunpack.c.l.s4 1966171168
    %v858 = vunpack.c.0.s8 %v857
    %v859 = vlaneseq
    %v860 = vshrl.u32 %v859, 7
    %v861 = vsub.s32 %v858, %v860
    %v862 = vrot.slane %v848, %v861
    %v863 = vcombine.low %v855, %v862
    %vm864 = vcmask 261120
    %v865 = vsel %vm864, %v569, 0
    %v867 = vsel %vm864, %v618, 0
    %v869 = vsel %vm864, %v667, 0
    %v871 = vsel %vm864, %v716, 0
    %v873 = vsel %vm864, %v765, 0
    %v875 = vsel %vm864, %v814, 0
    %v877 = vsel %vm864, %v863, 0
    %879 = vmatprep.subr.mxu0 0.0
    %880 = vmatpush1.msra.mxu0 %v512
    %881 = vmatprep.subr.mxu0 0.0
    %882 = vmatpush1.msra.mxu0 %v513
    %883 = vmatprep.subr.mxu0 0.0
    %884 = vmatpush1.msra.mxu0 %v514
    %885 = vmatprep.subr.mxu0 0.0
    %886 = vmatpush1.msra.mxu0 %v515
    %887 = vmatprep.subr.mxu0 0.0
    %888 = vmatpush1.msra.mxu0 0.0
    %889 = vmatprep.subr.mxu0 0.0
    %890 = vmatpush1.msra.mxu0 0.0
    %891 = vmatprep.subr.mxu0 0.0
    %892 = vmatpush1.msra.mxu0 0.0
    %893 = vmatprep.subr.mxu0 0.0
    %894 = vmatpush1.msra.mxu0 0.0
    %895 = vmatprep.subr.mxu0 0.0
    %896 = vmatpush1.msra.mxu0 0.0
    %897 = vmatprep.subr.mxu0 0.0
    %898 = vmatpush1.msra.mxu0 0.0
    %899 = vmatprep.subr.mxu0 0.0
    %900 = vmatpush1.msra.mxu0 0.0
    %901 = vmatprep.subr.mxu0 0.0
    %902 = vmatpush1.msra.mxu0 0.0
    %903 = vmatprep.subr.mxu0 0.0
    %904 = vmatpush1.msra.mxu0 0.0
    %905 = vmatprep.subr.mxu0 0.0
    %906 = vmatpush1.msra.mxu0 0.0
    %907 = vmatprep.subr.mxu0 0.0
    %908 = vmatpush1.msra.mxu0 0.0
    %909 = vmatprep.subr.mxu0 0.0
    %910 = vmatpush1.msra.mxu0 0.0
    %911 = vmatprep.subr.mxu0 0.0
    %912 = vmatpush1.msra.mxu0 0.0
    %913 = vmatprep.subr.mxu0 0.0
    %914 = vmatpush1.msra.mxu0 0.0
    %915 = vmatprep.subr.mxu0 0.0
    %916 = vmatpush1.msra.mxu0 0.0
    %917 = vmatprep.subr.mxu0 0.0
    %918 = vmatpush1.msra.mxu0 0.0
    %919 = vmatprep.subr.mxu0 0.0
    %920 = vmatpush1.msra.mxu0 0.0
    %921 = vmatprep.subr.mxu0 0.0
    %922 = vmatpush1.msra.mxu0 0.0
    %923 = vmatprep.subr.mxu0 0.0
    %924 = vmatpush1.msra.mxu0 0.0
    %925 = vmatprep.subr.mxu0 0.0
    %926 = vmatpush1.msra.mxu0 0.0
    %927 = vmatprep.subr.mxu0 0.0
    %928 = vmatpush1.msra.mxu0 0.0
    %929 = vmatprep.subr.mxu0 0.0
    %930 = vmatpush1.msra.mxu0 0.0
    %931 = vmatprep.subr.mxu0 0.0
    %932 = vmatpush1.msra.mxu0 0.0
    %933 = vmatprep.subr.mxu0 0.0
    %934 = vmatpush1.msra.mxu0 0.0
    %935 = vmatprep.subr.mxu0 0.0
    %936 = vmatpush1.msra.mxu0 0.0
    %937 = vmatprep.subr.mxu0 0.0
    %938 = vmatpush1.msra.mxu0 0.0
    %939 = vmatprep.subr.mxu0 0.0
    %940 = vmatpush1.msra.mxu0 0.0
    %941 = vmatprep.subr.mxu0 0.0
    %942 = vmatpush1.msra.mxu0 0.0
    %943 = vmatprep.mubr.f32.mxu0 0.0
    %944 = vmatmul.mubr.f32.gmra.mrb[0].mxu0 %v865
    %v945 = vpop.f32.mrb[0].mxu0
    %v946 = vadd.f32 %v520, %v945
    %v947 = vpop.f32.mrb[0].mxu0
    %948 = vmatprep.mubr.f32.mxu0 0.0
    %949 = vmatmul.mubr.f32.gmra.mrb[0].mxu0 %v867
    %v950 = vpop.f32.mrb[0].mxu0
    %v951 = vadd.f32 %v520, %v950
    %v952 = vpop.f32.mrb[0].mxu0
    %953 = vmatprep.mubr.f32.mxu0 0.0
    %954 = vmatmul.mubr.f32.gmra.mrb[0].mxu0 %v869
    %v955 = vpop.f32.mrb[0].mxu0
    %v956 = vadd.f32 %v520, %v955
    %v957 = vpop.f32.mrb[0].mxu0
    %958 = vmatprep.mubr.f32.mxu0 0.0
    %959 = vmatmul.mubr.f32.gmra.mrb[0].mxu0 %v871
    %v960 = vpop.f32.mrb[0].mxu0
    %v961 = vadd.f32 %v520, %v960
    %v962 = vpop.f32.mrb[0].mxu0
    %963 = vmatprep.mubr.f32.mxu0 0.0
    %964 = vmatmul.mubr.f32.gmra.mrb[0].mxu0 %v873
    %v965 = vpop.f32.mrb[0].mxu0
    %v966 = vadd.f32 %v520, %v965
    %v967 = vpop.f32.mrb[0].mxu0
    %968 = vmatprep.mubr.f32.mxu0 0.0
    %969 = vmatmul.mubr.f32.gmra.mrb[0].mxu0 %v875
    %v970 = vpop.f32.mrb[0].mxu0
    %v971 = vadd.f32 %v520, %v970
    %v972 = vpop.f32.mrb[0].mxu0
    %973 = vmatprep.mubr.f32.mxu0 0.0
    %974 = vmatmul.mubr.f32.gmra.mrb[0].mxu0 %v877
    %v975 = vpop.f32.mrb[0].mxu0
    %v976 = vadd.f32 %v520, %v975
    %v977 = vpop.f32.mrb[0].mxu0
    %978 = vdwg.mxu0
    %v986 = vcombine.high %v946, %v946
    %v988 = vunpack.c.l.s4 1966171168
    %v989 = vunpack.c.0.s8 %v988
    %v990 = vlaneseq
    %v991 = vshrl.u32 %v990, 7
    %v992 = vsub.s32 %v989, %v991
    %v993 = vrot.slane %v946, %v992
    %v995 = vunpack.c.l.s4 1966171168
    %v996 = vunpack.c.0.s8 %v995
    %v997 = vlaneseq
    %v998 = vshrl.u32 %v997, 7
    %v999 = vsub.s32 %v996, %v998
    %v1000 = vrot.slane %v986, %v999
    %v1001 = vcombine.high %v993, %v993
    %v1002 = vcombine.high %v1000, %v1000
    %v1004 = vunpack.c.l.s4 1966171168
    %v1005 = vunpack.c.0.s8 %v1004
    %v1006 = vlaneseq
    %v1007 = vshrl.u32 %v1006, 7
    %v1008 = vsub.s32 %v1005, %v1007
    %v1009 = vrot.slane %v993, %v1008
    %v1011 = vunpack.c.l.s4 1966171168
    %v1012 = vunpack.c.0.s8 %v1011
    %v1013 = vlaneseq
    %v1014 = vshrl.u32 %v1013, 7
    %v1015 = vsub.s32 %v1012, %v1014
    %v1016 = vrot.slane %v1000, %v1015
    %v1018 = vunpack.c.l.s4 1966171168
    %v1019 = vunpack.c.0.s8 %v1018
    %v1020 = vlaneseq
    %v1021 = vshrl.u32 %v1020, 7
    %v1022 = vsub.s32 %v1019, %v1021
    %v1023 = vrot.slane %v1001, %v1022
    %v1025 = vunpack.c.l.s4 1966171168
    %v1026 = vunpack.c.0.s8 %v1025
    %v1027 = vlaneseq
    %v1028 = vshrl.u32 %v1027, 7
    %v1029 = vsub.s32 %v1026, %v1028
    %v1030 = vrot.slane %v1002, %v1029
    %v1031 = vcombine.high %v1009, %v1009
    %v1032 = vcombine.high %v1016, %v1016
    %v1033 = vcombine.high %v1023, %v1023
    %v1034 = vcombine.high %v1030, %v1030
    %v1035 = vcombine.high %v951, %v951
    %v1037 = vunpack.c.l.s4 1966171168
    %v1038 = vunpack.c.0.s8 %v1037
    %v1039 = vlaneseq
    %v1040 = vshrl.u32 %v1039, 7
    %v1041 = vsub.s32 %v1038, %v1040
    %v1042 = vrot.slane %v951, %v1041
    %v1044 = vunpack.c.l.s4 1966171168
    %v1045 = vunpack.c.0.s8 %v1044
    %v1046 = vlaneseq
    %v1047 = vshrl.u32 %v1046, 7
    %v1048 = vsub.s32 %v1045, %v1047
    %v1049 = vrot.slane %v1035, %v1048
    %v1050 = vcombine.high %v1042, %v1042
    %v1051 = vcombine.high %v1049, %v1049
    %v1053 = vunpack.c.l.s4 1966171168
    %v1054 = vunpack.c.0.s8 %v1053
    %v1055 = vlaneseq
    %v1056 = vshrl.u32 %v1055, 7
    %v1057 = vsub.s32 %v1054, %v1056
    %v1058 = vrot.slane %v1042, %v1057
    %v1060 = vunpack.c.l.s4 1966171168
    %v1061 = vunpack.c.0.s8 %v1060
    %v1062 = vlaneseq
    %v1063 = vshrl.u32 %v1062, 7
    %v1064 = vsub.s32 %v1061, %v1063
    %v1065 = vrot.slane %v1049, %v1064
    %v1067 = vunpack.c.l.s4 1966171168
    %v1068 = vunpack.c.0.s8 %v1067
    %v1069 = vlaneseq
    %v1070 = vshrl.u32 %v1069, 7
    %v1071 = vsub.s32 %v1068, %v1070
    %v1072 = vrot.slane %v1050, %v1071
    %v1074 = vunpack.c.l.s4 1966171168
    %v1075 = vunpack.c.0.s8 %v1074
    %v1076 = vlaneseq
    %v1077 = vshrl.u32 %v1076, 7
    %v1078 = vsub.s32 %v1075, %v1077
    %v1079 = vrot.slane %v1051, %v1078
    %v1080 = vcombine.high %v1058, %v1058
    %v1081 = vcombine.high %v1065, %v1065
    %v1082 = vcombine.high %v1072, %v1072
    %v1083 = vcombine.high %v1079, %v1079
    %v1084 = vcombine.high %v956, %v956
    %v1086 = vunpack.c.l.s4 1966171168
    %v1087 = vunpack.c.0.s8 %v1086
    %v1088 = vlaneseq
    %v1089 = vshrl.u32 %v1088, 7
    %v1090 = vsub.s32 %v1087, %v1089
    %v1091 = vrot.slane %v956, %v1090
    %v1093 = vunpack.c.l.s4 1966171168
    %v1094 = vunpack.c.0.s8 %v1093
    %v1095 = vlaneseq
    %v1096 = vshrl.u32 %v1095, 7
    %v1097 = vsub.s32 %v1094, %v1096
    %v1098 = vrot.slane %v1084, %v1097
    %v1099 = vcombine.high %v1091, %v1091
    %v1100 = vcombine.high %v1098, %v1098
    %v1102 = vunpack.c.l.s4 1966171168
    %v1103 = vunpack.c.0.s8 %v1102
    %v1104 = vlaneseq
    %v1105 = vshrl.u32 %v1104, 7
    %v1106 = vsub.s32 %v1103, %v1105
    %v1107 = vrot.slane %v1091, %v1106
    %v1109 = vunpack.c.l.s4 1966171168
    %v1110 = vunpack.c.0.s8 %v1109
    %v1111 = vlaneseq
    %v1112 = vshrl.u32 %v1111, 7
    %v1113 = vsub.s32 %v1110, %v1112
    %v1114 = vrot.slane %v1098, %v1113
    %v1116 = vunpack.c.l.s4 1966171168
    %v1117 = vunpack.c.0.s8 %v1116
    %v1118 = vlaneseq
    %v1119 = vshrl.u32 %v1118, 7
    %v1120 = vsub.s32 %v1117, %v1119
    %v1121 = vrot.slane %v1099, %v1120
    %v1123 = vunpack.c.l.s4 1966171168
    %v1124 = vunpack.c.0.s8 %v1123
    %v1125 = vlaneseq
    %v1126 = vshrl.u32 %v1125, 7
    %v1127 = vsub.s32 %v1124, %v1126
    %v1128 = vrot.slane %v1100, %v1127
    %v1129 = vcombine.high %v1107, %v1107
    %v1130 = vcombine.high %v1114, %v1114
    %v1131 = vcombine.high %v1121, %v1121
    %v1132 = vcombine.high %v1128, %v1128
    %v1133 = vcombine.high %v961, %v961
    %v1135 = vunpack.c.l.s4 1966171168
    %v1136 = vunpack.c.0.s8 %v1135
    %v1137 = vlaneseq
    %v1138 = vshrl.u32 %v1137, 7
    %v1139 = vsub.s32 %v1136, %v1138
    %v1140 = vrot.slane %v961, %v1139
    %v1142 = vunpack.c.l.s4 1966171168
    %v1143 = vunpack.c.0.s8 %v1142
    %v1144 = vlaneseq
    %v1145 = vshrl.u32 %v1144, 7
    %v1146 = vsub.s32 %v1143, %v1145
    %v1147 = vrot.slane %v1133, %v1146
    %v1148 = vcombine.high %v1140, %v1140
    %v1149 = vcombine.high %v1147, %v1147
    %v1151 = vunpack.c.l.s4 1966171168
    %v1152 = vunpack.c.0.s8 %v1151
    %v1153 = vlaneseq
    %v1154 = vshrl.u32 %v1153, 7
    %v1155 = vsub.s32 %v1152, %v1154
    %v1156 = vrot.slane %v1140, %v1155
    %v1158 = vunpack.c.l.s4 1966171168
    %v1159 = vunpack.c.0.s8 %v1158
    %v1160 = vlaneseq
    %v1161 = vshrl.u32 %v1160, 7
    %v1162 = vsub.s32 %v1159, %v1161
    %v1163 = vrot.slane %v1147, %v1162
    %v1165 = vunpack.c.l.s4 1966171168
    %v1166 = vunpack.c.0.s8 %v1165
    %v1167 = vlaneseq
    %v1168 = vshrl.u32 %v1167, 7
    %v1169 = vsub.s32 %v1166, %v1168
    %v1170 = vrot.slane %v1148, %v1169
    %v1172 = vunpack.c.l.s4 1966171168
    %v1173 = vunpack.c.0.s8 %v1172
    %v1174 = vlaneseq
    %v1175 = vshrl.u32 %v1174, 7
    %v1176 = vsub.s32 %v1173, %v1175
    %v1177 = vrot.slane %v1149, %v1176
    %v1178 = vcombine.high %v1156, %v1156
    %v1179 = vcombine.high %v1163, %v1163
    %v1180 = vcombine.high %v1170, %v1170
    %v1181 = vcombine.high %v1177, %v1177
    %v1182 = vcombine.high %v966, %v966
    %v1184 = vunpack.c.l.s4 1966171168
    %v1185 = vunpack.c.0.s8 %v1184
    %v1186 = vlaneseq
    %v1187 = vshrl.u32 %v1186, 7
    %v1188 = vsub.s32 %v1185, %v1187
    %v1189 = vrot.slane %v966, %v1188
    %v1191 = vunpack.c.l.s4 1966171168
    %v1192 = vunpack.c.0.s8 %v1191
    %v1193 = vlaneseq
    %v1194 = vshrl.u32 %v1193, 7
    %v1195 = vsub.s32 %v1192, %v1194
    %v1196 = vrot.slane %v1182, %v1195
    %v1197 = vcombine.high %v1189, %v1189
    %v1198 = vcombine.high %v1196, %v1196
    %v1200 = vunpack.c.l.s4 1966171168
    %v1201 = vunpack.c.0.s8 %v1200
    %v1202 = vlaneseq
    %v1203 = vshrl.u32 %v1202, 7
    %v1204 = vsub.s32 %v1201, %v1203
    %v1205 = vrot.slane %v1189, %v1204
    %v1207 = vunpack.c.l.s4 1966171168
    %v1208 = vunpack.c.0.s8 %v1207
    %v1209 = vlaneseq
    %v1210 = vshrl.u32 %v1209, 7
    %v1211 = vsub.s32 %v1208, %v1210
    %v1212 = vrot.slane %v1196, %v1211
    %v1214 = vunpack.c.l.s4 1966171168
    %v1215 = vunpack.c.0.s8 %v1214
    %v1216 = vlaneseq
    %v1217 = vshrl.u32 %v1216, 7
    %v1218 = vsub.s32 %v1215, %v1217
    %v1219 = vrot.slane %v1197, %v1218
    %v1221 = vunpack.c.l.s4 1966171168
    %v1222 = vunpack.c.0.s8 %v1221
    %v1223 = vlaneseq
    %v1224 = vshrl.u32 %v1223, 7
    %v1225 = vsub.s32 %v1222, %v1224
    %v1226 = vrot.slane %v1198, %v1225
    %v1227 = vcombine.high %v1205, %v1205
    %v1228 = vcombine.high %v1212, %v1212
    %v1229 = vcombine.high %v1219, %v1219
    %v1230 = vcombine.high %v1226, %v1226
    %v1231 = vcombine.high %v971, %v971
    %v1233 = vunpack.c.l.s4 1966171168
    %v1234 = vunpack.c.0.s8 %v1233
    %v1235 = vlaneseq
    %v1236 = vshrl.u32 %v1235, 7
    %v1237 = vsub.s32 %v1234, %v1236
    %v1238 = vrot.slane %v971, %v1237
    %v1240 = vunpack.c.l.s4 1966171168
    %v1241 = vunpack.c.0.s8 %v1240
    %v1242 = vlaneseq
    %v1243 = vshrl.u32 %v1242, 7
    %v1244 = vsub.s32 %v1241, %v1243
    %v1245 = vrot.slane %v1231, %v1244
    %v1246 = vcombine.high %v1238, %v1238
    %v1247 = vcombine.high %v1245, %v1245
    %v1249 = vunpack.c.l.s4 1966171168
    %v1250 = vunpack.c.0.s8 %v1249
    %v1251 = vlaneseq
    %v1252 = vshrl.u32 %v1251, 7
    %v1253 = vsub.s32 %v1250, %v1252
    %v1254 = vrot.slane %v1238, %v1253
    %v1256 = vunpack.c.l.s4 1966171168
    %v1257 = vunpack.c.0.s8 %v1256
    %v1258 = vlaneseq
    %v1259 = vshrl.u32 %v1258, 7
    %v1260 = vsub.s32 %v1257, %v1259
    %v1261 = vrot.slane %v1245, %v1260
    %v1263 = vunpack.c.l.s4 1966171168
    %v1264 = vunpack.c.0.s8 %v1263
    %v1265 = vlaneseq
    %v1266 = vshrl.u32 %v1265, 7
    %v1267 = vsub.s32 %v1264, %v1266
    %v1268 = vrot.slane %v1246, %v1267
    %v1270 = vunpack.c.l.s4 1966171168
    %v1271 = vunpack.c.0.s8 %v1270
    %v1272 = vlaneseq
    %v1273 = vshrl.u32 %v1272, 7
    %v1274 = vsub.s32 %v1271, %v1273
    %v1275 = vrot.slane %v1247, %v1274
    %v1276 = vcombine.high %v1254, %v1254
    %v1277 = vcombine.high %v1261, %v1261
    %v1278 = vcombine.high %v1268, %v1268
    %v1279 = vcombine.high %v1275, %v1275
    %v1280 = vcombine.high %v976, %v976
    %v1282 = vunpack.c.l.s4 1966171168
    %v1283 = vunpack.c.0.s8 %v1282
    %v1284 = vlaneseq
    %v1285 = vshrl.u32 %v1284, 7
    %v1286 = vsub.s32 %v1283, %v1285
    %v1287 = vrot.slane %v976, %v1286
    %v1289 = vunpack.c.l.s4 1966171168
    %v1290 = vunpack.c.0.s8 %v1289
    %v1291 = vlaneseq
    %v1292 = vshrl.u32 %v1291, 7
    %v1293 = vsub.s32 %v1290, %v1292
    %v1294 = vrot.slane %v1280, %v1293
    %v1295 = vcombine.high %v1287, %v1287
    %v1296 = vcombine.high %v1294, %v1294
    %v1298 = vunpack.c.l.s4 1966171168
    %v1299 = vunpack.c.0.s8 %v1298
    %v1300 = vlaneseq
    %v1301 = vshrl.u32 %v1300, 7
    %v1302 = vsub.s32 %v1299, %v1301
    %v1303 = vrot.slane %v1287, %v1302
    %v1305 = vunpack.c.l.s4 1966171168
    %v1306 = vunpack.c.0.s8 %v1305
    %v1307 = vlaneseq
    %v1308 = vshrl.u32 %v1307, 7
    %v1309 = vsub.s32 %v1306, %v1308
    %v1310 = vrot.slane %v1294, %v1309
    %v1312 = vunpack.c.l.s4 1966171168
    %v1313 = vunpack.c.0.s8 %v1312
    %v1314 = vlaneseq
    %v1315 = vshrl.u32 %v1314, 7
    %v1316 = vsub.s32 %v1313, %v1315
    %v1317 = vrot.slane %v1295, %v1316
    %v1319 = vunpack.c.l.s4 1966171168
    %v1320 = vunpack.c.0.s8 %v1319
    %v1321 = vlaneseq
    %v1322 = vshrl.u32 %v1321, 7
    %v1323 = vsub.s32 %v1320, %v1322
    %v1324 = vrot.slane %v1296, %v1323
    %v1325 = vcombine.high %v1303, %v1303
    %v1326 = vcombine.high %v1310, %v1310
    %v1327 = vcombine.high %v1317, %v1317
    %v1328 = vcombine.high %v1324, %v1324
    %v1329 = vld [vmem:[#allocation2 + $0xd8] sm:$0xff]
    %v1330 = vld [vmem:[#allocation2 + $0xe0] sm:$0xff]
    %v1331 = vld [vmem:[#allocation2 + $0xe8] sm:$0xff]
    %v1332 = vld [vmem:[#allocation2 + $0xf0] sm:$0xff]
    %v1333 = vld [vmem:[#allocation2 + $0xf8] sm:$0xf]
    %1335 = vrot.lane.b32.xlu0 %v109, 96
    %v1336 = vpop.permute.xlu0 %1335
    %v1338 = vmul.f32 %v109, %v1336
    %1340 = vrot.lane.b32.xlu0 %v1338, 96
    %v1341 = vpop.permute.xlu0 %1340
    %v1342 = vsel %vm864, %v1341, 0
    %1344 = vmatprep.subr.mxu0 0.0
    %1345 = vmatpush1.msra.mxu0 %v1329
    %1346 = vmatprep.subr.mxu0 0.0
    %1347 = vmatpush1.msra.mxu0 %v1330
    %1348 = vmatprep.subr.mxu0 0.0
    %1349 = vmatpush1.msra.mxu0 %v1331
    %1350 = vmatprep.subr.mxu0 0.0
    %1351 = vmatpush1.msra.mxu0 %v1332
    %1352 = vmatprep.subr.mxu0 0.0
    %1353 = vmatpush1.msra.mxu0 0.0
    %1354 = vmatprep.subr.mxu0 0.0
    %1355 = vmatpush1.msra.mxu0 0.0
    %1356 = vmatprep.subr.mxu0 0.0
    %1357 = vmatpush1.msra.mxu0 0.0
    %1358 = vmatprep.subr.mxu0 0.0
    %1359 = vmatpush1.msra.mxu0 0.0
    %1360 = vmatprep.subr.mxu0 0.0
    %1361 = vmatpush1.msra.mxu0 0.0
    %1362 = vmatprep.subr.mxu0 0.0
    %1363 = vmatpush1.msra.mxu0 0.0
    %1364 = vmatprep.subr.mxu0 0.0
    %1365 = vmatpush1.msra.mxu0 0.0
    %1366 = vmatprep.subr.mxu0 0.0
    %1367 = vmatpush1.msra.mxu0 0.0
    %1368 = vmatprep.subr.mxu0 0.0
    %1369 = vmatpush1.msra.mxu0 0.0
    %1370 = vmatprep.subr.mxu0 0.0
    %1371 = vmatpush1.msra.mxu0 0.0
    %1372 = vmatprep.subr.mxu0 0.0
    %1373 = vmatpush1.msra.mxu0 0.0
    %1374 = vmatprep.subr.mxu0 0.0
    %1375 = vmatpush1.msra.mxu0 0.0
    %1376 = vmatprep.subr.mxu0 0.0
    %1377 = vmatpush1.msra.mxu0 0.0
    %1378 = vmatprep.subr.mxu0 0.0
    %1379 = vmatpush1.msra.mxu0 0.0
    %1380 = vmatprep.subr.mxu0 0.0
    %1381 = vmatpush1.msra.mxu0 0.0
    %1382 = vmatprep.subr.mxu0 0.0
    %1383 = vmatpush1.msra.mxu0 0.0
    %1384 = vmatprep.subr.mxu0 0.0
    %1385 = vmatpush1.msra.mxu0 0.0
    %1386 = vmatprep.subr.mxu0 0.0
    %1387 = vmatpush1.msra.mxu0 0.0
    %1388 = vmatprep.subr.mxu0 0.0
    %1389 = vmatpush1.msra.mxu0 0.0
    %1390 = vmatprep.subr.mxu0 0.0
    %1391 = vmatpush1.msra.mxu0 0.0
    %1392 = vmatprep.subr.mxu0 0.0
    %1393 = vmatpush1.msra.mxu0 0.0
    %1394 = vmatprep.subr.mxu0 0.0
    %1395 = vmatpush1.msra.mxu0 0.0
    %1396 = vmatprep.subr.mxu0 0.0
    %1397 = vmatpush1.msra.mxu0 0.0
    %1398 = vmatprep.subr.mxu0 0.0
    %1399 = vmatpush1.msra.mxu0 0.0
    %1400 = vmatprep.subr.mxu0 0.0
    %1401 = vmatpush1.msra.mxu0 0.0
    %1402 = vmatprep.subr.mxu0 0.0
    %1403 = vmatpush1.msra.mxu0 0.0
    %1404 = vmatprep.subr.mxu0 0.0
    %1405 = vmatpush1.msra.mxu0 0.0
    %1406 = vmatprep.subr.mxu0 0.0
    %1407 = vmatpush1.msra.mxu0 0.0
    %1408 = vmatprep.mubr.f32.mxu0 0.0
    %1409 = vmatmul.mubr.f32.gmra.mrb[0].mxu0 %v1342
    %v1410 = vpop.f32.mrb[0].mxu0
    %v1411 = vadd.f32 0.0, %v1410
    %v1412 = vpop.f32.mrb[0].mxu0
    %1413 = vdwg.mxu0
    %v1414 = vmul.f32 %v1411, 0.35355338
    %v1415 = vcombine.high %v109, %v109
    %v1417 = vunpack.c.l.s4 1966171168
    %v1418 = vunpack.c.0.s8 %v1417
    %v1419 = vlaneseq
    %v1420 = vshrl.u32 %v1419, 7
    %v1421 = vsub.s32 %v1418, %v1420
    %v1422 = vrot.slane %v109, %v1421
    %v1424 = vunpack.c.l.s4 1966171168
    %v1425 = vunpack.c.0.s8 %v1424
    %v1426 = vlaneseq
    %v1427 = vshrl.u32 %v1426, 7
    %v1428 = vsub.s32 %v1425, %v1427
    %v1429 = vrot.slane %v1415, %v1428
    %v1430 = vcombine.high %v1422, %v1422
    %v1431 = vcombine.high %v1429, %v1429
    %v1433 = vunpack.c.l.s4 1966171168
    %v1434 = vunpack.c.0.s8 %v1433
    %v1435 = vlaneseq
    %v1436 = vshrl.u32 %v1435, 7
    %v1437 = vsub.s32 %v1434, %v1436
    %v1438 = vrot.slane %v1422, %v1437
    %v1440 = vunpack.c.l.s4 1966171168
    %v1441 = vunpack.c.0.s8 %v1440
    %v1442 = vlaneseq
    %v1443 = vshrl.u32 %v1442, 7
    %v1444 = vsub.s32 %v1441, %v1443
    %v1445 = vrot.slane %v1429, %v1444
    %v1447 = vunpack.c.l.s4 1966171168
    %v1448 = vunpack.c.0.s8 %v1447
    %v1449 = vlaneseq
    %v1450 = vshrl.u32 %v1449, 7
    %v1451 = vsub.s32 %v1448, %v1450
    %v1452 = vrot.slane %v1430, %v1451
    %v1454 = vunpack.c.l.s4 1966171168
    %v1455 = vunpack.c.0.s8 %v1454
    %v1456 = vlaneseq
    %v1457 = vshrl.u32 %v1456, 7
    %v1458 = vsub.s32 %v1455, %v1457
    %v1459 = vrot.slane %v1431, %v1458
    %v1460 = vcombine.high %v1438, %v1438
    %v1461 = vcombine.high %v1445, %v1445
    %v1462 = vcombine.high %v1452, %v1452
    %v1463 = vcombine.high %v1459, %v1459
    %v1464 = vlaneseq
    %v1465 = vshrl.u32 %v1464, 7
    %v1466 = vsub.s32 0, %v1465
    %v1467 = vrot.slane %v1438, %v1466
    %v1468 = vlaneseq
    %v1469 = vshrl.u32 %v1468, 7
    %v1470 = vsub.s32 0, %v1469
    %v1471 = vrot.slane %v1452, %v1470
    %v1472 = vlaneseq
    %v1473 = vshrl.u32 %v1472, 7
    %v1474 = vsub.s32 0, %v1473
    %v1475 = vrot.slane %v1460, %v1474
    %v1476 = vlaneseq
    %v1477 = vshrl.u32 %v1476, 7
    %v1478 = vsub.s32 0, %v1477
    %v1479 = vrot.slane %v1462, %v1478
    %v1480 = vlaneseq
    %v1481 = vshrl.u32 %v1480, 7
    %v1482 = vsub.s32 0, %v1481
    %v1483 = vrot.slane %v1445, %v1482
    %v1484 = vlaneseq
    %v1485 = vshrl.u32 %v1484, 7
    %v1486 = vsub.s32 0, %v1485
    %v1487 = vrot.slane %v1459, %v1486
    %v1488 = vlaneseq
    %v1489 = vshrl.u32 %v1488, 7
    %v1490 = vsub.s32 0, %v1489
    %v1491 = vrot.slane %v1461, %v1490
    %v1492 = vlaneseq
    %v1493 = vshrl.u32 %v1492, 7
    %v1494 = vsub.s32 0, %v1493
    %v1495 = vrot.slane %v1463, %v1494
    %v1504 = vcombine.low %v1009, %v1023
    %v1505 = vcombine.low %v1031, %v1033
    %v1506 = vcombine.low %v1016, %v1030
    %v1508 = vunpack.c.l.s4 1966171168
    %v1509 = vunpack.c.0.s8 %v1508
    %v1510 = vlaneseq
    %v1511 = vshrl.u32 %v1510, 7
    %v1512 = vsub.s32 %v1509, %v1511
    %v1513 = vrot.slane %v1504, %v1512
    %v1515 = vunpack.c.l.s4 1966171168
    %v1516 = vunpack.c.0.s8 %v1515
    %v1517 = vlaneseq
    %v1518 = vshrl.u32 %v1517, 7
    %v1519 = vsub.s32 %v1516, %v1518
    %v1520 = vrot.slane %v1505, %v1519
    %v1522 = vunpack.c.l.s4 1966171168
    %v1523 = vunpack.c.0.s8 %v1522
    %v1524 = vlaneseq
    %v1525 = vshrl.u32 %v1524, 7
    %v1526 = vsub.s32 %v1523, %v1525
    %v1527 = vrot.slane %v1506, %v1526
    %v1529 = vunpack.c.l.s4 1966171168
    %v1530 = vunpack.c.0.s8 %v1529
    %v1531 = vlaneseq
    %v1532 = vshrl.u32 %v1531, 7
    %v1533 = vsub.s32 %v1530, %v1532
    %v1534 = vrot.slane %v1032, %v1533
    %v1535 = vcombine.low %v1513, %v1520
    %v1536 = vcombine.low %v1527, %v1534
    %v1538 = vunpack.c.l.s4 1966171168
    %v1539 = vunpack.c.0.s8 %v1538
    %v1540 = vlaneseq
    %v1541 = vshrl.u32 %v1540, 7
    %v1542 = vsub.s32 %v1539, %v1541
    %v1543 = vrot.slane %v1535, %v1542
    %v1545 = vunpack.c.l.s4 1966171168
    %v1546 = vunpack.c.0.s8 %v1545
    %v1547 = vlaneseq
    %v1548 = vshrl.u32 %v1547, 7
    %v1549 = vsub.s32 %v1546, %v1548
    %v1550 = vrot.slane %v1536, %v1549
    %v1551 = vcombine.low %v1543, %v1550
    %v1552 = vcombine.low %v1034, %v1058
    %v1553 = vcombine.low %v1072, %v1080
    %v1554 = vcombine.low %v1082, %v1065
    %v1556 = vunpack.c.l.s4 1966171168
    %v1557 = vunpack.c.0.s8 %v1556
    %v1558 = vlaneseq
    %v1559 = vshrl.u32 %v1558, 7
    %v1560 = vsub.s32 %v1557, %v1559
    %v1561 = vrot.slane %v1552, %v1560
    %v1563 = vunpack.c.l.s4 1966171168
    %v1564 = vunpack.c.0.s8 %v1563
    %v1565 = vlaneseq
    %v1566 = vshrl.u32 %v1565, 7
    %v1567 = vsub.s32 %v1564, %v1566
    %v1568 = vrot.slane %v1553, %v1567
    %v1570 = vunpack.c.l.s4 1966171168
    %v1571 = vunpack.c.0.s8 %v1570
    %v1572 = vlaneseq
    %v1573 = vshrl.u32 %v1572, 7
    %v1574 = vsub.s32 %v1571, %v1573
    %v1575 = vrot.slane %v1554, %v1574
    %v1577 = vunpack.c.l.s4 1966171168
    %v1578 = vunpack.c.0.s8 %v1577
    %v1579 = vlaneseq
    %v1580 = vshrl.u32 %v1579, 7
    %v1581 = vsub.s32 %v1578, %v1580
    %v1582 = vrot.slane %v1079, %v1581
    %v1583 = vcombine.low %v1561, %v1568
    %v1584 = vcombine.low %v1575, %v1582
    %v1586 = vunpack.c.l.s4 1966171168
    %v1587 = vunpack.c.0.s8 %v1586
    %v1588 = vlaneseq
    %v1589 = vshrl.u32 %v1588, 7
    %v1590 = vsub.s32 %v1587, %v1589
    %v1591 = vrot.slane %v1583, %v1590
    %v1593 = vunpack.c.l.s4 1966171168
    %v1594 = vunpack.c.0.s8 %v1593
    %v1595 = vlaneseq
    %v1596 = vshrl.u32 %v1595, 7
    %v1597 = vsub.s32 %v1594, %v1596
    %v1598 = vrot.slane %v1584, %v1597
    %v1599 = vcombine.low %v1591, %v1598
    %v1600 = vcombine.low %v1081, %v1083
    %v1601 = vcombine.low %v1107, %v1121
    %v1602 = vcombine.low %v1129, %v1131
    %v1604 = vunpack.c.l.s4 1966171168
    %v1605 = vunpack.c.0.s8 %v1604
    %v1606 = vlaneseq
    %v1607 = vshrl.u32 %v1606, 7
    %v1608 = vsub.s32 %v1605, %v1607
    %v1609 = vrot.slane %v1600, %v1608
    %v1611 = vunpack.c.l.s4 1966171168
    %v1612 = vunpack.c.0.s8 %v1611
    %v1613 = vlaneseq
    %v1614 = vshrl.u32 %v1613, 7
    %v1615 = vsub.s32 %v1612, %v1614
    %v1616 = vrot.slane %v1601, %v1615
    %v1618 = vunpack.c.l.s4 1966171168
    %v1619 = vunpack.c.0.s8 %v1618
    %v1620 = vlaneseq
    %v1621 = vshrl.u32 %v1620, 7
    %v1622 = vsub.s32 %v1619, %v1621
    %v1623 = vrot.slane %v1602, %v1622
    %v1625 = vunpack.c.l.s4 1966171168
    %v1626 = vunpack.c.0.s8 %v1625
    %v1627 = vlaneseq
    %v1628 = vshrl.u32 %v1627, 7
    %v1629 = vsub.s32 %v1626, %v1628
    %v1630 = vrot.slane %v1114, %v1629
    %v1631 = vcombine.low %v1609, %v1616
    %v1632 = vcombine.low %v1623, %v1630
    %v1634 = vunpack.c.l.s4 1966171168
    %v1635 = vunpack.c.0.s8 %v1634
    %v1636 = vlaneseq
    %v1637 = vshrl.u32 %v1636, 7
    %v1638 = vsub.s32 %v1635, %v1637
    %v1639 = vrot.slane %v1631, %v1638
    %v1641 = vunpack.c.l.s4 1966171168
    %v1642 = vunpack.c.0.s8 %v1641
    %v1643 = vlaneseq
    %v1644 = vshrl.u32 %v1643, 7
    %v1645 = vsub.s32 %v1642, %v1644
    %v1646 = vrot.slane %v1632, %v1645
    %v1647 = vcombine.low %v1639, %v1646
    %v1648 = vcombine.low %v1128, %v1130
    %v1649 = vcombine.low %v1132, %v1156
    %v1650 = vcombine.low %v1170, %v1178
    %v1652 = vunpack.c.l.s4 1966171168
    %v1653 = vunpack.c.0.s8 %v1652
    %v1654 = vlaneseq
    %v1655 = vshrl.u32 %v1654, 7
    %v1656 = vsub.s32 %v1653, %v1655
    %v1657 = vrot.slane %v1648, %v1656
    %v1659 = vunpack.c.l.s4 1966171168
    %v1660 = vunpack.c.0.s8 %v1659
    %v1661 = vlaneseq
    %v1662 = vshrl.u32 %v1661, 7
    %v1663 = vsub.s32 %v1660, %v1662
    %v1664 = vrot.slane %v1649, %v1663
    %v1666 = vunpack.c.l.s4 1966171168
    %v1667 = vunpack.c.0.s8 %v1666
    %v1668 = vlaneseq
    %v1669 = vshrl.u32 %v1668, 7
    %v1670 = vsub.s32 %v1667, %v1669
    %v1671 = vrot.slane %v1650, %v1670
    %v1673 = vunpack.c.l.s4 1966171168
    %v1674 = vunpack.c.0.s8 %v1673
    %v1675 = vlaneseq
    %v1676 = vshrl.u32 %v1675, 7
    %v1677 = vsub.s32 %v1674, %v1676
    %v1678 = vrot.slane %v1180, %v1677
    %v1679 = vcombine.low %v1657, %v1664
    %v1680 = vcombine.low %v1671, %v1678
    %v1682 = vunpack.c.l.s4 1966171168
    %v1683 = vunpack.c.0.s8 %v1682
    %v1684 = vlaneseq
    %v1685 = vshrl.u32 %v1684, 7
    %v1686 = vsub.s32 %v1683, %v1685
    %v1687 = vrot.slane %v1679, %v1686
    %v1689 = vunpack.c.l.s4 1966171168
    %v1690 = vunpack.c.0.s8 %v1689
    %v1691 = vlaneseq
    %v1692 = vshrl.u32 %v1691, 7
    %v1693 = vsub.s32 %v1690, %v1692
    %v1694 = vrot.slane %v1680, %v1693
    %v1695 = vcombine.low %v1687, %v1694
    %v1696 = vcombine.low %v1163, %v1177
    %v1697 = vcombine.low %v1179, %v1181
    %v1698 = vcombine.low %v1205, %v1219
    %v1700 = vunpack.c.l.s4 1966171168
    %v1701 = vunpack.c.0.s8 %v1700
    %v1702 = vlaneseq
    %v1703 = vshrl.u32 %v1702, 7
    %v1704 = vsub.s32 %v1701, %v1703
    %v1705 = vrot.slane %v1696, %v1704
    %v1707 = vunpack.c.l.s4 1966171168
    %v1708 = vunpack.c.0.s8 %v1707
    %v1709 = vlaneseq
    %v1710 = vshrl.u32 %v1709, 7
    %v1711 = vsub.s32 %v1708, %v1710
    %v1712 = vrot.slane %v1697, %v1711
    %v1714 = vunpack.c.l.s4 1966171168
    %v1715 = vunpack.c.0.s8 %v1714
    %v1716 = vlaneseq
    %v1717 = vshrl.u32 %v1716, 7
    %v1718 = vsub.s32 %v1715, %v1717
    %v1719 = vrot.slane %v1698, %v1718
    %v1721 = vunpack.c.l.s4 1966171168
    %v1722 = vunpack.c.0.s8 %v1721
    %v1723 = vlaneseq
    %v1724 = vshrl.u32 %v1723, 7
    %v1725 = vsub.s32 %v1722, %v1724
    %v1726 = vrot.slane %v1227, %v1725
    %v1727 = vcombine.low %v1705, %v1712
    %v1728 = vcombine.low %v1719, %v1726
    %v1730 = vunpack.c.l.s4 1966171168
    %v1731 = vunpack.c.0.s8 %v1730
    %v1732 = vlaneseq
    %v1733 = vshrl.u32 %v1732, 7
    %v1734 = vsub.s32 %v1731, %v1733
    %v1735 = vrot.slane %v1727, %v1734
    %v1737 = vunpack.c.l.s4 1966171168
    %v1738 = vunpack.c.0.s8 %v1737
    %v1739 = vlaneseq
    %v1740 = vshrl.u32 %v1739, 7
    %v1741 = vsub.s32 %v1738, %v1740
    %v1742 = vrot.slane %v1728, %v1741
    %v1743 = vcombine.low %v1735, %v1742
    %v1744 = vcombine.low %v1229, %v1212
    %v1745 = vcombine.low %v1226, %v1228
    %v1746 = vcombine.low %v1230, %v1254
    %v1748 = vunpack.c.l.s4 1966171168
    %v1749 = vunpack.c.0.s8 %v1748
    %v1750 = vlaneseq
    %v1751 = vshrl.u32 %v1750, 7
    %v1752 = vsub.s32 %v1749, %v1751
    %v1753 = vrot.slane %v1744, %v1752
    %v1755 = vunpack.c.l.s4 1966171168
    %v1756 = vunpack.c.0.s8 %v1755
    %v1757 = vlaneseq
    %v1758 = vshrl.u32 %v1757, 7
    %v1759 = vsub.s32 %v1756, %v1758
    %v1760 = vrot.slane %v1745, %v1759
    %v1762 = vunpack.c.l.s4 1966171168
    %v1763 = vunpack.c.0.s8 %v1762
    %v1764 = vlaneseq
    %v1765 = vshrl.u32 %v1764, 7
    %v1766 = vsub.s32 %v1763, %v1765
    %v1767 = vrot.slane %v1746, %v1766
    %v1769 = vunpack.c.l.s4 1966171168
    %v1770 = vunpack.c.0.s8 %v1769
    %v1771 = vlaneseq
    %v1772 = vshrl.u32 %v1771, 7
    %v1773 = vsub.s32 %v1770, %v1772
    %v1774 = vrot.slane %v1268, %v1773
    %v1775 = vcombine.low %v1753, %v1760
    %v1776 = vcombine.low %v1767, %v1774
    %v1778 = vunpack.c.l.s4 1966171168
    %v1779 = vunpack.c.0.s8 %v1778
    %v1780 = vlaneseq
    %v1781 = vshrl.u32 %v1780, 7
    %v1782 = vsub.s32 %v1779, %v1781
    %v1783 = vrot.slane %v1775, %v1782
    %v1785 = vunpack.c.l.s4 1966171168
    %v1786 = vunpack.c.0.s8 %v1785
    %v1787 = vlaneseq
    %v1788 = vshrl.u32 %v1787, 7
    %v1789 = vsub.s32 %v1786, %v1788
    %v1790 = vrot.slane %v1776, %v1789
    %v1791 = vcombine.low %v1783, %v1790
    %v1792 = vcombine.low %v1276, %v1278
    %v1793 = vcombine.low %v1261, %v1275
    %v1794 = vcombine.low %v1277, %v1279
    %v1796 = vunpack.c.l.s4 1966171168
    %v1797 = vunpack.c.0.s8 %v1796
    %v1798 = vlaneseq
    %v1799 = vshrl.u32 %v1798, 7
    %v1800 = vsub.s32 %v1797, %v1799
    %v1801 = vrot.slane %v1792, %v1800
    %v1803 = vunpack.c.l.s4 1966171168
    %v1804 = vunpack.c.0.s8 %v1803
    %v1805 = vlaneseq
    %v1806 = vshrl.u32 %v1805, 7
    %v1807 = vsub.s32 %v1804, %v1806
    %v1808 = vrot.slane %v1793, %v1807
    %v1810 = vunpack.c.l.s4 1966171168
    %v1811 = vunpack.c.0.s8 %v1810
    %v1812 = vlaneseq
    %v1813 = vshrl.u32 %v1812, 7
    %v1814 = vsub.s32 %v1811, %v1813
    %v1815 = vrot.slane %v1794, %v1814
    %v1817 = vunpack.c.l.s4 1966171168
    %v1818 = vunpack.c.0.s8 %v1817
    %v1819 = vlaneseq
    %v1820 = vshrl.u32 %v1819, 7
    %v1821 = vsub.s32 %v1818, %v1820
    %v1822 = vrot.slane %v1303, %v1821
    %v1823 = vcombine.low %v1801, %v1808
    %v1824 = vcombine.low %v1815, %v1822
    %v1826 = vunpack.c.l.s4 1966171168
    %v1827 = vunpack.c.0.s8 %v1826
    %v1828 = vlaneseq
    %v1829 = vshrl.u32 %v1828, 7
    %v1830 = vsub.s32 %v1827, %v1829
    %v1831 = vrot.slane %v1823, %v1830
    %v1833 = vunpack.c.l.s4 1966171168
    %v1834 = vunpack.c.0.s8 %v1833
    %v1835 = vlaneseq
    %v1836 = vshrl.u32 %v1835, 7
    %v1837 = vsub.s32 %v1834, %v1836
    %v1838 = vrot.slane %v1824, %v1837
    %v1839 = vcombine.low %v1831, %v1838
    %v1840 = vcombine.low %v1317, %v1325
    %v1841 = vcombine.low %v1327, %v1310
    %v1842 = vcombine.low %v1324, %v1326
    %v1844 = vunpack.c.l.s4 1966171168
    %v1845 = vunpack.c.0.s8 %v1844
    %v1846 = vlaneseq
    %v1847 = vshrl.u32 %v1846, 7
    %v1848 = vsub.s32 %v1845, %v1847
    %v1849 = vrot.slane %v1840, %v1848
    %v1851 = vunpack.c.l.s4 1966171168
    %v1852 = vunpack.c.0.s8 %v1851
    %v1853 = vlaneseq
    %v1854 = vshrl.u32 %v1853, 7
    %v1855 = vsub.s32 %v1852, %v1854
    %v1856 = vrot.slane %v1841, %v1855
    %v1858 = vunpack.c.l.s4 1966171168
    %v1859 = vunpack.c.0.s8 %v1858
    %v1860 = vlaneseq
    %v1861 = vshrl.u32 %v1860, 7
    %v1862 = vsub.s32 %v1859, %v1861
    %v1863 = vrot.slane %v1842, %v1862
    %v1865 = vunpack.c.l.s4 1966171168
    %v1866 = vunpack.c.0.s8 %v1865
    %v1867 = vlaneseq
    %v1868 = vshrl.u32 %v1867, 7
    %v1869 = vsub.s32 %v1866, %v1868
    %v1870 = vrot.slane %v1328, %v1869
    %v1871 = vcombine.low %v1849, %v1856
    %v1872 = vcombine.low %v1863, %v1870
    %v1874 = vunpack.c.l.s4 1966171168
    %v1875 = vunpack.c.0.s8 %v1874
    %v1876 = vlaneseq
    %v1877 = vshrl.u32 %v1876, 7
    %v1878 = vsub.s32 %v1875, %v1877
    %v1879 = vrot.slane %v1871, %v1878
    %v1881 = vunpack.c.l.s4 1966171168
    %v1882 = vunpack.c.0.s8 %v1881
    %v1883 = vlaneseq
    %v1884 = vshrl.u32 %v1883, 7
    %v1885 = vsub.s32 %v1882, %v1884
    %v1886 = vrot.slane %v1872, %v1885
    %v1887 = vcombine.low %v1879, %v1886
    %1888 = vrot.lane.b32.xlu0 %v1551, 32
    %v1889 = vpop.permute.xlu0 %1888
    %1890 = vrot.lane.b32.xlu0 %v1599, 32
    %v1891 = vpop.permute.xlu0 %1890
    %1892 = vrot.lane.b32.xlu0 %v1647, 32
    %v1893 = vpop.permute.xlu0 %1892
    %1894 = vrot.lane.b32.xlu0 %v1695, 32
    %v1895 = vpop.permute.xlu0 %1894
    %1896 = vrot.lane.b32.xlu0 %v1743, 32
    %v1897 = vpop.permute.xlu0 %1896
    %1898 = vrot.lane.b32.xlu0 %v1791, 32
    %v1899 = vpop.permute.xlu0 %1898
    %1900 = vrot.lane.b32.xlu0 %v1839, 32
    %v1901 = vpop.permute.xlu0 %1900
    %1902 = vrot.lane.b32.xlu0 %v1887, 32
    %v1903 = vpop.permute.xlu0 %1902
    %v1912 = vmul.f32 %v1467, %v1889
    %v1913 = vmul.f32 %v1471, %v1891
    %v1914 = vmul.f32 %v1475, %v1893
    %v1915 = vmul.f32 %v1479, %v1895
    %v1916 = vmul.f32 %v1483, %v1897
    %v1917 = vmul.f32 %v1487, %v1899
    %v1918 = vmul.f32 %v1491, %v1901
    %v1919 = vmul.f32 %v1495, %v1903
    %v1928 = vcombine.high %v1912, %v1912
    %v1930 = vunpack.c.l.s4 1966171168
    %v1931 = vunpack.c.0.s8 %v1930
    %v1932 = vlaneseq
    %v1933 = vshrl.u32 %v1932, 7
    %v1934 = vsub.s32 %v1931, %v1933
    %v1935 = vrot.slane %v1912, %v1934
    %v1937 = vunpack.c.l.s4 1966171168
    %v1938 = vunpack.c.0.s8 %v1937
    %v1939 = vlaneseq
    %v1940 = vshrl.u32 %v1939, 7
    %v1941 = vsub.s32 %v1938, %v1940
    %v1942 = vrot.slane %v1928, %v1941
    %v1943 = vcombine.high %v1935, %v1935
    %v1944 = vcombine.high %v1942, %v1942
    %v1946 = vunpack.c.l.s4 1966171168
    %v1947 = vunpack.c.0.s8 %v1946
    %v1948 = vlaneseq
    %v1949 = vshrl.u32 %v1948, 7
    %v1950 = vsub.s32 %v1947, %v1949
    %v1951 = vrot.slane %v1935, %v1950
    %v1953 = vunpack.c.l.s4 1966171168
    %v1954 = vunpack.c.0.s8 %v1953
    %v1955 = vlaneseq
    %v1956 = vshrl.u32 %v1955, 7
    %v1957 = vsub.s32 %v1954, %v1956
    %v1958 = vrot.slane %v1942, %v1957
    %v1960 = vunpack.c.l.s4 1966171168
    %v1961 = vunpack.c.0.s8 %v1960
    %v1962 = vlaneseq
    %v1963 = vshrl.u32 %v1962, 7
    %v1964 = vsub.s32 %v1961, %v1963
    %v1965 = vrot.slane %v1943, %v1964
    %v1967 = vunpack.c.l.s4 1966171168
    %v1968 = vunpack.c.0.s8 %v1967
    %v1969 = vlaneseq
    %v1970 = vshrl.u32 %v1969, 7
    %v1971 = vsub.s32 %v1968, %v1970
    %v1972 = vrot.slane %v1944, %v1971
    %v1973 = vcombine.high %v1951, %v1951
    %v1974 = vcombine.high %v1958, %v1958
    %v1975 = vcombine.high %v1965, %v1965
    %v1976 = vcombine.high %v1913, %v1913
    %v1978 = vunpack.c.l.s4 1966171168
    %v1979 = vunpack.c.0.s8 %v1978
    %v1980 = vlaneseq
    %v1981 = vshrl.u32 %v1980, 7
    %v1982 = vsub.s32 %v1979, %v1981
    %v1983 = vrot.slane %v1913, %v1982
    %v1985 = vunpack.c.l.s4 1966171168
    %v1986 = vunpack.c.0.s8 %v1985
    %v1987 = vlaneseq
    %v1988 = vshrl.u32 %v1987, 7
    %v1989 = vsub.s32 %v1986, %v1988
    %v1990 = vrot.slane %v1976, %v1989
    %v1991 = vcombine.high %v1983, %v1983
    %v1992 = vcombine.high %v1990, %v1990
    %v1994 = vunpack.c.l.s4 1966171168
    %v1995 = vunpack.c.0.s8 %v1994
    %v1996 = vlaneseq
    %v1997 = vshrl.u32 %v1996, 7
    %v1998 = vsub.s32 %v1995, %v1997
    %v1999 = vrot.slane %v1983, %v1998
    %v2001 = vunpack.c.l.s4 1966171168
    %v2002 = vunpack.c.0.s8 %v2001
    %v2003 = vlaneseq
    %v2004 = vshrl.u32 %v2003, 7
    %v2005 = vsub.s32 %v2002, %v2004
    %v2006 = vrot.slane %v1990, %v2005
    %v2008 = vunpack.c.l.s4 1966171168
    %v2009 = vunpack.c.0.s8 %v2008
    %v2010 = vlaneseq
    %v2011 = vshrl.u32 %v2010, 7
    %v2012 = vsub.s32 %v2009, %v2011
    %v2013 = vrot.slane %v1991, %v2012
    %v2015 = vunpack.c.l.s4 1966171168
    %v2016 = vunpack.c.0.s8 %v2015
    %v2017 = vlaneseq
    %v2018 = vshrl.u32 %v2017, 7
    %v2019 = vsub.s32 %v2016, %v2018
    %v2020 = vrot.slane %v1992, %v2019
    %v2021 = vcombine.high %v1999, %v1999
    %v2022 = vcombine.high %v2006, %v2006
    %v2023 = vcombine.high %v2013, %v2013
    %v2024 = vcombine.high %v1914, %v1914
    %v2026 = vunpack.c.l.s4 1966171168
    %v2027 = vunpack.c.0.s8 %v2026
    %v2028 = vlaneseq
    %v2029 = vshrl.u32 %v2028, 7
    %v2030 = vsub.s32 %v2027, %v2029
    %v2031 = vrot.slane %v1914, %v2030
    %v2033 = vunpack.c.l.s4 1966171168
    %v2034 = vunpack.c.0.s8 %v2033
    %v2035 = vlaneseq
    %v2036 = vshrl.u32 %v2035, 7
    %v2037 = vsub.s32 %v2034, %v2036
    %v2038 = vrot.slane %v2024, %v2037
    %v2039 = vcombine.high %v2031, %v2031
    %v2040 = vcombine.high %v2038, %v2038
    %v2042 = vunpack.c.l.s4 1966171168
    %v2043 = vunpack.c.0.s8 %v2042
    %v2044 = vlaneseq
    %v2045 = vshrl.u32 %v2044, 7
    %v2046 = vsub.s32 %v2043, %v2045
    %v2047 = vrot.slane %v2031, %v2046
    %v2049 = vunpack.c.l.s4 1966171168
    %v2050 = vunpack.c.0.s8 %v2049
    %v2051 = vlaneseq
    %v2052 = vshrl.u32 %v2051, 7
    %v2053 = vsub.s32 %v2050, %v2052
    %v2054 = vrot.slane %v2038, %v2053
    %v2056 = vunpack.c.l.s4 1966171168
    %v2057 = vunpack.c.0.s8 %v2056
    %v2058 = vlaneseq
    %v2059 = vshrl.u32 %v2058, 7
    %v2060 = vsub.s32 %v2057, %v2059
    %v2061 = vrot.slane %v2039, %v2060
    %v2063 = vunpack.c.l.s4 1966171168
    %v2064 = vunpack.c.0.s8 %v2063
    %v2065 = vlaneseq
    %v2066 = vshrl.u32 %v2065, 7
    %v2067 = vsub.s32 %v2064, %v2066
    %v2068 = vrot.slane %v2040, %v2067
    %v2069 = vcombine.high %v2047, %v2047
    %v2070 = vcombine.high %v2054, %v2054
    %v2071 = vcombine.high %v2061, %v2061
    %v2072 = vcombine.high %v1915, %v1915
    %v2074 = vunpack.c.l.s4 1966171168
    %v2075 = vunpack.c.0.s8 %v2074
    %v2076 = vlaneseq
    %v2077 = vshrl.u32 %v2076, 7
    %v2078 = vsub.s32 %v2075, %v2077
    %v2079 = vrot.slane %v1915, %v2078
    %v2081 = vunpack.c.l.s4 1966171168
    %v2082 = vunpack.c.0.s8 %v2081
    %v2083 = vlaneseq
    %v2084 = vshrl.u32 %v2083, 7
    %v2085 = vsub.s32 %v2082, %v2084
    %v2086 = vrot.slane %v2072, %v2085
    %v2087 = vcombine.high %v2079, %v2079
    %v2088 = vcombine.high %v2086, %v2086
    %v2090 = vunpack.c.l.s4 1966171168
    %v2091 = vunpack.c.0.s8 %v2090
    %v2092 = vlaneseq
    %v2093 = vshrl.u32 %v2092, 7
    %v2094 = vsub.s32 %v2091, %v2093
    %v2095 = vrot.slane %v2079, %v2094
    %v2097 = vunpack.c.l.s4 1966171168
    %v2098 = vunpack.c.0.s8 %v2097
    %v2099 = vlaneseq
    %v2100 = vshrl.u32 %v2099, 7
    %v2101 = vsub.s32 %v2098, %v2100
    %v2102 = vrot.slane %v2086, %v2101
    %v2104 = vunpack.c.l.s4 1966171168
    %v2105 = vunpack.c.0.s8 %v2104
    %v2106 = vlaneseq
    %v2107 = vshrl.u32 %v2106, 7
    %v2108 = vsub.s32 %v2105, %v2107
    %v2109 = vrot.slane %v2087, %v2108
    %v2111 = vunpack.c.l.s4 1966171168
    %v2112 = vunpack.c.0.s8 %v2111
    %v2113 = vlaneseq
    %v2114 = vshrl.u32 %v2113, 7
    %v2115 = vsub.s32 %v2112, %v2114
    %v2116 = vrot.slane %v2088, %v2115
    %v2117 = vcombine.high %v2095, %v2095
    %v2118 = vcombine.high %v2102, %v2102
    %v2119 = vcombine.high %v2109, %v2109
    %v2120 = vcombine.high %v1916, %v1916
    %v2122 = vunpack.c.l.s4 1966171168
    %v2123 = vunpack.c.0.s8 %v2122
    %v2124 = vlaneseq
    %v2125 = vshrl.u32 %v2124, 7
    %v2126 = vsub.s32 %v2123, %v2125
    %v2127 = vrot.slane %v1916, %v2126
    %v2129 = vunpack.c.l.s4 1966171168
    %v2130 = vunpack.c.0.s8 %v2129
    %v2131 = vlaneseq
    %v2132 = vshrl.u32 %v2131, 7
    %v2133 = vsub.s32 %v2130, %v2132
    %v2134 = vrot.slane %v2120, %v2133
    %v2135 = vcombine.high %v2127, %v2127
    %v2136 = vcombine.high %v2134, %v2134
    %v2138 = vunpack.c.l.s4 1966171168
    %v2139 = vunpack.c.0.s8 %v2138
    %v2140 = vlaneseq
    %v2141 = vshrl.u32 %v2140, 7
    %v2142 = vsub.s32 %v2139, %v2141
    %v2143 = vrot.slane %v2127, %v2142
    %v2145 = vunpack.c.l.s4 1966171168
    %v2146 = vunpack.c.0.s8 %v2145
    %v2147 = vlaneseq
    %v2148 = vshrl.u32 %v2147, 7
    %v2149 = vsub.s32 %v2146, %v2148
    %v2150 = vrot.slane %v2134, %v2149
    %v2152 = vunpack.c.l.s4 1966171168
    %v2153 = vunpack.c.0.s8 %v2152
    %v2154 = vlaneseq
    %v2155 = vshrl.u32 %v2154, 7
    %v2156 = vsub.s32 %v2153, %v2155
    %v2157 = vrot.slane %v2135, %v2156
    %v2159 = vunpack.c.l.s4 1966171168
    %v2160 = vunpack.c.0.s8 %v2159
    %v2161 = vlaneseq
    %v2162 = vshrl.u32 %v2161, 7
    %v2163 = vsub.s32 %v2160, %v2162
    %v2164 = vrot.slane %v2136, %v2163
    %v2165 = vcombine.high %v2143, %v2143
    %v2166 = vcombine.high %v2150, %v2150
    %v2167 = vcombine.high %v2157, %v2157
    %v2168 = vcombine.high %v1917, %v1917
    %v2170 = vunpack.c.l.s4 1966171168
    %v2171 = vunpack.c.0.s8 %v2170
    %v2172 = vlaneseq
    %v2173 = vshrl.u32 %v2172, 7
    %v2174 = vsub.s32 %v2171, %v2173
    %v2175 = vrot.slane %v1917, %v2174
    %v2177 = vunpack.c.l.s4 1966171168
    %v2178 = vunpack.c.0.s8 %v2177
    %v2179 = vlaneseq
    %v2180 = vshrl.u32 %v2179, 7
    %v2181 = vsub.s32 %v2178, %v2180
    %v2182 = vrot.slane %v2168, %v2181
    %v2183 = vcombine.high %v2175, %v2175
    %v2184 = vcombine.high %v2182, %v2182
    %v2186 = vunpack.c.l.s4 1966171168
    %v2187 = vunpack.c.0.s8 %v2186
    %v2188 = vlaneseq
    %v2189 = vshrl.u32 %v2188, 7
    %v2190 = vsub.s32 %v2187, %v2189
    %v2191 = vrot.slane %v2175, %v2190
    %v2193 = vunpack.c.l.s4 1966171168
    %v2194 = vunpack.c.0.s8 %v2193
    %v2195 = vlaneseq
    %v2196 = vshrl.u32 %v2195, 7
    %v2197 = vsub.s32 %v2194, %v2196
    %v2198 = vrot.slane %v2182, %v2197
    %v2200 = vunpack.c.l.s4 1966171168
    %v2201 = vunpack.c.0.s8 %v2200
    %v2202 = vlaneseq
    %v2203 = vshrl.u32 %v2202, 7
    %v2204 = vsub.s32 %v2201, %v2203
    %v2205 = vrot.slane %v2183, %v2204
    %v2207 = vunpack.c.l.s4 1966171168
    %v2208 = vunpack.c.0.s8 %v2207
    %v2209 = vlaneseq
    %v2210 = vshrl.u32 %v2209, 7
    %v2211 = vsub.s32 %v2208, %v2210
    %v2212 = vrot.slane %v2184, %v2211
    %v2213 = vcombine.high %v2191, %v2191
    %v2214 = vcombine.high %v2198, %v2198
    %v2215 = vcombine.high %v2205, %v2205
    %v2216 = vcombine.high %v1918, %v1918
    %v2218 = vunpack.c.l.s4 1966171168
    %v2219 = vunpack.c.0.s8 %v2218
    %v2220 = vlaneseq
    %v2221 = vshrl.u32 %v2220, 7
    %v2222 = vsub.s32 %v2219, %v2221
    %v2223 = vrot.slane %v1918, %v2222
    %v2225 = vunpack.c.l.s4 1966171168
    %v2226 = vunpack.c.0.s8 %v2225
    %v2227 = vlaneseq
    %v2228 = vshrl.u32 %v2227, 7
    %v2229 = vsub.s32 %v2226, %v2228
    %v2230 = vrot.slane %v2216, %v2229
    %v2231 = vcombine.high %v2223, %v2223
    %v2232 = vcombine.high %v2230, %v2230
    %v2234 = vunpack.c.l.s4 1966171168
    %v2235 = vunpack.c.0.s8 %v2234
    %v2236 = vlaneseq
    %v2237 = vshrl.u32 %v2236, 7
    %v2238 = vsub.s32 %v2235, %v2237
    %v2239 = vrot.slane %v2223, %v2238
    %v2241 = vunpack.c.l.s4 1966171168
    %v2242 = vunpack.c.0.s8 %v2241
    %v2243 = vlaneseq
    %v2244 = vshrl.u32 %v2243, 7
    %v2245 = vsub.s32 %v2242, %v2244
    %v2246 = vrot.slane %v2230, %v2245
    %v2248 = vunpack.c.l.s4 1966171168
    %v2249 = vunpack.c.0.s8 %v2248
    %v2250 = vlaneseq
    %v2251 = vshrl.u32 %v2250, 7
    %v2252 = vsub.s32 %v2249, %v2251
    %v2253 = vrot.slane %v2231, %v2252
    %v2255 = vunpack.c.l.s4 1966171168
    %v2256 = vunpack.c.0.s8 %v2255
    %v2257 = vlaneseq
    %v2258 = vshrl.u32 %v2257, 7
    %v2259 = vsub.s32 %v2256, %v2258
    %v2260 = vrot.slane %v2232, %v2259
    %v2261 = vcombine.high %v2239, %v2239
    %v2262 = vcombine.high %v2246, %v2246
    %v2263 = vcombine.high %v2253, %v2253
    %v2264 = vcombine.high %v1919, %v1919
    %v2266 = vunpack.c.l.s4 1966171168
    %v2267 = vunpack.c.0.s8 %v2266
    %v2268 = vlaneseq
    %v2269 = vshrl.u32 %v2268, 7
    %v2270 = vsub.s32 %v2267, %v2269
    %v2271 = vrot.slane %v1919, %v2270
    %v2273 = vunpack.c.l.s4 1966171168
    %v2274 = vunpack.c.0.s8 %v2273
    %v2275 = vlaneseq
    %v2276 = vshrl.u32 %v2275, 7
    %v2277 = vsub.s32 %v2274, %v2276
    %v2278 = vrot.slane %v2264, %v2277
    %v2279 = vcombine.high %v2271, %v2271
    %v2280 = vcombine.high %v2278, %v2278
    %v2282 = vunpack.c.l.s4 1966171168
    %v2283 = vunpack.c.0.s8 %v2282
    %v2284 = vlaneseq
    %v2285 = vshrl.u32 %v2284, 7
    %v2286 = vsub.s32 %v2283, %v2285
    %v2287 = vrot.slane %v2271, %v2286
    %v2289 = vunpack.c.l.s4 1966171168
    %v2290 = vunpack.c.0.s8 %v2289
    %v2291 = vlaneseq
    %v2292 = vshrl.u32 %v2291, 7
    %v2293 = vsub.s32 %v2290, %v2292
    %v2294 = vrot.slane %v2278, %v2293
    %v2296 = vunpack.c.l.s4 1966171168
    %v2297 = vunpack.c.0.s8 %v2296
    %v2298 = vlaneseq
    %v2299 = vshrl.u32 %v2298, 7
    %v2300 = vsub.s32 %v2297, %v2299
    %v2301 = vrot.slane %v2279, %v2300
    %v2303 = vunpack.c.l.s4 1966171168
    %v2304 = vunpack.c.0.s8 %v2303
    %v2305 = vlaneseq
    %v2306 = vshrl.u32 %v2305, 7
    %v2307 = vsub.s32 %v2304, %v2306
    %v2308 = vrot.slane %v2280, %v2307
    %v2309 = vcombine.high %v2287, %v2287
    %v2310 = vcombine.high %v2294, %v2294
    %v2311 = vcombine.high %v2301, %v2301
    %v2312 = vcombine.low %v1951, %v1965
    %v2313 = vcombine.low %v1973, %v1975
    %v2314 = vcombine.low %v1958, %v1972
    %v2315 = vcombine.low %v1974, %v1999
    %v2317 = vunpack.c.l.s4 1966171168
    %v2318 = vunpack.c.0.s8 %v2317
    %v2319 = vlaneseq
    %v2320 = vshrl.u32 %v2319, 7
    %v2321 = vsub.s32 %v2318, %v2320
    %v2322 = vrot.slane %v2312, %v2321
    %v2324 = vunpack.c.l.s4 1966171168
    %v2325 = vunpack.c.0.s8 %v2324
    %v2326 = vlaneseq
    %v2327 = vshrl.u32 %v2326, 7
    %v2328 = vsub.s32 %v2325, %v2327
    %v2329 = vrot.slane %v2313, %v2328
    %v2331 = vunpack.c.l.s4 1966171168
    %v2332 = vunpack.c.0.s8 %v2331
    %v2333 = vlaneseq
    %v2334 = vshrl.u32 %v2333, 7
    %v2335 = vsub.s32 %v2332, %v2334
    %v2336 = vrot.slane %v2314, %v2335
    %v2338 = vunpack.c.l.s4 1966171168
    %v2339 = vunpack.c.0.s8 %v2338
    %v2340 = vlaneseq
    %v2341 = vshrl.u32 %v2340, 7
    %v2342 = vsub.s32 %v2339, %v2341
    %v2343 = vrot.slane %v2315, %v2342
    %v2344 = vcombine.low %v2322, %v2329
    %v2345 = vcombine.low %v2336, %v2343
    %v2347 = vunpack.c.l.s4 1966171168
    %v2348 = vunpack.c.0.s8 %v2347
    %v2349 = vlaneseq
    %v2350 = vshrl.u32 %v2349, 7
    %v2351 = vsub.s32 %v2348, %v2350
    %v2352 = vrot.slane %v2344, %v2351
    %v2354 = vunpack.c.l.s4 1966171168
    %v2355 = vunpack.c.0.s8 %v2354
    %v2356 = vlaneseq
    %v2357 = vshrl.u32 %v2356, 7
    %v2358 = vsub.s32 %v2355, %v2357
    %v2359 = vrot.slane %v2345, %v2358
    %v2360 = vcombine.low %v2352, %v2359
    %v2361 = vcombine.low %v2013, %v2021
    %v2362 = vcombine.low %v2023, %v2006
    %v2363 = vcombine.low %v2020, %v2022
    %v2364 = vcombine.low %v2047, %v2061
    %v2366 = vunpack.c.l.s4 1966171168
    %v2367 = vunpack.c.0.s8 %v2366
    %v2368 = vlaneseq
    %v2369 = vshrl.u32 %v2368, 7
    %v2370 = vsub.s32 %v2367, %v2369
    %v2371 = vrot.slane %v2361, %v2370
    %v2373 = vunpack.c.l.s4 1966171168
    %v2374 = vunpack.c.0.s8 %v2373
    %v2375 = vlaneseq
    %v2376 = vshrl.u32 %v2375, 7
    %v2377 = vsub.s32 %v2374, %v2376
    %v2378 = vrot.slane %v2362, %v2377
    %v2380 = vunpack.c.l.s4 1966171168
    %v2381 = vunpack.c.0.s8 %v2380
    %v2382 = vlaneseq
    %v2383 = vshrl.u32 %v2382, 7
    %v2384 = vsub.s32 %v2381, %v2383
    %v2385 = vrot.slane %v2363, %v2384
    %v2387 = vunpack.c.l.s4 1966171168
    %v2388 = vunpack.c.0.s8 %v2387
    %v2389 = vlaneseq
    %v2390 = vshrl.u32 %v2389, 7
    %v2391 = vsub.s32 %v2388, %v2390
    %v2392 = vrot.slane %v2364, %v2391
    %v2393 = vcombine.low %v2371, %v2378
    %v2394 = vcombine.low %v2385, %v2392
    %v2396 = vunpack.c.l.s4 1966171168
    %v2397 = vunpack.c.0.s8 %v2396
    %v2398 = vlaneseq
    %v2399 = vshrl.u32 %v2398, 7
    %v2400 = vsub.s32 %v2397, %v2399
    %v2401 = vrot.slane %v2393, %v2400
    %v2403 = vunpack.c.l.s4 1966171168
    %v2404 = vunpack.c.0.s8 %v2403
    %v2405 = vlaneseq
    %v2406 = vshrl.u32 %v2405, 7
    %v2407 = vsub.s32 %v2404, %v2406
    %v2408 = vrot.slane %v2394, %v2407
    %v2409 = vcombine.low %v2401, %v2408
    %v2410 = vcombine.low %v2069, %v2071
    %v2411 = vcombine.low %v2054, %v2068
    %v2412 = vcombine.low %v2070, %v2095
    %v2413 = vcombine.low %v2109, %v2117
    %v2415 = vunpack.c.l.s4 1966171168
    %v2416 = vunpack.c.0.s8 %v2415
    %v2417 = vlaneseq
    %v2418 = vshrl.u32 %v2417, 7
    %v2419 = vsub.s32 %v2416, %v2418
    %v2420 = vrot.slane %v2410, %v2419
    %v2422 = vunpack.c.l.s4 1966171168
    %v2423 = vunpack.c.0.s8 %v2422
    %v2424 = vlaneseq
    %v2425 = vshrl.u32 %v2424, 7
    %v2426 = vsub.s32 %v2423, %v2425
    %v2427 = vrot.slane %v2411, %v2426
    %v2429 = vunpack.c.l.s4 1966171168
    %v2430 = vunpack.c.0.s8 %v2429
    %v2431 = vlaneseq
    %v2432 = vshrl.u32 %v2431, 7
    %v2433 = vsub.s32 %v2430, %v2432
    %v2434 = vrot.slane %v2412, %v2433
    %v2436 = vunpack.c.l.s4 1966171168
    %v2437 = vunpack.c.0.s8 %v2436
    %v2438 = vlaneseq
    %v2439 = vshrl.u32 %v2438, 7
    %v2440 = vsub.s32 %v2437, %v2439
    %v2441 = vrot.slane %v2413, %v2440
    %v2442 = vcombine.low %v2420, %v2427
    %v2443 = vcombine.low %v2434, %v2441
    %v2445 = vunpack.c.l.s4 1966171168
    %v2446 = vunpack.c.0.s8 %v2445
    %v2447 = vlaneseq
    %v2448 = vshrl.u32 %v2447, 7
    %v2449 = vsub.s32 %v2446, %v2448
    %v2450 = vrot.slane %v2442, %v2449
    %v2452 = vunpack.c.l.s4 1966171168
    %v2453 = vunpack.c.0.s8 %v2452
    %v2454 = vlaneseq
    %v2455 = vshrl.u32 %v2454, 7
    %v2456 = vsub.s32 %v2453, %v2455
    %v2457 = vrot.slane %v2443, %v2456
    %v2458 = vcombine.low %v2450, %v2457
    %v2459 = vcombine.low %v2119, %v2102
    %v2460 = vcombine.low %v2116, %v2118
    %v2461 = vcombine.low %v2143, %v2157
    %v2462 = vcombine.low %v2165, %v2167
    %v2464 = vunpack.c.l.s4 1966171168
    %v2465 = vunpack.c.0.s8 %v2464
    %v2466 = vlaneseq
    %v2467 = vshrl.u32 %v2466, 7
    %v2468 = vsub.s32 %v2465, %v2467
    %v2469 = vrot.slane %v2459, %v2468
    %v2471 = vunpack.c.l.s4 1966171168
    %v2472 = vunpack.c.0.s8 %v2471
    %v2473 = vlaneseq
    %v2474 = vshrl.u32 %v2473, 7
    %v2475 = vsub.s32 %v2472, %v2474
    %v2476 = vrot.slane %v2460, %v2475
    %v2478 = vunpack.c.l.s4 1966171168
    %v2479 = vunpack.c.0.s8 %v2478
    %v2480 = vlaneseq
    %v2481 = vshrl.u32 %v2480, 7
    %v2482 = vsub.s32 %v2479, %v2481
    %v2483 = vrot.slane %v2461, %v2482
    %v2485 = vunpack.c.l.s4 1966171168
    %v2486 = vunpack.c.0.s8 %v2485
    %v2487 = vlaneseq
    %v2488 = vshrl.u32 %v2487, 7
    %v2489 = vsub.s32 %v2486, %v2488
    %v2490 = vrot.slane %v2462, %v2489
    %v2491 = vcombine.low %v2469, %v2476
    %v2492 = vcombine.low %v2483, %v2490
    %v2494 = vunpack.c.l.s4 1966171168
    %v2495 = vunpack.c.0.s8 %v2494
    %v2496 = vlaneseq
    %v2497 = vshrl.u32 %v2496, 7
    %v2498 = vsub.s32 %v2495, %v2497
    %v2499 = vrot.slane %v2491, %v2498
    %v2501 = vunpack.c.l.s4 1966171168
    %v2502 = vunpack.c.0.s8 %v2501
    %v2503 = vlaneseq
    %v2504 = vshrl.u32 %v2503, 7
    %v2505 = vsub.s32 %v2502, %v2504
    %v2506 = vrot.slane %v2492, %v2505
    %v2507 = vcombine.low %v2499, %v2506
    %v2508 = vcombine.low %v2150, %v2164
    %v2509 = vcombine.low %v2166, %v2191
    %v2510 = vcombine.low %v2205, %v2213
    %v2511 = vcombine.low %v2215, %v2198
    %v2513 = vunpack.c.l.s4 1966171168
    %v2514 = vunpack.c.0.s8 %v2513
    %v2515 = vlaneseq
    %v2516 = vshrl.u32 %v2515, 7
    %v2517 = vsub.s32 %v2514, %v2516
    %v2518 = vrot.slane %v2508, %v2517
    %v2520 = vunpack.c.l.s4 1966171168
    %v2521 = vunpack.c.0.s8 %v2520
    %v2522 = vlaneseq
    %v2523 = vshrl.u32 %v2522, 7
    %v2524 = vsub.s32 %v2521, %v2523
    %v2525 = vrot.slane %v2509, %v2524
    %v2527 = vunpack.c.l.s4 1966171168
    %v2528 = vunpack.c.0.s8 %v2527
    %v2529 = vlaneseq
    %v2530 = vshrl.u32 %v2529, 7
    %v2531 = vsub.s32 %v2528, %v2530
    %v2532 = vrot.slane %v2510, %v2531
    %v2534 = vunpack.c.l.s4 1966171168
    %v2535 = vunpack.c.0.s8 %v2534
    %v2536 = vlaneseq
    %v2537 = vshrl.u32 %v2536, 7
    %v2538 = vsub.s32 %v2535, %v2537
    %v2539 = vrot.slane %v2511, %v2538
    %v2540 = vcombine.low %v2518, %v2525
    %v2541 = vcombine.low %v2532, %v2539
    %v2543 = vunpack.c.l.s4 1966171168
    %v2544 = vunpack.c.0.s8 %v2543
    %v2545 = vlaneseq
    %v2546 = vshrl.u32 %v2545, 7
    %v2547 = vsub.s32 %v2544, %v2546
    %v2548 = vrot.slane %v2540, %v2547
    %v2550 = vunpack.c.l.s4 1966171168
    %v2551 = vunpack.c.0.s8 %v2550
    %v2552 = vlaneseq
    %v2553 = vshrl.u32 %v2552, 7
    %v2554 = vsub.s32 %v2551, %v2553
    %v2555 = vrot.slane %v2541, %v2554
    %v2556 = vcombine.low %v2548, %v2555
    %v2557 = vcombine.low %v2212, %v2214
    %v2558 = vcombine.low %v2239, %v2253
    %v2559 = vcombine.low %v2261, %v2263
    %v2560 = vcombine.low %v2246, %v2260
    %v2562 = vunpack.c.l.s4 1966171168
    %v2563 = vunpack.c.0.s8 %v2562
    %v2564 = vlaneseq
    %v2565 = vshrl.u32 %v2564, 7
    %v2566 = vsub.s32 %v2563, %v2565
    %v2567 = vrot.slane %v2557, %v2566
    %v2569 = vunpack.c.l.s4 1966171168
    %v2570 = vunpack.c.0.s8 %v2569
    %v2571 = vlaneseq
    %v2572 = vshrl.u32 %v2571, 7
    %v2573 = vsub.s32 %v2570, %v2572
    %v2574 = vrot.slane %v2558, %v2573
    %v2576 = vunpack.c.l.s4 1966171168
    %v2577 = vunpack.c.0.s8 %v2576
    %v2578 = vlaneseq
    %v2579 = vshrl.u32 %v2578, 7
    %v2580 = vsub.s32 %v2577, %v2579
    %v2581 = vrot.slane %v2559, %v2580
    %v2583 = vunpack.c.l.s4 1966171168
    %v2584 = vunpack.c.0.s8 %v2583
    %v2585 = vlaneseq
    %v2586 = vshrl.u32 %v2585, 7
    %v2587 = vsub.s32 %v2584, %v2586
    %v2588 = vrot.slane %v2560, %v2587
    %v2589 = vcombine.low %v2567, %v2574
    %v2590 = vcombine.low %v2581, %v2588
    %v2592 = vunpack.c.l.s4 1966171168
    %v2593 = vunpack.c.0.s8 %v2592
    %v2594 = vlaneseq
    %v2595 = vshrl.u32 %v2594, 7
    %v2596 = vsub.s32 %v2593, %v2595
    %v2597 = vrot.slane %v2589, %v2596
    %v2599 = vunpack.c.l.s4 1966171168
    %v2600 = vunpack.c.0.s8 %v2599
    %v2601 = vlaneseq
    %v2602 = vshrl.u32 %v2601, 7
    %v2603 = vsub.s32 %v2600, %v2602
    %v2604 = vrot.slane %v2590, %v2603
    %v2605 = vcombine.low %v2597, %v2604
    %v2606 = vcombine.low %v2262, %v2287
    %v2607 = vcombine.low %v2301, %v2309
    %v2608 = vcombine.low %v2311, %v2294
    %v2609 = vcombine.low %v2308, %v2310
    %v2611 = vunpack.c.l.s4 1966171168
    %v2612 = vunpack.c.0.s8 %v2611
    %v2613 = vlaneseq
    %v2614 = vshrl.u32 %v2613, 7
    %v2615 = vsub.s32 %v2612, %v2614
    %v2616 = vrot.slane %v2606, %v2615
    %v2618 = vunpack.c.l.s4 1966171168
    %v2619 = vunpack.c.0.s8 %v2618
    %v2620 = vlaneseq
    %v2621 = vshrl.u32 %v2620, 7
    %v2622 = vsub.s32 %v2619, %v2621
    %v2623 = vrot.slane %v2607, %v2622
    %v2625 = vunpack.c.l.s4 1966171168
    %v2626 = vunpack.c.0.s8 %v2625
    %v2627 = vlaneseq
    %v2628 = vshrl.u32 %v2627, 7
    %v2629 = vsub.s32 %v2626, %v2628
    %v2630 = vrot.slane %v2608, %v2629
    %v2632 = vunpack.c.l.s4 1966171168
    %v2633 = vunpack.c.0.s8 %v2632
    %v2634 = vlaneseq
    %v2635 = vshrl.u32 %v2634, 7
    %v2636 = vsub.s32 %v2633, %v2635
    %v2637 = vrot.slane %v2609, %v2636
    %v2638 = vcombine.low %v2616, %v2623
    %v2639 = vcombine.low %v2630, %v2637
    %v2641 = vunpack.c.l.s4 1966171168
    %v2642 = vunpack.c.0.s8 %v2641
    %v2643 = vlaneseq
    %v2644 = vshrl.u32 %v2643, 7
    %v2645 = vsub.s32 %v2642, %v2644
    %v2646 = vrot.slane %v2638, %v2645
    %v2648 = vunpack.c.l.s4 1966171168
    %v2649 = vunpack.c.0.s8 %v2648
    %v2650 = vlaneseq
    %v2651 = vshrl.u32 %v2650, 7
    %v2652 = vsub.s32 %v2649, %v2651
    %v2653 = vrot.slane %v2639, %v2652
    %v2654 = vcombine.low %v2646, %v2653
    %2655 = vrot.lane.b32.xlu0 %v2360, 96
    %v2656 = vpop.permute.xlu0 %2655
    %2657 = vrot.lane.b32.xlu0 %v2409, 96
    %v2658 = vpop.permute.xlu0 %2657
    %2659 = vrot.lane.b32.xlu0 %v2458, 96
    %v2660 = vpop.permute.xlu0 %2659
    %2661 = vrot.lane.b32.xlu0 %v2507, 96
    %v2662 = vpop.permute.xlu0 %2661
    %2663 = vrot.lane.b32.xlu0 %v2556, 96
    %v2664 = vpop.permute.xlu0 %2663
    %2665 = vrot.lane.b32.xlu0 %v2605, 96
    %v2666 = vpop.permute.xlu0 %2665
    %2667 = vrot.lane.b32.xlu0 %v2654, 96
    %v2668 = vpop.permute.xlu0 %2667
    %v2669 = vsel %vm864, %v2656, 0
    %v2671 = vsel %vm864, %v2658, 0
    %v2673 = vsel %vm864, %v2660, 0
    %v2675 = vsel %vm864, %v2662, 0
    %v2677 = vsel %vm864, %v2664, 0
    %v2679 = vsel %vm864, %v2666, 0
    %v2681 = vsel %vm864, %v2668, 0
    %2683 = vmatprep.subr.mxu0 0.0
    %2684 = vmatpush1.msra.mxu0 %v1329
    %2685 = vmatprep.subr.mxu0 0.0
    %2686 = vmatpush1.msra.mxu0 %v1330
    %2687 = vmatprep.subr.mxu0 0.0
    %2688 = vmatpush1.msra.mxu0 %v1331
    %2689 = vmatprep.subr.mxu0 0.0
    %2690 = vmatpush1.msra.mxu0 %v1332
    %2691 = vmatprep.subr.mxu0 0.0
    %2692 = vmatpush1.msra.mxu0 0.0
    %2693 = vmatprep.subr.mxu0 0.0
    %2694 = vmatpush1.msra.mxu0 0.0
    %2695 = vmatprep.subr.mxu0 0.0
    %2696 = vmatpush1.msra.mxu0 0.0
    %2697 = vmatprep.subr.mxu0 0.0
    %2698 = vmatpush1.msra.mxu0 0.0
    %2699 = vmatprep.subr.mxu0 0.0
    %2700 = vmatpush1.msra.mxu0 0.0
    %2701 = vmatprep.subr.mxu0 0.0
    %2702 = vmatpush1.msra.mxu0 0.0
    %2703 = vmatprep.subr.mxu0 0.0
    %2704 = vmatpush1.msra.mxu0 0.0
    %2705 = vmatprep.subr.mxu0 0.0
    %2706 = vmatpush1.msra.mxu0 0.0
    %2707 = vmatprep.subr.mxu0 0.0
    %2708 = vmatpush1.msra.mxu0 0.0
    %2709 = vmatprep.subr.mxu0 0.0
    %2710 = vmatpush1.msra.mxu0 0.0
    %2711 = vmatprep.subr.mxu0 0.0
    %2712 = vmatpush1.msra.mxu0 0.0
    %2713 = vmatprep.subr.mxu0 0.0
    %2714 = vmatpush1.msra.mxu0 0.0
    %2715 = vmatprep.subr.mxu0 0.0
    %2716 = vmatpush1.msra.mxu0 0.0
    %2717 = vmatprep.subr.mxu0 0.0
    %2718 = vmatpush1.msra.mxu0 0.0
    %2719 = vmatprep.subr.mxu0 0.0
    %2720 = vmatpush1.msra.mxu0 0.0
    %2721 = vmatprep.subr.mxu0 0.0
    %2722 = vmatpush1.msra.mxu0 0.0
    %2723 = vmatprep.subr.mxu0 0.0
    %2724 = vmatpush1.msra.mxu0 0.0
    %2725 = vmatprep.subr.mxu0 0.0
    %2726 = vmatpush1.msra.mxu0 0.0
    %2727 = vmatprep.subr.mxu0 0.0
    %2728 = vmatpush1.msra.mxu0 0.0
    %2729 = vmatprep.subr.mxu0 0.0
    %2730 = vmatpush1.msra.mxu0 0.0
    %2731 = vmatprep.subr.mxu0 0.0
    %2732 = vmatpush1.msra.mxu0 0.0
    %2733 = vmatprep.subr.mxu0 0.0
    %2734 = vmatpush1.msra.mxu0 0.0
    %2735 = vmatprep.subr.mxu0 0.0
    %2736 = vmatpush1.msra.mxu0 0.0
    %2737 = vmatprep.subr.mxu0 0.0
    %2738 = vmatpush1.msra.mxu0 0.0
    %2739 = vmatprep.subr.mxu0 0.0
    %2740 = vmatpush1.msra.mxu0 0.0
    %2741 = vmatprep.subr.mxu0 0.0
    %2742 = vmatpush1.msra.mxu0 0.0
    %2743 = vmatprep.subr.mxu0 0.0
    %2744 = vmatpush1.msra.mxu0 0.0
    %2745 = vmatprep.subr.mxu0 0.0
    %2746 = vmatpush1.msra.mxu0 0.0
    %2747 = vmatprep.mubr.f32.mxu0 0.0
    %2748 = vmatmul.mubr.f32.gmra.mrb[0].mxu0 %v2669
    %v2749 = vpop.f32.mrb[0].mxu0
    %v2750 = vadd.f32 0.0, %v2749
    %v2751 = vpop.f32.mrb[0].mxu0
    %2752 = vmatprep.mubr.f32.mxu0 0.0
    %2753 = vmatmul.mubr.f32.gmra.mrb[0].mxu0 %v2671
    %v2754 = vpop.f32.mrb[0].mxu0
    %v2755 = vadd.f32 0.0, %v2754
    %v2756 = vpop.f32.mrb[0].mxu0
    %2757 = vmatprep.mubr.f32.mxu0 0.0
    %2758 = vmatmul.mubr.f32.gmra.mrb[0].mxu0 %v2673
    %v2759 = vpop.f32.mrb[0].mxu0
    %v2760 = vadd.f32 0.0, %v2759
    %v2761 = vpop.f32.mrb[0].mxu0
    %2762 = vmatprep.mubr.f32.mxu0 0.0
    %2763 = vmatmul.mubr.f32.gmra.mrb[0].mxu0 %v2675
    %v2764 = vpop.f32.mrb[0].mxu0
    %v2765 = vadd.f32 0.0, %v2764
    %v2766 = vpop.f32.mrb[0].mxu0
    %2767 = vmatprep.mubr.f32.mxu0 0.0
    %2768 = vmatmul.mubr.f32.gmra.mrb[0].mxu0 %v2677
    %v2769 = vpop.f32.mrb[0].mxu0
    %v2770 = vadd.f32 0.0, %v2769
    %v2771 = vpop.f32.mrb[0].mxu0
    %2772 = vmatprep.mubr.f32.mxu0 0.0
    %2773 = vmatmul.mubr.f32.gmra.mrb[0].mxu0 %v2679
    %v2774 = vpop.f32.mrb[0].mxu0
    %v2775 = vadd.f32 0.0, %v2774
    %v2776 = vpop.f32.mrb[0].mxu0
    %2777 = vmatprep.mubr.f32.mxu0 0.0
    %2778 = vmatmul.mubr.f32.gmra.mrb[0].mxu0 %v2681
    %v2779 = vpop.f32.mrb[0].mxu0
    %v2780 = vadd.f32 0.0, %v2779
    %v2781 = vpop.f32.mrb[0].mxu0
    %2782 = vdwg.mxu0
    %v2790 = vcombine.high %v2750, %v2750
    %v2792 = vunpack.c.l.s4 1966171168
    %v2793 = vunpack.c.0.s8 %v2792
    %v2794 = vlaneseq
    %v2795 = vshrl.u32 %v2794, 7
    %v2796 = vsub.s32 %v2793, %v2795
    %v2797 = vrot.slane %v2750, %v2796
    %v2799 = vunpack.c.l.s4 1966171168
    %v2800 = vunpack.c.0.s8 %v2799
    %v2801 = vlaneseq
    %v2802 = vshrl.u32 %v2801, 7
    %v2803 = vsub.s32 %v2800, %v2802
    %v2804 = vrot.slane %v2790, %v2803
    %v2805 = vcombine.high %v2797, %v2797
    %v2806 = vcombine.high %v2804, %v2804
    %v2808 = vunpack.c.l.s4 1966171168
    %v2809 = vunpack.c.0.s8 %v2808
    %v2810 = vlaneseq
    %v2811 = vshrl.u32 %v2810, 7
    %v2812 = vsub.s32 %v2809, %v2811
    %v2813 = vrot.slane %v2797, %v2812
    %v2815 = vunpack.c.l.s4 1966171168
    %v2816 = vunpack.c.0.s8 %v2815
    %v2817 = vlaneseq
    %v2818 = vshrl.u32 %v2817, 7
    %v2819 = vsub.s32 %v2816, %v2818
    %v2820 = vrot.slane %v2804, %v2819
    %v2822 = vunpack.c.l.s4 1966171168
    %v2823 = vunpack.c.0.s8 %v2822
    %v2824 = vlaneseq
    %v2825 = vshrl.u32 %v2824, 7
    %v2826 = vsub.s32 %v2823, %v2825
    %v2827 = vrot.slane %v2805, %v2826
    %v2829 = vunpack.c.l.s4 1966171168
    %v2830 = vunpack.c.0.s8 %v2829
    %v2831 = vlaneseq
    %v2832 = vshrl.u32 %v2831, 7
    %v2833 = vsub.s32 %v2830, %v2832
    %v2834 = vrot.slane %v2806, %v2833
    %v2835 = vcombine.high %v2813, %v2813
    %v2836 = vcombine.high %v2820, %v2820
    %v2837 = vcombine.high %v2827, %v2827
    %v2838 = vcombine.high %v2834, %v2834
    %v2839 = vcombine.high %v2755, %v2755
    %v2841 = vunpack.c.l.s4 1966171168
    %v2842 = vunpack.c.0.s8 %v2841
    %v2843 = vlaneseq
    %v2844 = vshrl.u32 %v2843, 7
    %v2845 = vsub.s32 %v2842, %v2844
    %v2846 = vrot.slane %v2755, %v2845
    %v2848 = vunpack.c.l.s4 1966171168
    %v2849 = vunpack.c.0.s8 %v2848
    %v2850 = vlaneseq
    %v2851 = vshrl.u32 %v2850, 7
    %v2852 = vsub.s32 %v2849, %v2851
    %v2853 = vrot.slane %v2839, %v2852
    %v2854 = vcombine.high %v2846, %v2846
    %v2855 = vcombine.high %v2853, %v2853
    %v2857 = vunpack.c.l.s4 1966171168
    %v2858 = vunpack.c.0.s8 %v2857
    %v2859 = vlaneseq
    %v2860 = vshrl.u32 %v2859, 7
    %v2861 = vsub.s32 %v2858, %v2860
    %v2862 = vrot.slane %v2846, %v2861
    %v2864 = vunpack.c.l.s4 1966171168
    %v2865 = vunpack.c.0.s8 %v2864
    %v2866 = vlaneseq
    %v2867 = vshrl.u32 %v2866, 7
    %v2868 = vsub.s32 %v2865, %v2867
    %v2869 = vrot.slane %v2853, %v2868
    %v2871 = vunpack.c.l.s4 1966171168
    %v2872 = vunpack.c.0.s8 %v2871
    %v2873 = vlaneseq
    %v2874 = vshrl.u32 %v2873, 7
    %v2875 = vsub.s32 %v2872, %v2874
    %v2876 = vrot.slane %v2854, %v2875
    %v2878 = vunpack.c.l.s4 1966171168
    %v2879 = vunpack.c.0.s8 %v2878
    %v2880 = vlaneseq
    %v2881 = vshrl.u32 %v2880, 7
    %v2882 = vsub.s32 %v2879, %v2881
    %v2883 = vrot.slane %v2855, %v2882
    %v2884 = vcombine.high %v2862, %v2862
    %v2885 = vcombine.high %v2869, %v2869
    %v2886 = vcombine.high %v2876, %v2876
    %v2887 = vcombine.high %v2883, %v2883
    %v2888 = vcombine.high %v2760, %v2760
    %v2890 = vunpack.c.l.s4 1966171168
    %v2891 = vunpack.c.0.s8 %v2890
    %v2892 = vlaneseq
    %v2893 = vshrl.u32 %v2892, 7
    %v2894 = vsub.s32 %v2891, %v2893
    %v2895 = vrot.slane %v2760, %v2894
    %v2897 = vunpack.c.l.s4 1966171168
    %v2898 = vunpack.c.0.s8 %v2897
    %v2899 = vlaneseq
    %v2900 = vshrl.u32 %v2899, 7
    %v2901 = vsub.s32 %v2898, %v2900
    %v2902 = vrot.slane %v2888, %v2901
    %v2903 = vcombine.high %v2895, %v2895
    %v2904 = vcombine.high %v2902, %v2902
    %v2906 = vunpack.c.l.s4 1966171168
    %v2907 = vunpack.c.0.s8 %v2906
    %v2908 = vlaneseq
    %v2909 = vshrl.u32 %v2908, 7
    %v2910 = vsub.s32 %v2907, %v2909
    %v2911 = vrot.slane %v2895, %v2910
    %v2913 = vunpack.c.l.s4 1966171168
    %v2914 = vunpack.c.0.s8 %v2913
    %v2915 = vlaneseq
    %v2916 = vshrl.u32 %v2915, 7
    %v2917 = vsub.s32 %v2914, %v2916
    %v2918 = vrot.slane %v2902, %v2917
    %v2920 = vunpack.c.l.s4 1966171168
    %v2921 = vunpack.c.0.s8 %v2920
    %v2922 = vlaneseq
    %v2923 = vshrl.u32 %v2922, 7
    %v2924 = vsub.s32 %v2921, %v2923
    %v2925 = vrot.slane %v2903, %v2924
    %v2927 = vunpack.c.l.s4 1966171168
    %v2928 = vunpack.c.0.s8 %v2927
    %v2929 = vlaneseq
    %v2930 = vshrl.u32 %v2929, 7
    %v2931 = vsub.s32 %v2928, %v2930
    %v2932 = vrot.slane %v2904, %v2931
    %v2933 = vcombine.high %v2911, %v2911
    %v2934 = vcombine.high %v2918, %v2918
    %v2935 = vcombine.high %v2925, %v2925
    %v2936 = vcombine.high %v2932, %v2932
    %v2937 = vcombine.high %v2765, %v2765
    %v2939 = vunpack.c.l.s4 1966171168
    %v2940 = vunpack.c.0.s8 %v2939
    %v2941 = vlaneseq
    %v2942 = vshrl.u32 %v2941, 7
    %v2943 = vsub.s32 %v2940, %v2942
    %v2944 = vrot.slane %v2765, %v2943
    %v2946 = vunpack.c.l.s4 1966171168
    %v2947 = vunpack.c.0.s8 %v2946
    %v2948 = vlaneseq
    %v2949 = vshrl.u32 %v2948, 7
    %v2950 = vsub.s32 %v2947, %v2949
    %v2951 = vrot.slane %v2937, %v2950
    %v2952 = vcombine.high %v2944, %v2944
    %v2953 = vcombine.high %v2951, %v2951
    %v2955 = vunpack.c.l.s4 1966171168
    %v2956 = vunpack.c.0.s8 %v2955
    %v2957 = vlaneseq
    %v2958 = vshrl.u32 %v2957, 7
    %v2959 = vsub.s32 %v2956, %v2958
    %v2960 = vrot.slane %v2944, %v2959
    %v2962 = vunpack.c.l.s4 1966171168
    %v2963 = vunpack.c.0.s8 %v2962
    %v2964 = vlaneseq
    %v2965 = vshrl.u32 %v2964, 7
    %v2966 = vsub.s32 %v2963, %v2965
    %v2967 = vrot.slane %v2951, %v2966
    %v2969 = vunpack.c.l.s4 1966171168
    %v2970 = vunpack.c.0.s8 %v2969
    %v2971 = vlaneseq
    %v2972 = vshrl.u32 %v2971, 7
    %v2973 = vsub.s32 %v2970, %v2972
    %v2974 = vrot.slane %v2952, %v2973
    %v2976 = vunpack.c.l.s4 1966171168
    %v2977 = vunpack.c.0.s8 %v2976
    %v2978 = vlaneseq
    %v2979 = vshrl.u32 %v2978, 7
    %v2980 = vsub.s32 %v2977, %v2979
    %v2981 = vrot.slane %v2953, %v2980
    %v2982 = vcombine.high %v2960, %v2960
    %v2983 = vcombine.high %v2967, %v2967
    %v2984 = vcombine.high %v2974, %v2974
    %v2985 = vcombine.high %v2981, %v2981
    %v2986 = vcombine.high %v2770, %v2770
    %v2988 = vunpack.c.l.s4 1966171168
    %v2989 = vunpack.c.0.s8 %v2988
    %v2990 = vlaneseq
    %v2991 = vshrl.u32 %v2990, 7
    %v2992 = vsub.s32 %v2989, %v2991
    %v2993 = vrot.slane %v2770, %v2992
    %v2995 = vunpack.c.l.s4 1966171168
    %v2996 = vunpack.c.0.s8 %v2995
    %v2997 = vlaneseq
    %v2998 = vshrl.u32 %v2997, 7
    %v2999 = vsub.s32 %v2996, %v2998
    %v3000 = vrot.slane %v2986, %v2999
    %v3001 = vcombine.high %v2993, %v2993
    %v3002 = vcombine.high %v3000, %v3000
    %v3004 = vunpack.c.l.s4 1966171168
    %v3005 = vunpack.c.0.s8 %v3004
    %v3006 = vlaneseq
    %v3007 = vshrl.u32 %v3006, 7
    %v3008 = vsub.s32 %v3005, %v3007
    %v3009 = vrot.slane %v2993, %v3008
    %v3011 = vunpack.c.l.s4 1966171168
    %v3012 = vunpack.c.0.s8 %v3011
    %v3013 = vlaneseq
    %v3014 = vshrl.u32 %v3013, 7
    %v3015 = vsub.s32 %v3012, %v3014
    %v3016 = vrot.slane %v3000, %v3015
    %v3018 = vunpack.c.l.s4 1966171168
    %v3019 = vunpack.c.0.s8 %v3018
    %v3020 = vlaneseq
    %v3021 = vshrl.u32 %v3020, 7
    %v3022 = vsub.s32 %v3019, %v3021
    %v3023 = vrot.slane %v3001, %v3022
    %v3025 = vunpack.c.l.s4 1966171168
    %v3026 = vunpack.c.0.s8 %v3025
    %v3027 = vlaneseq
    %v3028 = vshrl.u32 %v3027, 7
    %v3029 = vsub.s32 %v3026, %v3028
    %v3030 = vrot.slane %v3002, %v3029
    %v3031 = vcombine.high %v3009, %v3009
    %v3032 = vcombine.high %v3016, %v3016
    %v3033 = vcombine.high %v3023, %v3023
    %v3034 = vcombine.high %v3030, %v3030
    %v3035 = vcombine.high %v2775, %v2775
    %v3037 = vunpack.c.l.s4 1966171168
    %v3038 = vunpack.c.0.s8 %v3037
    %v3039 = vlaneseq
    %v3040 = vshrl.u32 %v3039, 7
    %v3041 = vsub.s32 %v3038, %v3040
    %v3042 = vrot.slane %v2775, %v3041
    %v3044 = vunpack.c.l.s4 1966171168
    %v3045 = vunpack.c.0.s8 %v3044
    %v3046 = vlaneseq
    %v3047 = vshrl.u32 %v3046, 7
    %v3048 = vsub.s32 %v3045, %v3047
    %v3049 = vrot.slane %v3035, %v3048
    %v3050 = vcombine.high %v3042, %v3042
    %v3051 = vcombine.high %v3049, %v3049
    %v3053 = vunpack.c.l.s4 1966171168
    %v3054 = vunpack.c.0.s8 %v3053
    %v3055 = vlaneseq
    %v3056 = vshrl.u32 %v3055, 7
    %v3057 = vsub.s32 %v3054, %v3056
    %v3058 = vrot.slane %v3042, %v3057
    %v3060 = vunpack.c.l.s4 1966171168
    %v3061 = vunpack.c.0.s8 %v3060
    %v3062 = vlaneseq
    %v3063 = vshrl.u32 %v3062, 7
    %v3064 = vsub.s32 %v3061, %v3063
    %v3065 = vrot.slane %v3049, %v3064
    %v3067 = vunpack.c.l.s4 1966171168
    %v3068 = vunpack.c.0.s8 %v3067
    %v3069 = vlaneseq
    %v3070 = vshrl.u32 %v3069, 7
    %v3071 = vsub.s32 %v3068, %v3070
    %v3072 = vrot.slane %v3050, %v3071
    %v3074 = vunpack.c.l.s4 1966171168
    %v3075 = vunpack.c.0.s8 %v3074
    %v3076 = vlaneseq
    %v3077 = vshrl.u32 %v3076, 7
    %v3078 = vsub.s32 %v3075, %v3077
    %v3079 = vrot.slane %v3051, %v3078
    %v3080 = vcombine.high %v3058, %v3058
    %v3081 = vcombine.high %v3065, %v3065
    %v3082 = vcombine.high %v3072, %v3072
    %v3083 = vcombine.high %v3079, %v3079
    %v3084 = vcombine.high %v2780, %v2780
    %v3086 = vunpack.c.l.s4 1966171168
    %v3087 = vunpack.c.0.s8 %v3086
    %v3088 = vlaneseq
    %v3089 = vshrl.u32 %v3088, 7
    %v3090 = vsub.s32 %v3087, %v3089
    %v3091 = vrot.slane %v2780, %v3090
    %v3093 = vunpack.c.l.s4 1966171168
    %v3094 = vunpack.c.0.s8 %v3093
    %v3095 = vlaneseq
    %v3096 = vshrl.u32 %v3095, 7
    %v3097 = vsub.s32 %v3094, %v3096
    %v3098 = vrot.slane %v3084, %v3097
    %v3099 = vcombine.high %v3091, %v3091
    %v3100 = vcombine.high %v3098, %v3098
    %v3102 = vunpack.c.l.s4 1966171168
    %v3103 = vunpack.c.0.s8 %v3102
    %v3104 = vlaneseq
    %v3105 = vshrl.u32 %v3104, 7
    %v3106 = vsub.s32 %v3103, %v3105
    %v3107 = vrot.slane %v3091, %v3106
    %v3109 = vunpack.c.l.s4 1966171168
    %v3110 = vunpack.c.0.s8 %v3109
    %v3111 = vlaneseq
    %v3112 = vshrl.u32 %v3111, 7
    %v3113 = vsub.s32 %v3110, %v3112
    %v3114 = vrot.slane %v3098, %v3113
    %v3116 = vunpack.c.l.s4 1966171168
    %v3117 = vunpack.c.0.s8 %v3116
    %v3118 = vlaneseq
    %v3119 = vshrl.u32 %v3118, 7
    %v3120 = vsub.s32 %v3117, %v3119
    %v3121 = vrot.slane %v3099, %v3120
    %v3123 = vunpack.c.l.s4 1966171168
    %v3124 = vunpack.c.0.s8 %v3123
    %v3125 = vlaneseq
    %v3126 = vshrl.u32 %v3125, 7
    %v3127 = vsub.s32 %v3124, %v3126
    %v3128 = vrot.slane %v3100, %v3127
    %v3129 = vcombine.high %v3107, %v3107
    %v3130 = vcombine.high %v3114, %v3114
    %v3131 = vcombine.high %v3121, %v3121
    %v3132 = vcombine.high %v3128, %v3128
    %v3189 = vmul.f32 %v2813, 0.35355338
    %v3190 = vmul.f32 %v2827, 0.35355338
    %v3191 = vmul.f32 %v2835, 0.35355338
    %v3192 = vmul.f32 %v2837, 0.35355338
    %v3193 = vmul.f32 %v2820, 0.35355338
    %v3194 = vmul.f32 %v2834, 0.35355338
    %v3195 = vmul.f32 %v2836, 0.35355338
    %v3196 = vmul.f32 %v2838, 0.35355338
    %v3197 = vmul.f32 %v2862, 0.35355338
    %v3198 = vmul.f32 %v2876, 0.35355338
    %v3199 = vmul.f32 %v2884, 0.35355338
    %v3200 = vmul.f32 %v2886, 0.35355338
    %v3201 = vmul.f32 %v2869, 0.35355338
    %v3202 = vmul.f32 %v2883, 0.35355338
    %v3203 = vmul.f32 %v2885, 0.35355338
    %v3204 = vmul.f32 %v2887, 0.35355338
    %v3205 = vmul.f32 %v2911, 0.35355338
    %v3206 = vmul.f32 %v2925, 0.35355338
    %v3207 = vmul.f32 %v2933, 0.35355338
    %v3208 = vmul.f32 %v2935, 0.35355338
    %v3209 = vmul.f32 %v2918, 0.35355338
    %v3210 = vmul.f32 %v2932, 0.35355338
    %v3211 = vmul.f32 %v2934, 0.35355338
    %v3212 = vmul.f32 %v2936, 0.35355338
    %v3213 = vmul.f32 %v2960, 0.35355338
    %v3214 = vmul.f32 %v2974, 0.35355338
    %v3215 = vmul.f32 %v2982, 0.35355338
    %v3216 = vmul.f32 %v2984, 0.35355338
    %v3217 = vmul.f32 %v2967, 0.35355338
    %v3218 = vmul.f32 %v2981, 0.35355338
    %v3219 = vmul.f32 %v2983, 0.35355338
    %v3220 = vmul.f32 %v2985, 0.35355338
    %v3221 = vmul.f32 %v3009, 0.35355338
    %v3222 = vmul.f32 %v3023, 0.35355338
    %v3223 = vmul.f32 %v3031, 0.35355338
    %v3224 = vmul.f32 %v3033, 0.35355338
    %v3225 = vmul.f32 %v3016, 0.35355338
    %v3226 = vmul.f32 %v3030, 0.35355338
    %v3227 = vmul.f32 %v3032, 0.35355338
    %v3228 = vmul.f32 %v3034, 0.35355338
    %v3229 = vmul.f32 %v3058, 0.35355338
    %v3230 = vmul.f32 %v3072, 0.35355338
    %v3231 = vmul.f32 %v3080, 0.35355338
    %v3232 = vmul.f32 %v3082, 0.35355338
    %v3233 = vmul.f32 %v3065, 0.35355338
    %v3234 = vmul.f32 %v3079, 0.35355338
    %v3235 = vmul.f32 %v3081, 0.35355338
    %v3236 = vmul.f32 %v3083, 0.35355338
    %v3237 = vmul.f32 %v3107, 0.35355338
    %v3238 = vmul.f32 %v3121, 0.35355338
    %v3239 = vmul.f32 %v3129, 0.35355338
    %v3240 = vmul.f32 %v3131, 0.35355338
    %v3241 = vmul.f32 %v3114, 0.35355338
    %v3242 = vmul.f32 %v3128, 0.35355338
    %v3243 = vmul.f32 %v3130, 0.35355338
    %v3244 = vmul.f32 %v3132, 0.35355338
    %v3301 = vcombine.low %v3189, %v3190
    %v3302 = vcombine.low %v3191, %v3192
    %v3303 = vcombine.low %v3193, %v3194
    %v3305 = vunpack.c.l.s4 1966171168
    %v3306 = vunpack.c.0.s8 %v3305
    %v3307 = vlaneseq
    %v3308 = vshrl.u32 %v3307, 7
    %v3309 = vsub.s32 %v3306, %v3308
    %v3310 = vrot.slane %v3301, %v3309
    %v3312 = vunpack.c.l.s4 1966171168
    %v3313 = vunpack.c.0.s8 %v3312
    %v3314 = vlaneseq
    %v3315 = vshrl.u32 %v3314, 7
    %v3316 = vsub.s32 %v3313, %v3315
    %v3317 = vrot.slane %v3302, %v3316
    %v3319 = vunpack.c.l.s4 1966171168
    %v3320 = vunpack.c.0.s8 %v3319
    %v3321 = vlaneseq
    %v3322 = vshrl.u32 %v3321, 7
    %v3323 = vsub.s32 %v3320, %v3322
    %v3324 = vrot.slane %v3303, %v3323
    %v3326 = vunpack.c.l.s4 1966171168
    %v3327 = vunpack.c.0.s8 %v3326
    %v3328 = vlaneseq
    %v3329 = vshrl.u32 %v3328, 7
    %v3330 = vsub.s32 %v3327, %v3329
    %v3331 = vrot.slane %v3195, %v3330
    %v3332 = vcombine.low %v3310, %v3317
    %v3333 = vcombine.low %v3324, %v3331
    %v3335 = vunpack.c.l.s4 1966171168
    %v3336 = vunpack.c.0.s8 %v3335
    %v3337 = vlaneseq
    %v3338 = vshrl.u32 %v3337, 7
    %v3339 = vsub.s32 %v3336, %v3338
    %v3340 = vrot.slane %v3332, %v3339
    %v3342 = vunpack.c.l.s4 1966171168
    %v3343 = vunpack.c.0.s8 %v3342
    %v3344 = vlaneseq
    %v3345 = vshrl.u32 %v3344, 7
    %v3346 = vsub.s32 %v3343, %v3345
    %v3347 = vrot.slane %v3333, %v3346
    %v3348 = vcombine.low %v3340, %v3347
    %v3349 = vcombine.low %v3196, %v3197
    %v3350 = vcombine.low %v3198, %v3199
    %v3351 = vcombine.low %v3200, %v3201
    %v3353 = vunpack.c.l.s4 1966171168
    %v3354 = vunpack.c.0.s8 %v3353
    %v3355 = vlaneseq
    %v3356 = vshrl.u32 %v3355, 7
    %v3357 = vsub.s32 %v3354, %v3356
    %v3358 = vrot.slane %v3349, %v3357
    %v3360 = vunpack.c.l.s4 1966171168
    %v3361 = vunpack.c.0.s8 %v3360
    %v3362 = vlaneseq
    %v3363 = vshrl.u32 %v3362, 7
    %v3364 = vsub.s32 %v3361, %v3363
    %v3365 = vrot.slane %v3350, %v3364
    %v3367 = vunpack.c.l.s4 1966171168
    %v3368 = vunpack.c.0.s8 %v3367
    %v3369 = vlaneseq
    %v3370 = vshrl.u32 %v3369, 7
    %v3371 = vsub.s32 %v3368, %v3370
    %v3372 = vrot.slane %v3351, %v3371
    %v3374 = vunpack.c.l.s4 1966171168
    %v3375 = vunpack.c.0.s8 %v3374
    %v3376 = vlaneseq
    %v3377 = vshrl.u32 %v3376, 7
    %v3378 = vsub.s32 %v3375, %v3377
    %v3379 = vrot.slane %v3202, %v3378
    %v3380 = vcombine.low %v3358, %v3365
    %v3381 = vcombine.low %v3372, %v3379
    %v3383 = vunpack.c.l.s4 1966171168
    %v3384 = vunpack.c.0.s8 %v3383
    %v3385 = vlaneseq
    %v3386 = vshrl.u32 %v3385, 7
    %v3387 = vsub.s32 %v3384, %v3386
    %v3388 = vrot.slane %v3380, %v3387
    %v3390 = vunpack.c.l.s4 1966171168
    %v3391 = vunpack.c.0.s8 %v3390
    %v3392 = vlaneseq
    %v3393 = vshrl.u32 %v3392, 7
    %v3394 = vsub.s32 %v3391, %v3393
    %v3395 = vrot.slane %v3381, %v3394
    %v3396 = vcombine.low %v3388, %v3395
    %v3397 = vcombine.low %v3203, %v3204
    %v3398 = vcombine.low %v3205, %v3206
    %v3399 = vcombine.low %v3207, %v3208
    %v3401 = vunpack.c.l.s4 1966171168
    %v3402 = vunpack.c.0.s8 %v3401
    %v3403 = vlaneseq
    %v3404 = vshrl.u32 %v3403, 7
    %v3405 = vsub.s32 %v3402, %v3404
    %v3406 = vrot.slane %v3397, %v3405
    %v3408 = vunpack.c.l.s4 1966171168
    %v3409 = vunpack.c.0.s8 %v3408
    %v3410 = vlaneseq
    %v3411 = vshrl.u32 %v3410, 7
    %v3412 = vsub.s32 %v3409, %v3411
    %v3413 = vrot.slane %v3398, %v3412
    %v3415 = vunpack.c.l.s4 1966171168
    %v3416 = vunpack.c.0.s8 %v3415
    %v3417 = vlaneseq
    %v3418 = vshrl.u32 %v3417, 7
    %v3419 = vsub.s32 %v3416, %v3418
    %v3420 = vrot.slane %v3399, %v3419
    %v3422 = vunpack.c.l.s4 1966171168
    %v3423 = vunpack.c.0.s8 %v3422
    %v3424 = vlaneseq
    %v3425 = vshrl.u32 %v3424, 7
    %v3426 = vsub.s32 %v3423, %v3425
    %v3427 = vrot.slane %v3209, %v3426
    %v3428 = vcombine.low %v3406, %v3413
    %v3429 = vcombine.low %v3420, %v3427
    %v3431 = vunpack.c.l.s4 1966171168
    %v3432 = vunpack.c.0.s8 %v3431
    %v3433 = vlaneseq
    %v3434 = vshrl.u32 %v3433, 7
    %v3435 = vsub.s32 %v3432, %v3434
    %v3436 = vrot.slane %v3428, %v3435
    %v3438 = vunpack.c.l.s4 1966171168
    %v3439 = vunpack.c.0.s8 %v3438
    %v3440 = vlaneseq
    %v3441 = vshrl.u32 %v3440, 7
    %v3442 = vsub.s32 %v3439, %v3441
    %v3443 = vrot.slane %v3429, %v3442
    %v3444 = vcombine.low %v3436, %v3443
    %v3445 = vcombine.low %v3210, %v3211
    %v3446 = vcombine.low %v3212, %v3213
    %v3447 = vcombine.low %v3214, %v3215
    %v3449 = vunpack.c.l.s4 1966171168
    %v3450 = vunpack.c.0.s8 %v3449
    %v3451 = vlaneseq
    %v3452 = vshrl.u32 %v3451, 7
    %v3453 = vsub.s32 %v3450, %v3452
    %v3454 = vrot.slane %v3445, %v3453
    %v3456 = vunpack.c.l.s4 1966171168
    %v3457 = vunpack.c.0.s8 %v3456
    %v3458 = vlaneseq
    %v3459 = vshrl.u32 %v3458, 7
    %v3460 = vsub.s32 %v3457, %v3459
    %v3461 = vrot.slane %v3446, %v3460
    %v3463 = vunpack.c.l.s4 1966171168
    %v3464 = vunpack.c.0.s8 %v3463
    %v3465 = vlaneseq
    %v3466 = vshrl.u32 %v3465, 7
    %v3467 = vsub.s32 %v3464, %v3466
    %v3468 = vrot.slane %v3447, %v3467
    %v3470 = vunpack.c.l.s4 1966171168
    %v3471 = vunpack.c.0.s8 %v3470
    %v3472 = vlaneseq
    %v3473 = vshrl.u32 %v3472, 7
    %v3474 = vsub.s32 %v3471, %v3473
    %v3475 = vrot.slane %v3216, %v3474
    %v3476 = vcombine.low %v3454, %v3461
    %v3477 = vcombine.low %v3468, %v3475
    %v3479 = vunpack.c.l.s4 1966171168
    %v3480 = vunpack.c.0.s8 %v3479
    %v3481 = vlaneseq
    %v3482 = vshrl.u32 %v3481, 7
    %v3483 = vsub.s32 %v3480, %v3482
    %v3484 = vrot.slane %v3476, %v3483
    %v3486 = vunpack.c.l.s4 1966171168
    %v3487 = vunpack.c.0.s8 %v3486
    %v3488 = vlaneseq
    %v3489 = vshrl.u32 %v3488, 7
    %v3490 = vsub.s32 %v3487, %v3489
    %v3491 = vrot.slane %v3477, %v3490
    %v3492 = vcombine.low %v3484, %v3491
    %v3493 = vcombine.low %v3217, %v3218
    %v3494 = vcombine.low %v3219, %v3220
    %v3495 = vcombine.low %v3221, %v3222
    %v3497 = vunpack.c.l.s4 1966171168
    %v3498 = vunpack.c.0.s8 %v3497
    %v3499 = vlaneseq
    %v3500 = vshrl.u32 %v3499, 7
    %v3501 = vsub.s32 %v3498, %v3500
    %v3502 = vrot.slane %v3493, %v3501
    %v3504 = vunpack.c.l.s4 1966171168
    %v3505 = vunpack.c.0.s8 %v3504
    %v3506 = vlaneseq
    %v3507 = vshrl.u32 %v3506, 7
    %v3508 = vsub.s32 %v3505, %v3507
    %v3509 = vrot.slane %v3494, %v3508
    %v3511 = vunpack.c.l.s4 1966171168
    %v3512 = vunpack.c.0.s8 %v3511
    %v3513 = vlaneseq
    %v3514 = vshrl.u32 %v3513, 7
    %v3515 = vsub.s32 %v3512, %v3514
    %v3516 = vrot.slane %v3495, %v3515
    %v3518 = vunpack.c.l.s4 1966171168
    %v3519 = vunpack.c.0.s8 %v3518
    %v3520 = vlaneseq
    %v3521 = vshrl.u32 %v3520, 7
    %v3522 = vsub.s32 %v3519, %v3521
    %v3523 = vrot.slane %v3223, %v3522
    %v3524 = vcombine.low %v3502, %v3509
    %v3525 = vcombine.low %v3516, %v3523
    %v3527 = vunpack.c.l.s4 1966171168
    %v3528 = vunpack.c.0.s8 %v3527
    %v3529 = vlaneseq
    %v3530 = vshrl.u32 %v3529, 7
    %v3531 = vsub.s32 %v3528, %v3530
    %v3532 = vrot.slane %v3524, %v3531
    %v3534 = vunpack.c.l.s4 1966171168
    %v3535 = vunpack.c.0.s8 %v3534
    %v3536 = vlaneseq
    %v3537 = vshrl.u32 %v3536, 7
    %v3538 = vsub.s32 %v3535, %v3537
    %v3539 = vrot.slane %v3525, %v3538
    %v3540 = vcombine.low %v3532, %v3539
    %v3541 = vcombine.low %v3224, %v3225
    %v3542 = vcombine.low %v3226, %v3227
    %v3543 = vcombine.low %v3228, %v3229
    %v3545 = vunpack.c.l.s4 1966171168
    %v3546 = vunpack.c.0.s8 %v3545
    %v3547 = vlaneseq
    %v3548 = vshrl.u32 %v3547, 7
    %v3549 = vsub.s32 %v3546, %v3548
    %v3550 = vrot.slane %v3541, %v3549
    %v3552 = vunpack.c.l.s4 1966171168
    %v3553 = vunpack.c.0.s8 %v3552
    %v3554 = vlaneseq
    %v3555 = vshrl.u32 %v3554, 7
    %v3556 = vsub.s32 %v3553, %v3555
    %v3557 = vrot.slane %v3542, %v3556
    %v3559 = vunpack.c.l.s4 1966171168
    %v3560 = vunpack.c.0.s8 %v3559
    %v3561 = vlaneseq
    %v3562 = vshrl.u32 %v3561, 7
    %v3563 = vsub.s32 %v3560, %v3562
    %v3564 = vrot.slane %v3543, %v3563
    %v3566 = vunpack.c.l.s4 1966171168
    %v3567 = vunpack.c.0.s8 %v3566
    %v3568 = vlaneseq
    %v3569 = vshrl.u32 %v3568, 7
    %v3570 = vsub.s32 %v3567, %v3569
    %v3571 = vrot.slane %v3230, %v3570
    %v3572 = vcombine.low %v3550, %v3557
    %v3573 = vcombine.low %v3564, %v3571
    %v3575 = vunpack.c.l.s4 1966171168
    %v3576 = vunpack.c.0.s8 %v3575
    %v3577 = vlaneseq
    %v3578 = vshrl.u32 %v3577, 7
    %v3579 = vsub.s32 %v3576, %v3578
    %v3580 = vrot.slane %v3572, %v3579
    %v3582 = vunpack.c.l.s4 1966171168
    %v3583 = vunpack.c.0.s8 %v3582
    %v3584 = vlaneseq
    %v3585 = vshrl.u32 %v3584, 7
    %v3586 = vsub.s32 %v3583, %v3585
    %v3587 = vrot.slane %v3573, %v3586
    %v3588 = vcombine.low %v3580, %v3587
    %v3589 = vcombine.low %v3231, %v3232
    %v3590 = vcombine.low %v3233, %v3234
    %v3591 = vcombine.low %v3235, %v3236
    %v3593 = vunpack.c.l.s4 1966171168
    %v3594 = vunpack.c.0.s8 %v3593
    %v3595 = vlaneseq
    %v3596 = vshrl.u32 %v3595, 7
    %v3597 = vsub.s32 %v3594, %v3596
    %v3598 = vrot.slane %v3589, %v3597
    %v3600 = vunpack.c.l.s4 1966171168
    %v3601 = vunpack.c.0.s8 %v3600
    %v3602 = vlaneseq
    %v3603 = vshrl.u32 %v3602, 7
    %v3604 = vsub.s32 %v3601, %v3603
    %v3605 = vrot.slane %v3590, %v3604
    %v3607 = vunpack.c.l.s4 1966171168
    %v3608 = vunpack.c.0.s8 %v3607
    %v3609 = vlaneseq
    %v3610 = vshrl.u32 %v3609, 7
    %v3611 = vsub.s32 %v3608, %v3610
    %v3612 = vrot.slane %v3591, %v3611
    %v3614 = vunpack.c.l.s4 1966171168
    %v3615 = vunpack.c.0.s8 %v3614
    %v3616 = vlaneseq
    %v3617 = vshrl.u32 %v3616, 7
    %v3618 = vsub.s32 %v3615, %v3617
    %v3619 = vrot.slane %v3237, %v3618
    %v3620 = vcombine.low %v3598, %v3605
    %v3621 = vcombine.low %v3612, %v3619
    %v3623 = vunpack.c.l.s4 1966171168
    %v3624 = vunpack.c.0.s8 %v3623
    %v3625 = vlaneseq
    %v3626 = vshrl.u32 %v3625, 7
    %v3627 = vsub.s32 %v3624, %v3626
    %v3628 = vrot.slane %v3620, %v3627
    %v3630 = vunpack.c.l.s4 1966171168
    %v3631 = vunpack.c.0.s8 %v3630
    %v3632 = vlaneseq
    %v3633 = vshrl.u32 %v3632, 7
    %v3634 = vsub.s32 %v3631, %v3633
    %v3635 = vrot.slane %v3621, %v3634
    %v3636 = vcombine.low %v3628, %v3635
    %v3637 = vcombine.low %v3238, %v3239
    %v3638 = vcombine.low %v3240, %v3241
    %v3639 = vcombine.low %v3242, %v3243
    %v3641 = vunpack.c.l.s4 1966171168
    %v3642 = vunpack.c.0.s8 %v3641
    %v3643 = vlaneseq
    %v3644 = vshrl.u32 %v3643, 7
    %v3645 = vsub.s32 %v3642, %v3644
    %v3646 = vrot.slane %v3637, %v3645
    %v3648 = vunpack.c.l.s4 1966171168
    %v3649 = vunpack.c.0.s8 %v3648
    %v3650 = vlaneseq
    %v3651 = vshrl.u32 %v3650, 7
    %v3652 = vsub.s32 %v3649, %v3651
    %v3653 = vrot.slane %v3638, %v3652
    %v3655 = vunpack.c.l.s4 1966171168
    %v3656 = vunpack.c.0.s8 %v3655
    %v3657 = vlaneseq
    %v3658 = vshrl.u32 %v3657, 7
    %v3659 = vsub.s32 %v3656, %v3658
    %v3660 = vrot.slane %v3639, %v3659
    %v3662 = vunpack.c.l.s4 1966171168
    %v3663 = vunpack.c.0.s8 %v3662
    %v3664 = vlaneseq
    %v3665 = vshrl.u32 %v3664, 7
    %v3666 = vsub.s32 %v3663, %v3665
    %v3667 = vrot.slane %v3244, %v3666
    %v3668 = vcombine.low %v3646, %v3653
    %v3669 = vcombine.low %v3660, %v3667
    %v3671 = vunpack.c.l.s4 1966171168
    %v3672 = vunpack.c.0.s8 %v3671
    %v3673 = vlaneseq
    %v3674 = vshrl.u32 %v3673, 7
    %v3675 = vsub.s32 %v3672, %v3674
    %v3676 = vrot.slane %v3668, %v3675
    %v3678 = vunpack.c.l.s4 1966171168
    %v3679 = vunpack.c.0.s8 %v3678
    %v3680 = vlaneseq
    %v3681 = vshrl.u32 %v3680, 7
    %v3682 = vsub.s32 %v3679, %v3681
    %v3683 = vrot.slane %v3669, %v3682
    %v3684 = vcombine.low %v3676, %v3683
    %vm3693 = vcmask 30720
    %v3694 = vsel %vm3693, %v3348, -inf
    %v3695 = vrot.slane %v3694, 4
    %v3696 = vmax.f32 %v3694, %v3695
    %v3697 = vrot.slane %v3696, 2
    %v3698 = vmax.f32 %v3696, %v3697
    %v3699 = vrot.slane %v3698, 1
    %v3700 = vmax.f32 %v3698, %v3699
    %v3701 = vsel %vm3693, %v3396, -inf
    %v3702 = vrot.slane %v3701, 4
    %v3703 = vmax.f32 %v3701, %v3702
    %v3704 = vrot.slane %v3703, 2
    %v3705 = vmax.f32 %v3703, %v3704
    %v3706 = vrot.slane %v3705, 1
    %v3707 = vmax.f32 %v3705, %v3706
    %v3708 = vsel %vm3693, %v3444, -inf
    %v3709 = vrot.slane %v3708, 4
    %v3710 = vmax.f32 %v3708, %v3709
    %v3711 = vrot.slane %v3710, 2
    %v3712 = vmax.f32 %v3710, %v3711
    %v3713 = vrot.slane %v3712, 1
    %v3714 = vmax.f32 %v3712, %v3713
    %v3715 = vsel %vm3693, %v3492, -inf
    %v3716 = vrot.slane %v3715, 4
    %v3717 = vmax.f32 %v3715, %v3716
    %v3718 = vrot.slane %v3717, 2
    %v3719 = vmax.f32 %v3717, %v3718
    %v3720 = vrot.slane %v3719, 1
    %v3721 = vmax.f32 %v3719, %v3720
    %v3722 = vsel %vm3693, %v3540, -inf
    %v3723 = vrot.slane %v3722, 4
    %v3724 = vmax.f32 %v3722, %v3723
    %v3725 = vrot.slane %v3724, 2
    %v3726 = vmax.f32 %v3724, %v3725
    %v3727 = vrot.slane %v3726, 1
    %v3728 = vmax.f32 %v3726, %v3727
    %v3729 = vsel %vm3693, %v3588, -inf
    %v3730 = vrot.slane %v3729, 4
    %v3731 = vmax.f32 %v3729, %v3730
    %v3732 = vrot.slane %v3731, 2
    %v3733 = vmax.f32 %v3731, %v3732
    %v3734 = vrot.slane %v3733, 1
    %v3735 = vmax.f32 %v3733, %v3734
    %v3736 = vsel %vm3693, %v3636, -inf
    %v3737 = vrot.slane %v3736, 4
    %v3738 = vmax.f32 %v3736, %v3737
    %v3739 = vrot.slane %v3738, 2
    %v3740 = vmax.f32 %v3738, %v3739
    %v3741 = vrot.slane %v3740, 1
    %v3742 = vmax.f32 %v3740, %v3741
    %v3743 = vsel %vm3693, %v3684, -inf
    %v3744 = vrot.slane %v3743, 4
    %v3745 = vmax.f32 %v3743, %v3744
    %v3746 = vrot.slane %v3745, 2
    %v3747 = vmax.f32 %v3745, %v3746
    %v3748 = vrot.slane %v3747, 1
    %v3749 = vmax.f32 %v3747, %v3748
    %vm3758 = vcmask 1041409
    %v3759 = vsel %vm3758, %v3707, %v3700
    %vm3760 = vcmask 1042434
    %v3761 = vsel %vm3760, %v3714, %v3759
    %vm3762 = vcmask 1043459
    %v3763 = vsel %vm3762, %v3721, %v3761
    %vm3764 = vcmask 1044484
    %v3765 = vsel %vm3764, %v3728, %v3763
    %vm3766 = vcmask 1045509
    %v3767 = vsel %vm3766, %v3735, %v3765
    %vm3768 = vcmask 1046534
    %v3769 = vsel %vm3768, %v3742, %v3767
    %vm3770 = vcmask 1047559
    %v3771 = vsel %vm3770, %v3749, %v3769
    %v3773 = vmax.f32 %v1414, %v3771
    %v3774 = vsub.f32 %v1414, %v3773
    %v3775 = vmul.f32 %v3774, 1.442695
    %v3776 = vpow.pop %v3775
    %v3778 = vcombine.high %v3773, %v3773
    %v3780 = vunpack.c.l.s4 1966171168
    %v3781 = vunpack.c.0.s8 %v3780
    %v3782 = vlaneseq
    %v3783 = vshrl.u32 %v3782, 7
    %v3784 = vsub.s32 %v3781, %v3783
    %v3785 = vrot.slane %v3773, %v3784
    %v3787 = vunpack.c.l.s4 1966171168
    %v3788 = vunpack.c.0.s8 %v3787
    %v3789 = vlaneseq
    %v3790 = vshrl.u32 %v3789, 7
    %v3791 = vsub.s32 %v3788, %v3790
    %v3792 = vrot.slane %v3778, %v3791
    %v3793 = vcombine.high %v3785, %v3785
    %v3794 = vcombine.high %v3792, %v3792
    %v3796 = vunpack.c.l.s4 1966171168
    %v3797 = vunpack.c.0.s8 %v3796
    %v3798 = vlaneseq
    %v3799 = vshrl.u32 %v3798, 7
    %v3800 = vsub.s32 %v3797, %v3799
    %v3801 = vrot.slane %v3785, %v3800
    %v3803 = vunpack.c.l.s4 1966171168
    %v3804 = vunpack.c.0.s8 %v3803
    %v3805 = vlaneseq
    %v3806 = vshrl.u32 %v3805, 7
    %v3807 = vsub.s32 %v3804, %v3806
    %v3808 = vrot.slane %v3792, %v3807
    %v3810 = vunpack.c.l.s4 1966171168
    %v3811 = vunpack.c.0.s8 %v3810
    %v3812 = vlaneseq
    %v3813 = vshrl.u32 %v3812, 7
    %v3814 = vsub.s32 %v3811, %v3813
    %v3815 = vrot.slane %v3793, %v3814
    %v3817 = vunpack.c.l.s4 1966171168
    %v3818 = vunpack.c.0.s8 %v3817
    %v3819 = vlaneseq
    %v3820 = vshrl.u32 %v3819, 7
    %v3821 = vsub.s32 %v3818, %v3820
    %v3822 = vrot.slane %v3794, %v3821
    %v3823 = vcombine.high %v3801, %v3801
    %v3824 = vcombine.high %v3808, %v3808
    %v3825 = vcombine.high %v3815, %v3815
    %v3826 = vcombine.high %v3822, %v3822
    %v3827 = vlaneseq
    %v3828 = vshrl.u32 %v3827, 7
    %v3829 = vsub.s32 0, %v3828
    %v3830 = vrot.slane %v3801, %v3829
    %v3831 = vlaneseq
    %v3832 = vshrl.u32 %v3831, 7
    %v3833 = vsub.s32 0, %v3832
    %v3834 = vrot.slane %v3815, %v3833
    %v3835 = vlaneseq
    %v3836 = vshrl.u32 %v3835, 7
    %v3837 = vsub.s32 0, %v3836
    %v3838 = vrot.slane %v3823, %v3837
    %v3839 = vlaneseq
    %v3840 = vshrl.u32 %v3839, 7
    %v3841 = vsub.s32 0, %v3840
    %v3842 = vrot.slane %v3825, %v3841
    %v3843 = vlaneseq
    %v3844 = vshrl.u32 %v3843, 7
    %v3845 = vsub.s32 0, %v3844
    %v3846 = vrot.slane %v3808, %v3845
    %v3847 = vlaneseq
    %v3848 = vshrl.u32 %v3847, 7
    %v3849 = vsub.s32 0, %v3848
    %v3850 = vrot.slane %v3822, %v3849
    %v3851 = vlaneseq
    %v3852 = vshrl.u32 %v3851, 7
    %v3853 = vsub.s32 0, %v3852
    %v3854 = vrot.slane %v3824, %v3853
    %v3855 = vlaneseq
    %v3856 = vshrl.u32 %v3855, 7
    %v3857 = vsub.s32 0, %v3856
    %v3858 = vrot.slane %v3826, %v3857
    %v3859 = vcombine.high %v3830, %v3830
    %v3861 = vunpack.c.l.s4 1966171168
    %v3862 = vunpack.c.0.s8 %v3861
    %v3863 = vlaneseq
    %v3864 = vshrl.u32 %v3863, 7
    %v3865 = vsub.s32 %v3862, %v3864
    %v3866 = vrot.slane %v3830, %v3865
    %v3868 = vunpack.c.l.s4 1966171168
    %v3869 = vunpack.c.0.s8 %v3868
    %v3870 = vlaneseq
    %v3871 = vshrl.u32 %v3870, 7
    %v3872 = vsub.s32 %v3869, %v3871
    %v3873 = vrot.slane %v3859, %v3872
    %v3874 = vcombine.high %v3866, %v3866
    %v3875 = vcombine.high %v3873, %v3873
    %v3877 = vunpack.c.l.s4 1966171168
    %v3878 = vunpack.c.0.s8 %v3877
    %v3879 = vlaneseq
    %v3880 = vshrl.u32 %v3879, 7
    %v3881 = vsub.s32 %v3878, %v3880
    %v3882 = vrot.slane %v3866, %v3881
    %v3884 = vunpack.c.l.s4 1966171168
    %v3885 = vunpack.c.0.s8 %v3884
    %v3886 = vlaneseq
    %v3887 = vshrl.u32 %v3886, 7
    %v3888 = vsub.s32 %v3885, %v3887
    %v3889 = vrot.slane %v3873, %v3888
    %v3891 = vunpack.c.l.s4 1966171168
    %v3892 = vunpack.c.0.s8 %v3891
    %v3893 = vlaneseq
    %v3894 = vshrl.u32 %v3893, 7
    %v3895 = vsub.s32 %v3892, %v3894
    %v3896 = vrot.slane %v3874, %v3895
    %v3898 = vunpack.c.l.s4 1966171168
    %v3899 = vunpack.c.0.s8 %v3898
    %v3900 = vlaneseq
    %v3901 = vshrl.u32 %v3900, 7
    %v3902 = vsub.s32 %v3899, %v3901
    %v3903 = vrot.slane %v3875, %v3902
    %v3904 = vcombine.high %v3882, %v3882
    %v3905 = vcombine.high %v3889, %v3889
    %v3906 = vcombine.high %v3896, %v3896
    %v3907 = vcombine.high %v3834, %v3834
    %v3909 = vunpack.c.l.s4 1966171168
    %v3910 = vunpack.c.0.s8 %v3909
    %v3911 = vlaneseq
    %v3912 = vshrl.u32 %v3911, 7
    %v3913 = vsub.s32 %v3910, %v3912
    %v3914 = vrot.slane %v3834, %v3913
    %v3916 = vunpack.c.l.s4 1966171168
    %v3917 = vunpack.c.0.s8 %v3916
    %v3918 = vlaneseq
    %v3919 = vshrl.u32 %v3918, 7
    %v3920 = vsub.s32 %v3917, %v3919
    %v3921 = vrot.slane %v3907, %v3920
    %v3922 = vcombine.high %v3914, %v3914
    %v3923 = vcombine.high %v3921, %v3921
    %v3925 = vunpack.c.l.s4 1966171168
    %v3926 = vunpack.c.0.s8 %v3925
    %v3927 = vlaneseq
    %v3928 = vshrl.u32 %v3927, 7
    %v3929 = vsub.s32 %v3926, %v3928
    %v3930 = vrot.slane %v3914, %v3929
    %v3932 = vunpack.c.l.s4 1966171168
    %v3933 = vunpack.c.0.s8 %v3932
    %v3934 = vlaneseq
    %v3935 = vshrl.u32 %v3934, 7
    %v3936 = vsub.s32 %v3933, %v3935
    %v3937 = vrot.slane %v3921, %v3936
    %v3939 = vunpack.c.l.s4 1966171168
    %v3940 = vunpack.c.0.s8 %v3939
    %v3941 = vlaneseq
    %v3942 = vshrl.u32 %v3941, 7
    %v3943 = vsub.s32 %v3940, %v3942
    %v3944 = vrot.slane %v3922, %v3943
    %v3946 = vunpack.c.l.s4 1966171168
    %v3947 = vunpack.c.0.s8 %v3946
    %v3948 = vlaneseq
    %v3949 = vshrl.u32 %v3948, 7
    %v3950 = vsub.s32 %v3947, %v3949
    %v3951 = vrot.slane %v3923, %v3950
    %v3952 = vcombine.high %v3930, %v3930
    %v3953 = vcombine.high %v3937, %v3937
    %v3954 = vcombine.high %v3944, %v3944
    %v3955 = vcombine.high %v3838, %v3838
    %v3957 = vunpack.c.l.s4 1966171168
    %v3958 = vunpack.c.0.s8 %v3957
    %v3959 = vlaneseq
    %v3960 = vshrl.u32 %v3959, 7
    %v3961 = vsub.s32 %v3958, %v3960
    %v3962 = vrot.slane %v3838, %v3961
    %v3964 = vunpack.c.l.s4 1966171168
    %v3965 = vunpack.c.0.s8 %v3964
    %v3966 = vlaneseq
    %v3967 = vshrl.u32 %v3966, 7
    %v3968 = vsub.s32 %v3965, %v3967
    %v3969 = vrot.slane %v3955, %v3968
    %v3970 = vcombine.high %v3962, %v3962
    %v3971 = vcombine.high %v3969, %v3969
    %v3973 = vunpack.c.l.s4 1966171168
    %v3974 = vunpack.c.0.s8 %v3973
    %v3975 = vlaneseq
    %v3976 = vshrl.u32 %v3975, 7
    %v3977 = vsub.s32 %v3974, %v3976
    %v3978 = vrot.slane %v3962, %v3977
    %v3980 = vunpack.c.l.s4 1966171168
    %v3981 = vunpack.c.0.s8 %v3980
    %v3982 = vlaneseq
    %v3983 = vshrl.u32 %v3982, 7
    %v3984 = vsub.s32 %v3981, %v3983
    %v3985 = vrot.slane %v3969, %v3984
    %v3987 = vunpack.c.l.s4 1966171168
    %v3988 = vunpack.c.0.s8 %v3987
    %v3989 = vlaneseq
    %v3990 = vshrl.u32 %v3989, 7
    %v3991 = vsub.s32 %v3988, %v3990
    %v3992 = vrot.slane %v3970, %v3991
    %v3994 = vunpack.c.l.s4 1966171168
    %v3995 = vunpack.c.0.s8 %v3994
    %v3996 = vlaneseq
    %v3997 = vshrl.u32 %v3996, 7
    %v3998 = vsub.s32 %v3995, %v3997
    %v3999 = vrot.slane %v3971, %v3998
    %v4000 = vcombine.high %v3978, %v3978
    %v4001 = vcombine.high %v3985, %v3985
    %v4002 = vcombine.high %v3992, %v3992
    %v4003 = vcombine.high %v3842, %v3842
    %v4005 = vunpack.c.l.s4 1966171168
    %v4006 = vunpack.c.0.s8 %v4005
    %v4007 = vlaneseq
    %v4008 = vshrl.u32 %v4007, 7
    %v4009 = vsub.s32 %v4006, %v4008
    %v4010 = vrot.slane %v3842, %v4009
    %v4012 = vunpack.c.l.s4 1966171168
    %v4013 = vunpack.c.0.s8 %v4012
    %v4014 = vlaneseq
    %v4015 = vshrl.u32 %v4014, 7
    %v4016 = vsub.s32 %v4013, %v4015
    %v4017 = vrot.slane %v4003, %v4016
    %v4018 = vcombine.high %v4010, %v4010
    %v4019 = vcombine.high %v4017, %v4017
    %v4021 = vunpack.c.l.s4 1966171168
    %v4022 = vunpack.c.0.s8 %v4021
    %v4023 = vlaneseq
    %v4024 = vshrl.u32 %v4023, 7
    %v4025 = vsub.s32 %v4022, %v4024
    %v4026 = vrot.slane %v4010, %v4025
    %v4028 = vunpack.c.l.s4 1966171168
    %v4029 = vunpack.c.0.s8 %v4028
    %v4030 = vlaneseq
    %v4031 = vshrl.u32 %v4030, 7
    %v4032 = vsub.s32 %v4029, %v4031
    %v4033 = vrot.slane %v4017, %v4032
    %v4035 = vunpack.c.l.s4 1966171168
    %v4036 = vunpack.c.0.s8 %v4035
    %v4037 = vlaneseq
    %v4038 = vshrl.u32 %v4037, 7
    %v4039 = vsub.s32 %v4036, %v4038
    %v4040 = vrot.slane %v4018, %v4039
    %v4042 = vunpack.c.l.s4 1966171168
    %v4043 = vunpack.c.0.s8 %v4042
    %v4044 = vlaneseq
    %v4045 = vshrl.u32 %v4044, 7
    %v4046 = vsub.s32 %v4043, %v4045
    %v4047 = vrot.slane %v4019, %v4046
    %v4048 = vcombine.high %v4026, %v4026
    %v4049 = vcombine.high %v4033, %v4033
    %v4050 = vcombine.high %v4040, %v4040
    %v4051 = vcombine.high %v3846, %v3846
    %v4053 = vunpack.c.l.s4 1966171168
    %v4054 = vunpack.c.0.s8 %v4053
    %v4055 = vlaneseq
    %v4056 = vshrl.u32 %v4055, 7
    %v4057 = vsub.s32 %v4054, %v4056
    %v4058 = vrot.slane %v3846, %v4057
    %v4060 = vunpack.c.l.s4 1966171168
    %v4061 = vunpack.c.0.s8 %v4060
    %v4062 = vlaneseq
    %v4063 = vshrl.u32 %v4062, 7
    %v4064 = vsub.s32 %v4061, %v4063
    %v4065 = vrot.slane %v4051, %v4064
    %v4066 = vcombine.high %v4058, %v4058
    %v4067 = vcombine.high %v4065, %v4065
    %v4069 = vunpack.c.l.s4 1966171168
    %v4070 = vunpack.c.0.s8 %v4069
    %v4071 = vlaneseq
    %v4072 = vshrl.u32 %v4071, 7
    %v4073 = vsub.s32 %v4070, %v4072
    %v4074 = vrot.slane %v4058, %v4073
    %v4076 = vunpack.c.l.s4 1966171168
    %v4077 = vunpack.c.0.s8 %v4076
    %v4078 = vlaneseq
    %v4079 = vshrl.u32 %v4078, 7
    %v4080 = vsub.s32 %v4077, %v4079
    %v4081 = vrot.slane %v4065, %v4080
    %v4083 = vunpack.c.l.s4 1966171168
    %v4084 = vunpack.c.0.s8 %v4083
    %v4085 = vlaneseq
    %v4086 = vshrl.u32 %v4085, 7
    %v4087 = vsub.s32 %v4084, %v4086
    %v4088 = vrot.slane %v4066, %v4087
    %v4090 = vunpack.c.l.s4 1966171168
    %v4091 = vunpack.c.0.s8 %v4090
    %v4092 = vlaneseq
    %v4093 = vshrl.u32 %v4092, 7
    %v4094 = vsub.s32 %v4091, %v4093
    %v4095 = vrot.slane %v4067, %v4094
    %v4096 = vcombine.high %v4074, %v4074
    %v4097 = vcombine.high %v4081, %v4081
    %v4098 = vcombine.high %v4088, %v4088
    %v4099 = vcombine.high %v3850, %v3850
    %v4101 = vunpack.c.l.s4 1966171168
    %v4102 = vunpack.c.0.s8 %v4101
    %v4103 = vlaneseq
    %v4104 = vshrl.u32 %v4103, 7
    %v4105 = vsub.s32 %v4102, %v4104
    %v4106 = vrot.slane %v3850, %v4105
    %v4108 = vunpack.c.l.s4 1966171168
    %v4109 = vunpack.c.0.s8 %v4108
    %v4110 = vlaneseq
    %v4111 = vshrl.u32 %v4110, 7
    %v4112 = vsub.s32 %v4109, %v4111
    %v4113 = vrot.slane %v4099, %v4112
    %v4114 = vcombine.high %v4106, %v4106
    %v4115 = vcombine.high %v4113, %v4113
    %v4117 = vunpack.c.l.s4 1966171168
    %v4118 = vunpack.c.0.s8 %v4117
    %v4119 = vlaneseq
    %v4120 = vshrl.u32 %v4119, 7
    %v4121 = vsub.s32 %v4118, %v4120
    %v4122 = vrot.slane %v4106, %v4121
    %v4124 = vunpack.c.l.s4 1966171168
    %v4125 = vunpack.c.0.s8 %v4124
    %v4126 = vlaneseq
    %v4127 = vshrl.u32 %v4126, 7
    %v4128 = vsub.s32 %v4125, %v4127
    %v4129 = vrot.slane %v4113, %v4128
    %v4131 = vunpack.c.l.s4 1966171168
    %v4132 = vunpack.c.0.s8 %v4131
    %v4133 = vlaneseq
    %v4134 = vshrl.u32 %v4133, 7
    %v4135 = vsub.s32 %v4132, %v4134
    %v4136 = vrot.slane %v4114, %v4135
    %v4138 = vunpack.c.l.s4 1966171168
    %v4139 = vunpack.c.0.s8 %v4138
    %v4140 = vlaneseq
    %v4141 = vshrl.u32 %v4140, 7
    %v4142 = vsub.s32 %v4139, %v4141
    %v4143 = vrot.slane %v4115, %v4142
    %v4144 = vcombine.high %v4122, %v4122
    %v4145 = vcombine.high %v4129, %v4129
    %v4146 = vcombine.high %v4136, %v4136
    %v4147 = vcombine.high %v3854, %v3854
    %v4149 = vunpack.c.l.s4 1966171168
    %v4150 = vunpack.c.0.s8 %v4149
    %v4151 = vlaneseq
    %v4152 = vshrl.u32 %v4151, 7
    %v4153 = vsub.s32 %v4150, %v4152
    %v4154 = vrot.slane %v3854, %v4153
    %v4156 = vunpack.c.l.s4 1966171168
    %v4157 = vunpack.c.0.s8 %v4156
    %v4158 = vlaneseq
    %v4159 = vshrl.u32 %v4158, 7
    %v4160 = vsub.s32 %v4157, %v4159
    %v4161 = vrot.slane %v4147, %v4160
    %v4162 = vcombine.high %v4154, %v4154
    %v4163 = vcombine.high %v4161, %v4161
    %v4165 = vunpack.c.l.s4 1966171168
    %v4166 = vunpack.c.0.s8 %v4165
    %v4167 = vlaneseq
    %v4168 = vshrl.u32 %v4167, 7
    %v4169 = vsub.s32 %v4166, %v4168
    %v4170 = vrot.slane %v4154, %v4169
    %v4172 = vunpack.c.l.s4 1966171168
    %v4173 = vunpack.c.0.s8 %v4172
    %v4174 = vlaneseq
    %v4175 = vshrl.u32 %v4174, 7
    %v4176 = vsub.s32 %v4173, %v4175
    %v4177 = vrot.slane %v4161, %v4176
    %v4179 = vunpack.c.l.s4 1966171168
    %v4180 = vunpack.c.0.s8 %v4179
    %v4181 = vlaneseq
    %v4182 = vshrl.u32 %v4181, 7
    %v4183 = vsub.s32 %v4180, %v4182
    %v4184 = vrot.slane %v4162, %v4183
    %v4186 = vunpack.c.l.s4 1966171168
    %v4187 = vunpack.c.0.s8 %v4186
    %v4188 = vlaneseq
    %v4189 = vshrl.u32 %v4188, 7
    %v4190 = vsub.s32 %v4187, %v4189
    %v4191 = vrot.slane %v4163, %v4190
    %v4192 = vcombine.high %v4170, %v4170
    %v4193 = vcombine.high %v4177, %v4177
    %v4194 = vcombine.high %v4184, %v4184
    %v4195 = vcombine.high %v3858, %v3858
    %v4197 = vunpack.c.l.s4 1966171168
    %v4198 = vunpack.c.0.s8 %v4197
    %v4199 = vlaneseq
    %v4200 = vshrl.u32 %v4199, 7
    %v4201 = vsub.s32 %v4198, %v4200
    %v4202 = vrot.slane %v3858, %v4201
    %v4204 = vunpack.c.l.s4 1966171168
    %v4205 = vunpack.c.0.s8 %v4204
    %v4206 = vlaneseq
    %v4207 = vshrl.u32 %v4206, 7
    %v4208 = vsub.s32 %v4205, %v4207
    %v4209 = vrot.slane %v4195, %v4208
    %v4210 = vcombine.high %v4202, %v4202
    %v4211 = vcombine.high %v4209, %v4209
    %v4213 = vunpack.c.l.s4 1966171168
    %v4214 = vunpack.c.0.s8 %v4213
    %v4215 = vlaneseq
    %v4216 = vshrl.u32 %v4215, 7
    %v4217 = vsub.s32 %v4214, %v4216
    %v4218 = vrot.slane %v4202, %v4217
    %v4220 = vunpack.c.l.s4 1966171168
    %v4221 = vunpack.c.0.s8 %v4220
    %v4222 = vlaneseq
    %v4223 = vshrl.u32 %v4222, 7
    %v4224 = vsub.s32 %v4221, %v4223
    %v4225 = vrot.slane %v4209, %v4224
    %v4227 = vunpack.c.l.s4 1966171168
    %v4228 = vunpack.c.0.s8 %v4227
    %v4229 = vlaneseq
    %v4230 = vshrl.u32 %v4229, 7
    %v4231 = vsub.s32 %v4228, %v4230
    %v4232 = vrot.slane %v4210, %v4231
    %v4234 = vunpack.c.l.s4 1966171168
    %v4235 = vunpack.c.0.s8 %v4234
    %v4236 = vlaneseq
    %v4237 = vshrl.u32 %v4236, 7
    %v4238 = vsub.s32 %v4235, %v4237
    %v4239 = vrot.slane %v4211, %v4238
    %v4240 = vcombine.high %v4218, %v4218
    %v4241 = vcombine.high %v4225, %v4225
    %v4242 = vcombine.high %v4232, %v4232
    %v4299 = vsub.f32 %v3189, %v3882
    %v4300 = vsub.f32 %v3190, %v3896
    %v4301 = vsub.f32 %v3191, %v3904
    %v4302 = vsub.f32 %v3192, %v3906
    %v4303 = vsub.f32 %v3193, %v3889
    %v4304 = vsub.f32 %v3194, %v3903
    %v4305 = vsub.f32 %v3195, %v3905
    %v4306 = vsub.f32 %v3196, %v3930
    %v4307 = vsub.f32 %v3197, %v3944
    %v4308 = vsub.f32 %v3198, %v3952
    %v4309 = vsub.f32 %v3199, %v3954
    %v4310 = vsub.f32 %v3200, %v3937
    %v4311 = vsub.f32 %v3201, %v3951
    %v4312 = vsub.f32 %v3202, %v3953
    %v4313 = vsub.f32 %v3203, %v3978
    %v4314 = vsub.f32 %v3204, %v3992
    %v4315 = vsub.f32 %v3205, %v4000
    %v4316 = vsub.f32 %v3206, %v4002
    %v4317 = vsub.f32 %v3207, %v3985
    %v4318 = vsub.f32 %v3208, %v3999
    %v4319 = vsub.f32 %v3209, %v4001
    %v4320 = vsub.f32 %v3210, %v4026
    %v4321 = vsub.f32 %v3211, %v4040
    %v4322 = vsub.f32 %v3212, %v4048
    %v4323 = vsub.f32 %v3213, %v4050
    %v4324 = vsub.f32 %v3214, %v4033
    %v4325 = vsub.f32 %v3215, %v4047
    %v4326 = vsub.f32 %v3216, %v4049
    %v4327 = vsub.f32 %v3217, %v4074
    %v4328 = vsub.f32 %v3218, %v4088
    %v4329 = vsub.f32 %v3219, %v4096
    %v4330 = vsub.f32 %v3220, %v4098
    %v4331 = vsub.f32 %v3221, %v4081
    %v4332 = vsub.f32 %v3222, %v4095
    %v4333 = vsub.f32 %v3223, %v4097
    %v4334 = vsub.f32 %v3224, %v4122
    %v4335 = vsub.f32 %v3225, %v4136
    %v4336 = vsub.f32 %v3226, %v4144
    %v4337 = vsub.f32 %v3227, %v4146
    %v4338 = vsub.f32 %v3228, %v4129
    %v4339 = vsub.f32 %v3229, %v4143
    %v4340 = vsub.f32 %v3230, %v4145
    %v4341 = vsub.f32 %v3231, %v4170
    %v4342 = vsub.f32 %v3232, %v4184
    %v4343 = vsub.f32 %v3233, %v4192
    %v4344 = vsub.f32 %v3234, %v4194
    %v4345 = vsub.f32 %v3235, %v4177
    %v4346 = vsub.f32 %v3236, %v4191
    %v4347 = vsub.f32 %v3237, %v4193
    %v4348 = vsub.f32 %v3238, %v4218
    %v4349 = vsub.f32 %v3239, %v4232
    %v4350 = vsub.f32 %v3240, %v4240
    %v4351 = vsub.f32 %v3241, %v4242
    %v4352 = vsub.f32 %v3242, %v4225
    %v4353 = vsub.f32 %v3243, %v4239
    %v4354 = vsub.f32 %v3244, %v4241
    %v4355 = vmul.f32 %v4299, 1.442695
    %v4356 = vpow.pop %v4355
    %v4357 = vmul.f32 %v4300, 1.442695
    %v4358 = vpow.pop %v4357
    %v4359 = vmul.f32 %v4301, 1.442695
    %v4360 = vpow.pop %v4359
    %v4361 = vmul.f32 %v4302, 1.442695
    %v4362 = vpow.pop %v4361
    %v4363 = vmul.f32 %v4303, 1.442695
    %v4364 = vpow.pop %v4363
    %v4365 = vmul.f32 %v4304, 1.442695
    %v4366 = vpow.pop %v4365
    %v4367 = vmul.f32 %v4305, 1.442695
    %v4368 = vpow.pop %v4367
    %v4369 = vmul.f32 %v4306, 1.442695
    %v4370 = vpow.pop %v4369
    %v4371 = vmul.f32 %v4307, 1.442695
    %v4372 = vpow.pop %v4371
    %v4373 = vmul.f32 %v4308, 1.442695
    %v4374 = vpow.pop %v4373
    %v4375 = vmul.f32 %v4309, 1.442695
    %v4376 = vpow.pop %v4375
    %v4377 = vmul.f32 %v4310, 1.442695
    %v4378 = vpow.pop %v4377
    %v4379 = vmul.f32 %v4311, 1.442695
    %v4380 = vpow.pop %v4379
    %v4381 = vmul.f32 %v4312, 1.442695
    %v4382 = vpow.pop %v4381
    %v4383 = vmul.f32 %v4313, 1.442695
    %v4384 = vpow.pop %v4383
    %v4385 = vmul.f32 %v4314, 1.442695
    %v4386 = vpow.pop %v4385
    %v4387 = vmul.f32 %v4315, 1.442695
    %v4388 = vpow.pop %v4387
    %v4389 = vmul.f32 %v4316, 1.442695
    %v4390 = vpow.pop %v4389
    %v4391 = vmul.f32 %v4317, 1.442695
    %v4392 = vpow.pop %v4391
    %v4393 = vmul.f32 %v4318, 1.442695
    %v4394 = vpow.pop %v4393
    %v4395 = vmul.f32 %v4319, 1.442695
    %v4396 = vpow.pop %v4395
    %v4397 = vmul.f32 %v4320, 1.442695
    %v4398 = vpow.pop %v4397
    %v4399 = vmul.f32 %v4321, 1.442695
    %v4400 = vpow.pop %v4399
    %v4401 = vmul.f32 %v4322, 1.442695
    %v4402 = vpow.pop %v4401
    %v4403 = vmul.f32 %v4323, 1.442695
    %v4404 = vpow.pop %v4403
    %v4405 = vmul.f32 %v4324, 1.442695
    %v4406 = vpow.pop %v4405
    %v4407 = vmul.f32 %v4325, 1.442695
    %v4408 = vpow.pop %v4407
    %v4409 = vmul.f32 %v4326, 1.442695
    %v4410 = vpow.pop %v4409
    %v4411 = vmul.f32 %v4327, 1.442695
    %v4412 = vpow.pop %v4411
    %v4413 = vmul.f32 %v4328, 1.442695
    %v4414 = vpow.pop %v4413
    %v4415 = vmul.f32 %v4329, 1.442695
    %v4416 = vpow.pop %v4415
    %v4417 = vmul.f32 %v4330, 1.442695
    %v4418 = vpow.pop %v4417
    %v4419 = vmul.f32 %v4331, 1.442695
    %v4420 = vpow.pop %v4419
    %v4421 = vmul.f32 %v4332, 1.442695
    %v4422 = vpow.pop %v4421
    %v4423 = vmul.f32 %v4333, 1.442695
    %v4424 = vpow.pop %v4423
    %v4425 = vmul.f32 %v4334, 1.442695
    %v4426 = vpow.pop %v4425
    %v4427 = vmul.f32 %v4335, 1.442695
    %v4428 = vpow.pop %v4427
    %v4429 = vmul.f32 %v4336, 1.442695
    %v4430 = vpow.pop %v4429
    %v4431 = vmul.f32 %v4337, 1.442695
    %v4432 = vpow.pop %v4431
    %v4433 = vmul.f32 %v4338, 1.442695
    %v4434 = vpow.pop %v4433
    %v4435 = vmul.f32 %v4339, 1.442695
    %v4436 = vpow.pop %v4435
    %v4437 = vmul.f32 %v4340, 1.442695
    %v4438 = vpow.pop %v4437
    %v4439 = vmul.f32 %v4341, 1.442695
    %v4440 = vpow.pop %v4439
    %v4441 = vmul.f32 %v4342, 1.442695
    %v4442 = vpow.pop %v4441
    %v4443 = vmul.f32 %v4343, 1.442695
    %v4444 = vpow.pop %v4443
    %v4445 = vmul.f32 %v4344, 1.442695
    %v4446 = vpow.pop %v4445
    %v4447 = vmul.f32 %v4345, 1.442695
    %v4448 = vpow.pop %v4447
    %v4449 = vmul.f32 %v4346, 1.442695
    %v4450 = vpow.pop %v4449
    %v4451 = vmul.f32 %v4347, 1.442695
    %v4452 = vpow.pop %v4451
    %v4453 = vmul.f32 %v4348, 1.442695
    %v4454 = vpow.pop %v4453
    %v4455 = vmul.f32 %v4349, 1.442695
    %v4456 = vpow.pop %v4455
    %v4457 = vmul.f32 %v4350, 1.442695
    %v4458 = vpow.pop %v4457
    %v4459 = vmul.f32 %v4351, 1.442695
    %v4460 = vpow.pop %v4459
    %v4461 = vmul.f32 %v4352, 1.442695
    %v4462 = vpow.pop %v4461
    %v4463 = vmul.f32 %v4353, 1.442695
    %v4464 = vpow.pop %v4463
    %v4465 = vmul.f32 %v4354, 1.442695
    %v4466 = vpow.pop %v4465
    %v4523 = vcombine.low %v4356, %v4358
    %v4524 = vcombine.low %v4360, %v4362
    %v4525 = vcombine.low %v4364, %v4366
    %v4527 = vunpack.c.l.s4 1966171168
    %v4528 = vunpack.c.0.s8 %v4527
    %v4529 = vlaneseq
    %v4530 = vshrl.u32 %v4529, 7
    %v4531 = vsub.s32 %v4528, %v4530
    %v4532 = vrot.slane %v4523, %v4531
    %v4534 = vunpack.c.l.s4 1966171168
    %v4535 = vunpack.c.0.s8 %v4534
    %v4536 = vlaneseq
    %v4537 = vshrl.u32 %v4536, 7
    %v4538 = vsub.s32 %v4535, %v4537
    %v4539 = vrot.slane %v4524, %v4538
    %v4541 = vunpack.c.l.s4 1966171168
    %v4542 = vunpack.c.0.s8 %v4541
    %v4543 = vlaneseq
    %v4544 = vshrl.u32 %v4543, 7
    %v4545 = vsub.s32 %v4542, %v4544
    %v4546 = vrot.slane %v4525, %v4545
    %v4548 = vunpack.c.l.s4 1966171168
    %v4549 = vunpack.c.0.s8 %v4548
    %v4550 = vlaneseq
    %v4551 = vshrl.u32 %v4550, 7
    %v4552 = vsub.s32 %v4549, %v4551
    %v4553 = vrot.slane %v4368, %v4552
    %v4554 = vcombine.low %v4532, %v4539
    %v4555 = vcombine.low %v4546, %v4553
    %v4557 = vunpack.c.l.s4 1966171168
    %v4558 = vunpack.c.0.s8 %v4557
    %v4559 = vlaneseq
    %v4560 = vshrl.u32 %v4559, 7
    %v4561 = vsub.s32 %v4558, %v4560
    %v4562 = vrot.slane %v4554, %v4561
    %v4564 = vunpack.c.l.s4 1966171168
    %v4565 = vunpack.c.0.s8 %v4564
    %v4566 = vlaneseq
    %v4567 = vshrl.u32 %v4566, 7
    %v4568 = vsub.s32 %v4565, %v4567
    %v4569 = vrot.slane %v4555, %v4568
    %v4570 = vcombine.low %v4562, %v4569
    %v4571 = vcombine.low %v4370, %v4372
    %v4572 = vcombine.low %v4374, %v4376
    %v4573 = vcombine.low %v4378, %v4380
    %v4575 = vunpack.c.l.s4 1966171168
    %v4576 = vunpack.c.0.s8 %v4575
    %v4577 = vlaneseq
    %v4578 = vshrl.u32 %v4577, 7
    %v4579 = vsub.s32 %v4576, %v4578
    %v4580 = vrot.slane %v4571, %v4579
    %v4582 = vunpack.c.l.s4 1966171168
    %v4583 = vunpack.c.0.s8 %v4582
    %v4584 = vlaneseq
    %v4585 = vshrl.u32 %v4584, 7
    %v4586 = vsub.s32 %v4583, %v4585
    %v4587 = vrot.slane %v4572, %v4586
    %v4589 = vunpack.c.l.s4 1966171168
    %v4590 = vunpack.c.0.s8 %v4589
    %v4591 = vlaneseq
    %v4592 = vshrl.u32 %v4591, 7
    %v4593 = vsub.s32 %v4590, %v4592
    %v4594 = vrot.slane %v4573, %v4593
    %v4596 = vunpack.c.l.s4 1966171168
    %v4597 = vunpack.c.0.s8 %v4596
    %v4598 = vlaneseq
    %v4599 = vshrl.u32 %v4598, 7
    %v4600 = vsub.s32 %v4597, %v4599
    %v4601 = vrot.slane %v4382, %v4600
    %v4602 = vcombine.low %v4580, %v4587
    %v4603 = vcombine.low %v4594, %v4601
    %v4605 = vunpack.c.l.s4 1966171168
    %v4606 = vunpack.c.0.s8 %v4605
    %v4607 = vlaneseq
    %v4608 = vshrl.u32 %v4607, 7
    %v4609 = vsub.s32 %v4606, %v4608
    %v4610 = vrot.slane %v4602, %v4609
    %v4612 = vunpack.c.l.s4 1966171168
    %v4613 = vunpack.c.0.s8 %v4612
    %v4614 = vlaneseq
    %v4615 = vshrl.u32 %v4614, 7
    %v4616 = vsub.s32 %v4613, %v4615
    %v4617 = vrot.slane %v4603, %v4616
    %v4618 = vcombine.low %v4610, %v4617
    %v4619 = vcombine.low %v4384, %v4386
    %v4620 = vcombine.low %v4388, %v4390
    %v4621 = vcombine.low %v4392, %v4394
    %v4623 = vunpack.c.l.s4 1966171168
    %v4624 = vunpack.c.0.s8 %v4623
    %v4625 = vlaneseq
    %v4626 = vshrl.u32 %v4625, 7
    %v4627 = vsub.s32 %v4624, %v4626
    %v4628 = vrot.slane %v4619, %v4627
    %v4630 = vunpack.c.l.s4 1966171168
    %v4631 = vunpack.c.0.s8 %v4630
    %v4632 = vlaneseq
    %v4633 = vshrl.u32 %v4632, 7
    %v4634 = vsub.s32 %v4631, %v4633
    %v4635 = vrot.slane %v4620, %v4634
    %v4637 = vunpack.c.l.s4 1966171168
    %v4638 = vunpack.c.0.s8 %v4637
    %v4639 = vlaneseq
    %v4640 = vshrl.u32 %v4639, 7
    %v4641 = vsub.s32 %v4638, %v4640
    %v4642 = vrot.slane %v4621, %v4641
    %v4644 = vunpack.c.l.s4 1966171168
    %v4645 = vunpack.c.0.s8 %v4644
    %v4646 = vlaneseq
    %v4647 = vshrl.u32 %v4646, 7
    %v4648 = vsub.s32 %v4645, %v4647
    %v4649 = vrot.slane %v4396, %v4648
    %v4650 = vcombine.low %v4628, %v4635
    %v4651 = vcombine.low %v4642, %v4649
    %v4653 = vunpack.c.l.s4 1966171168
    %v4654 = vunpack.c.0.s8 %v4653
    %v4655 = vlaneseq
    %v4656 = vshrl.u32 %v4655, 7
    %v4657 = vsub.s32 %v4654, %v4656
    %v4658 = vrot.slane %v4650, %v4657
    %v4660 = vunpack.c.l.s4 1966171168
    %v4661 = vunpack.c.0.s8 %v4660
    %v4662 = vlaneseq
    %v4663 = vshrl.u32 %v4662, 7
    %v4664 = vsub.s32 %v4661, %v4663
    %v4665 = vrot.slane %v4651, %v4664
    %v4666 = vcombine.low %v4658, %v4665
    %v4667 = vcombine.low %v4398, %v4400
    %v4668 = vcombine.low %v4402, %v4404
    %v4669 = vcombine.low %v4406, %v4408
    %v4671 = vunpack.c.l.s4 1966171168
    %v4672 = vunpack.c.0.s8 %v4671
    %v4673 = vlaneseq
    %v4674 = vshrl.u32 %v4673, 7
    %v4675 = vsub.s32 %v4672, %v4674
    %v4676 = vrot.slane %v4667, %v4675
    %v4678 = vunpack.c.l.s4 1966171168
    %v4679 = vunpack.c.0.s8 %v4678
    %v4680 = vlaneseq
    %v4681 = vshrl.u32 %v4680, 7
    %v4682 = vsub.s32 %v4679, %v4681
    %v4683 = vrot.slane %v4668, %v4682
    %v4685 = vunpack.c.l.s4 1966171168
    %v4686 = vunpack.c.0.s8 %v4685
    %v4687 = vlaneseq
    %v4688 = vshrl.u32 %v4687, 7
    %v4689 = vsub.s32 %v4686, %v4688
    %v4690 = vrot.slane %v4669, %v4689
    %v4692 = vunpack.c.l.s4 1966171168
    %v4693 = vunpack.c.0.s8 %v4692
    %v4694 = vlaneseq
    %v4695 = vshrl.u32 %v4694, 7
    %v4696 = vsub.s32 %v4693, %v4695
    %v4697 = vrot.slane %v4410, %v4696
    %v4698 = vcombine.low %v4676, %v4683
    %v4699 = vcombine.low %v4690, %v4697
    %v4701 = vunpack.c.l.s4 1966171168
    %v4702 = vunpack.c.0.s8 %v4701
    %v4703 = vlaneseq
    %v4704 = vshrl.u32 %v4703, 7
    %v4705 = vsub.s32 %v4702, %v4704
    %v4706 = vrot.slane %v4698, %v4705
    %v4708 = vunpack.c.l.s4 1966171168
    %v4709 = vunpack.c.0.s8 %v4708
    %v4710 = vlaneseq
    %v4711 = vshrl.u32 %v4710, 7
    %v4712 = vsub.s32 %v4709, %v4711
    %v4713 = vrot.slane %v4699, %v4712
    %v4714 = vcombine.low %v4706, %v4713
    %v4715 = vcombine.low %v4412, %v4414
    %v4716 = vcombine.low %v4416, %v4418
    %v4717 = vcombine.low %v4420, %v4422
    %v4719 = vunpack.c.l.s4 1966171168
    %v4720 = vunpack.c.0.s8 %v4719
    %v4721 = vlaneseq
    %v4722 = vshrl.u32 %v4721, 7
    %v4723 = vsub.s32 %v4720, %v4722
    %v4724 = vrot.slane %v4715, %v4723
    %v4726 = vunpack.c.l.s4 1966171168
    %v4727 = vunpack.c.0.s8 %v4726
    %v4728 = vlaneseq
    %v4729 = vshrl.u32 %v4728, 7
    %v4730 = vsub.s32 %v4727, %v4729
    %v4731 = vrot.slane %v4716, %v4730
    %v4733 = vunpack.c.l.s4 1966171168
    %v4734 = vunpack.c.0.s8 %v4733
    %v4735 = vlaneseq
    %v4736 = vshrl.u32 %v4735, 7
    %v4737 = vsub.s32 %v4734, %v4736
    %v4738 = vrot.slane %v4717, %v4737
    %v4740 = vunpack.c.l.s4 1966171168
    %v4741 = vunpack.c.0.s8 %v4740
    %v4742 = vlaneseq
    %v4743 = vshrl.u32 %v4742, 7
    %v4744 = vsub.s32 %v4741, %v4743
    %v4745 = vrot.slane %v4424, %v4744
    %v4746 = vcombine.low %v4724, %v4731
    %v4747 = vcombine.low %v4738, %v4745
    %v4749 = vunpack.c.l.s4 1966171168
    %v4750 = vunpack.c.0.s8 %v4749
    %v4751 = vlaneseq
    %v4752 = vshrl.u32 %v4751, 7
    %v4753 = vsub.s32 %v4750, %v4752
    %v4754 = vrot.slane %v4746, %v4753
    %v4756 = vunpack.c.l.s4 1966171168
    %v4757 = vunpack.c.0.s8 %v4756
    %v4758 = vlaneseq
    %v4759 = vshrl.u32 %v4758, 7
    %v4760 = vsub.s32 %v4757, %v4759
    %v4761 = vrot.slane %v4747, %v4760
    %v4762 = vcombine.low %v4754, %v4761
    %v4763 = vcombine.low %v4426, %v4428
    %v4764 = vcombine.low %v4430, %v4432
    %v4765 = vcombine.low %v4434, %v4436
    %v4767 = vunpack.c.l.s4 1966171168
    %v4768 = vunpack.c.0.s8 %v4767
    %v4769 = vlaneseq
    %v4770 = vshrl.u32 %v4769, 7
    %v4771 = vsub.s32 %v4768, %v4770
    %v4772 = vrot.slane %v4763, %v4771
    %v4774 = vunpack.c.l.s4 1966171168
    %v4775 = vunpack.c.0.s8 %v4774
    %v4776 = vlaneseq
    %v4777 = vshrl.u32 %v4776, 7
    %v4778 = vsub.s32 %v4775, %v4777
    %v4779 = vrot.slane %v4764, %v4778
    %v4781 = vunpack.c.l.s4 1966171168
    %v4782 = vunpack.c.0.s8 %v4781
    %v4783 = vlaneseq
    %v4784 = vshrl.u32 %v4783, 7
    %v4785 = vsub.s32 %v4782, %v4784
    %v4786 = vrot.slane %v4765, %v4785
    %v4788 = vunpack.c.l.s4 1966171168
    %v4789 = vunpack.c.0.s8 %v4788
    %v4790 = vlaneseq
    %v4791 = vshrl.u32 %v4790, 7
    %v4792 = vsub.s32 %v4789, %v4791
    %v4793 = vrot.slane %v4438, %v4792
    %v4794 = vcombine.low %v4772, %v4779
    %v4795 = vcombine.low %v4786, %v4793
    %v4797 = vunpack.c.l.s4 1966171168
    %v4798 = vunpack.c.0.s8 %v4797
    %v4799 = vlaneseq
    %v4800 = vshrl.u32 %v4799, 7
    %v4801 = vsub.s32 %v4798, %v4800
    %v4802 = vrot.slane %v4794, %v4801
    %v4804 = vunpack.c.l.s4 1966171168
    %v4805 = vunpack.c.0.s8 %v4804
    %v4806 = vlaneseq
    %v4807 = vshrl.u32 %v4806, 7
    %v4808 = vsub.s32 %v4805, %v4807
    %v4809 = vrot.slane %v4795, %v4808
    %v4810 = vcombine.low %v4802, %v4809
    %v4811 = vcombine.low %v4440, %v4442
    %v4812 = vcombine.low %v4444, %v4446
    %v4813 = vcombine.low %v4448, %v4450
    %v4815 = vunpack.c.l.s4 1966171168
    %v4816 = vunpack.c.0.s8 %v4815
    %v4817 = vlaneseq
    %v4818 = vshrl.u32 %v4817, 7
    %v4819 = vsub.s32 %v4816, %v4818
    %v4820 = vrot.slane %v4811, %v4819
    %v4822 = vunpack.c.l.s4 1966171168
    %v4823 = vunpack.c.0.s8 %v4822
    %v4824 = vlaneseq
    %v4825 = vshrl.u32 %v4824, 7
    %v4826 = vsub.s32 %v4823, %v4825
    %v4827 = vrot.slane %v4812, %v4826
    %v4829 = vunpack.c.l.s4 1966171168
    %v4830 = vunpack.c.0.s8 %v4829
    %v4831 = vlaneseq
    %v4832 = vshrl.u32 %v4831, 7
    %v4833 = vsub.s32 %v4830, %v4832
    %v4834 = vrot.slane %v4813, %v4833
    %v4836 = vunpack.c.l.s4 1966171168
    %v4837 = vunpack.c.0.s8 %v4836
    %v4838 = vlaneseq
    %v4839 = vshrl.u32 %v4838, 7
    %v4840 = vsub.s32 %v4837, %v4839
    %v4841 = vrot.slane %v4452, %v4840
    %v4842 = vcombine.low %v4820, %v4827
    %v4843 = vcombine.low %v4834, %v4841
    %v4845 = vunpack.c.l.s4 1966171168
    %v4846 = vunpack.c.0.s8 %v4845
    %v4847 = vlaneseq
    %v4848 = vshrl.u32 %v4847, 7
    %v4849 = vsub.s32 %v4846, %v4848
    %v4850 = vrot.slane %v4842, %v4849
    %v4852 = vunpack.c.l.s4 1966171168
    %v4853 = vunpack.c.0.s8 %v4852
    %v4854 = vlaneseq
    %v4855 = vshrl.u32 %v4854, 7
    %v4856 = vsub.s32 %v4853, %v4855
    %v4857 = vrot.slane %v4843, %v4856
    %v4858 = vcombine.low %v4850, %v4857
    %v4859 = vcombine.low %v4454, %v4456
    %v4860 = vcombine.low %v4458, %v4460
    %v4861 = vcombine.low %v4462, %v4464
    %v4863 = vunpack.c.l.s4 1966171168
    %v4864 = vunpack.c.0.s8 %v4863
    %v4865 = vlaneseq
    %v4866 = vshrl.u32 %v4865, 7
    %v4867 = vsub.s32 %v4864, %v4866
    %v4868 = vrot.slane %v4859, %v4867
    %v4870 = vunpack.c.l.s4 1966171168
    %v4871 = vunpack.c.0.s8 %v4870
    %v4872 = vlaneseq
    %v4873 = vshrl.u32 %v4872, 7
    %v4874 = vsub.s32 %v4871, %v4873
    %v4875 = vrot.slane %v4860, %v4874
    %v4877 = vunpack.c.l.s4 1966171168
    %v4878 = vunpack.c.0.s8 %v4877
    %v4879 = vlaneseq
    %v4880 = vshrl.u32 %v4879, 7
    %v4881 = vsub.s32 %v4878, %v4880
    %v4882 = vrot.slane %v4861, %v4881
    %v4884 = vunpack.c.l.s4 1966171168
    %v4885 = vunpack.c.0.s8 %v4884
    %v4886 = vlaneseq
    %v4887 = vshrl.u32 %v4886, 7
    %v4888 = vsub.s32 %v4885, %v4887
    %v4889 = vrot.slane %v4466, %v4888
    %v4890 = vcombine.low %v4868, %v4875
    %v4891 = vcombine.low %v4882, %v4889
    %v4893 = vunpack.c.l.s4 1966171168
    %v4894 = vunpack.c.0.s8 %v4893
    %v4895 = vlaneseq
    %v4896 = vshrl.u32 %v4895, 7
    %v4897 = vsub.s32 %v4894, %v4896
    %v4898 = vrot.slane %v4890, %v4897
    %v4900 = vunpack.c.l.s4 1966171168
    %v4901 = vunpack.c.0.s8 %v4900
    %v4902 = vlaneseq
    %v4903 = vshrl.u32 %v4902, 7
    %v4904 = vsub.s32 %v4901, %v4903
    %v4905 = vrot.slane %v4891, %v4904
    %v4906 = vcombine.low %v4898, %v4905
    %v4915 = vsel %vm3693, %v4570, 0.0
    %v4916 = vrot.slane %v4915, 4
    %v4917 = vadd.f32 %v4915, %v4916
    %v4918 = vrot.slane %v4917, 2
    %v4919 = vadd.f32 %v4917, %v4918
    %v4920 = vrot.slane %v4919, 1
    %v4921 = vadd.f32 %v4919, %v4920
    %v4922 = vsel %vm3693, %v4618, 0.0
    %v4923 = vrot.slane %v4922, 4
    %v4924 = vadd.f32 %v4922, %v4923
    %v4925 = vrot.slane %v4924, 2
    %v4926 = vadd.f32 %v4924, %v4925
    %v4927 = vrot.slane %v4926, 1
    %v4928 = vadd.f32 %v4926, %v4927
    %v4929 = vsel %vm3693, %v4666, 0.0
    %v4930 = vrot.slane %v4929, 4
    %v4931 = vadd.f32 %v4929, %v4930
    %v4932 = vrot.slane %v4931, 2
    %v4933 = vadd.f32 %v4931, %v4932
    %v4934 = vrot.slane %v4933, 1
    %v4935 = vadd.f32 %v4933, %v4934
    %v4936 = vsel %vm3693, %v4714, 0.0
    %v4937 = vrot.slane %v4936, 4
    %v4938 = vadd.f32 %v4936, %v4937
    %v4939 = vrot.slane %v4938, 2
    %v4940 = vadd.f32 %v4938, %v4939
    %v4941 = vrot.slane %v4940, 1
    %v4942 = vadd.f32 %v4940, %v4941
    %v4943 = vsel %vm3693, %v4762, 0.0
    %v4944 = vrot.slane %v4943, 4
    %v4945 = vadd.f32 %v4943, %v4944
    %v4946 = vrot.slane %v4945, 2
    %v4947 = vadd.f32 %v4945, %v4946
    %v4948 = vrot.slane %v4947, 1
    %v4949 = vadd.f32 %v4947, %v4948
    %v4950 = vsel %vm3693, %v4810, 0.0
    %v4951 = vrot.slane %v4950, 4
    %v4952 = vadd.f32 %v4950, %v4951
    %v4953 = vrot.slane %v4952, 2
    %v4954 = vadd.f32 %v4952, %v4953
    %v4955 = vrot.slane %v4954, 1
    %v4956 = vadd.f32 %v4954, %v4955
    %v4957 = vsel %vm3693, %v4858, 0.0
    %v4958 = vrot.slane %v4957, 4
    %v4959 = vadd.f32 %v4957, %v4958
    %v4960 = vrot.slane %v4959, 2
    %v4961 = vadd.f32 %v4959, %v4960
    %v4962 = vrot.slane %v4961, 1
    %v4963 = vadd.f32 %v4961, %v4962
    %v4964 = vsel %vm3693, %v4906, 0.0
    %v4965 = vrot.slane %v4964, 4
    %v4966 = vadd.f32 %v4964, %v4965
    %v4967 = vrot.slane %v4966, 2
    %v4968 = vadd.f32 %v4966, %v4967
    %v4969 = vrot.slane %v4968, 1
    %v4970 = vadd.f32 %v4968, %v4969
    %v4979 = vsel %vm3758, %v4928, %v4921
    %v4980 = vsel %vm3760, %v4935, %v4979
    %v4981 = vsel %vm3762, %v4942, %v4980
    %v4982 = vsel %vm3764, %v4949, %v4981
    %v4983 = vsel %vm3766, %v4956, %v4982
    %v4984 = vsel %vm3768, %v4963, %v4983
    %v4985 = vsel %vm3770, %v4970, %v4984
    %v4987 = vadd.f32 %v3776, %v4985
    %v4988 = vrcp.pop %v4987
    %v4989 = vmul.f32 %v3776, %v4988
    %v4991 = vcombine.high %v4988, %v4988
    %v4993 = vunpack.c.l.s4 1966171168
    %v4994 = vunpack.c.0.s8 %v4993
    %v4995 = vlaneseq
    %v4996 = vshrl.u32 %v4995, 7
    %v4997 = vsub.s32 %v4994, %v4996
    %v4998 = vrot.slane %v4988, %v4997
    %v5000 = vunpack.c.l.s4 1966171168
    %v5001 = vunpack.c.0.s8 %v5000
    %v5002 = vlaneseq
    %v5003 = vshrl.u32 %v5002, 7
    %v5004 = vsub.s32 %v5001, %v5003
    %v5005 = vrot.slane %v4991, %v5004
    %v5006 = vcombine.high %v4998, %v4998
    %v5007 = vcombine.high %v5005, %v5005
    %v5009 = vunpack.c.l.s4 1966171168
    %v5010 = vunpack.c.0.s8 %v5009
    %v5011 = vlaneseq
    %v5012 = vshrl.u32 %v5011, 7
    %v5013 = vsub.s32 %v5010, %v5012
    %v5014 = vrot.slane %v4998, %v5013
    %v5016 = vunpack.c.l.s4 1966171168
    %v5017 = vunpack.c.0.s8 %v5016
    %v5018 = vlaneseq
    %v5019 = vshrl.u32 %v5018, 7
    %v5020 = vsub.s32 %v5017, %v5019
    %v5021 = vrot.slane %v5005, %v5020
    %v5023 = vunpack.c.l.s4 1966171168
    %v5024 = vunpack.c.0.s8 %v5023
    %v5025 = vlaneseq
    %v5026 = vshrl.u32 %v5025, 7
    %v5027 = vsub.s32 %v5024, %v5026
    %v5028 = vrot.slane %v5006, %v5027
    %v5030 = vunpack.c.l.s4 1966171168
    %v5031 = vunpack.c.0.s8 %v5030
    %v5032 = vlaneseq
    %v5033 = vshrl.u32 %v5032, 7
    %v5034 = vsub.s32 %v5031, %v5033
    %v5035 = vrot.slane %v5007, %v5034
    %v5036 = vcombine.high %v5014, %v5014
    %v5037 = vcombine.high %v5021, %v5021
    %v5038 = vcombine.high %v5028, %v5028
    %v5039 = vcombine.high %v5035, %v5035
    %v5040 = vlaneseq
    %v5041 = vshrl.u32 %v5040, 7
    %v5042 = vsub.s32 0, %v5041
    %v5043 = vrot.slane %v5014, %v5042
    %v5044 = vlaneseq
    %v5045 = vshrl.u32 %v5044, 7
    %v5046 = vsub.s32 0, %v5045
    %v5047 = vrot.slane %v5028, %v5046
    %v5048 = vlaneseq
    %v5049 = vshrl.u32 %v5048, 7
    %v5050 = vsub.s32 0, %v5049
    %v5051 = vrot.slane %v5036, %v5050
    %v5052 = vlaneseq
    %v5053 = vshrl.u32 %v5052, 7
    %v5054 = vsub.s32 0, %v5053
    %v5055 = vrot.slane %v5038, %v5054
    %v5056 = vlaneseq
    %v5057 = vshrl.u32 %v5056, 7
    %v5058 = vsub.s32 0, %v5057
    %v5059 = vrot.slane %v5021, %v5058
    %v5060 = vlaneseq
    %v5061 = vshrl.u32 %v5060, 7
    %v5062 = vsub.s32 0, %v5061
    %v5063 = vrot.slane %v5035, %v5062
    %v5064 = vlaneseq
    %v5065 = vshrl.u32 %v5064, 7
    %v5066 = vsub.s32 0, %v5065
    %v5067 = vrot.slane %v5037, %v5066
    %v5068 = vlaneseq
    %v5069 = vshrl.u32 %v5068, 7
    %v5070 = vsub.s32 0, %v5069
    %v5071 = vrot.slane %v5039, %v5070
    %v5072 = vcombine.high %v5043, %v5043
    %v5074 = vunpack.c.l.s4 1966171168
    %v5075 = vunpack.c.0.s8 %v5074
    %v5076 = vlaneseq
    %v5077 = vshrl.u32 %v5076, 7
    %v5078 = vsub.s32 %v5075, %v5077
    %v5079 = vrot.slane %v5043, %v5078
    %v5081 = vunpack.c.l.s4 1966171168
    %v5082 = vunpack.c.0.s8 %v5081
    %v5083 = vlaneseq
    %v5084 = vshrl.u32 %v5083, 7
    %v5085 = vsub.s32 %v5082, %v5084
    %v5086 = vrot.slane %v5072, %v5085
    %v5087 = vcombine.high %v5079, %v5079
    %v5088 = vcombine.high %v5086, %v5086
    %v5090 = vunpack.c.l.s4 1966171168
    %v5091 = vunpack.c.0.s8 %v5090
    %v5092 = vlaneseq
    %v5093 = vshrl.u32 %v5092, 7
    %v5094 = vsub.s32 %v5091, %v5093
    %v5095 = vrot.slane %v5079, %v5094
    %v5097 = vunpack.c.l.s4 1966171168
    %v5098 = vunpack.c.0.s8 %v5097
    %v5099 = vlaneseq
    %v5100 = vshrl.u32 %v5099, 7
    %v5101 = vsub.s32 %v5098, %v5100
    %v5102 = vrot.slane %v5086, %v5101
    %v5104 = vunpack.c.l.s4 1966171168
    %v5105 = vunpack.c.0.s8 %v5104
    %v5106 = vlaneseq
    %v5107 = vshrl.u32 %v5106, 7
    %v5108 = vsub.s32 %v5105, %v5107
    %v5109 = vrot.slane %v5087, %v5108
    %v5111 = vunpack.c.l.s4 1966171168
    %v5112 = vunpack.c.0.s8 %v5111
    %v5113 = vlaneseq
    %v5114 = vshrl.u32 %v5113, 7
    %v5115 = vsub.s32 %v5112, %v5114
    %v5116 = vrot.slane %v5088, %v5115
    %v5117 = vcombine.high %v5095, %v5095
    %v5118 = vcombine.high %v5102, %v5102
    %v5119 = vcombine.high %v5109, %v5109
    %v5120 = vcombine.high %v5047, %v5047
    %v5122 = vunpack.c.l.s4 1966171168
    %v5123 = vunpack.c.0.s8 %v5122
    %v5124 = vlaneseq
    %v5125 = vshrl.u32 %v5124, 7
    %v5126 = vsub.s32 %v5123, %v5125
    %v5127 = vrot.slane %v5047, %v5126
    %v5129 = vunpack.c.l.s4 1966171168
    %v5130 = vunpack.c.0.s8 %v5129
    %v5131 = vlaneseq
    %v5132 = vshrl.u32 %v5131, 7
    %v5133 = vsub.s32 %v5130, %v5132
    %v5134 = vrot.slane %v5120, %v5133
    %v5135 = vcombine.high %v5127, %v5127
    %v5136 = vcombine.high %v5134, %v5134
    %v5138 = vunpack.c.l.s4 1966171168
    %v5139 = vunpack.c.0.s8 %v5138
    %v5140 = vlaneseq
    %v5141 = vshrl.u32 %v5140, 7
    %v5142 = vsub.s32 %v5139, %v5141
    %v5143 = vrot.slane %v5127, %v5142
    %v5145 = vunpack.c.l.s4 1966171168
    %v5146 = vunpack.c.0.s8 %v5145
    %v5147 = vlaneseq
    %v5148 = vshrl.u32 %v5147, 7
    %v5149 = vsub.s32 %v5146, %v5148
    %v5150 = vrot.slane %v5134, %v5149
    %v5152 = vunpack.c.l.s4 1966171168
    %v5153 = vunpack.c.0.s8 %v5152
    %v5154 = vlaneseq
    %v5155 = vshrl.u32 %v5154, 7
    %v5156 = vsub.s32 %v5153, %v5155
    %v5157 = vrot.slane %v5135, %v5156
    %v5159 = vunpack.c.l.s4 1966171168
    %v5160 = vunpack.c.0.s8 %v5159
    %v5161 = vlaneseq
    %v5162 = vshrl.u32 %v5161, 7
    %v5163 = vsub.s32 %v5160, %v5162
    %v5164 = vrot.slane %v5136, %v5163
    %v5165 = vcombine.high %v5143, %v5143
    %v5166 = vcombine.high %v5150, %v5150
    %v5167 = vcombine.high %v5157, %v5157
    %v5168 = vcombine.high %v5051, %v5051
    %v5170 = vunpack.c.l.s4 1966171168
    %v5171 = vunpack.c.0.s8 %v5170
    %v5172 = vlaneseq
    %v5173 = vshrl.u32 %v5172, 7
    %v5174 = vsub.s32 %v5171, %v5173
    %v5175 = vrot.slane %v5051, %v5174
    %v5177 = vunpack.c.l.s4 1966171168
    %v5178 = vunpack.c.0.s8 %v5177
    %v5179 = vlaneseq
    %v5180 = vshrl.u32 %v5179, 7
    %v5181 = vsub.s32 %v5178, %v5180
    %v5182 = vrot.slane %v5168, %v5181
    %v5183 = vcombine.high %v5175, %v5175
    %v5184 = vcombine.high %v5182, %v5182
    %v5186 = vunpack.c.l.s4 1966171168
    %v5187 = vunpack.c.0.s8 %v5186
    %v5188 = vlaneseq
    %v5189 = vshrl.u32 %v5188, 7
    %v5190 = vsub.s32 %v5187, %v5189
    %v5191 = vrot.slane %v5175, %v5190
    %v5193 = vunpack.c.l.s4 1966171168
    %v5194 = vunpack.c.0.s8 %v5193
    %v5195 = vlaneseq
    %v5196 = vshrl.u32 %v5195, 7
    %v5197 = vsub.s32 %v5194, %v5196
    %v5198 = vrot.slane %v5182, %v5197
    %v5200 = vunpack.c.l.s4 1966171168
    %v5201 = vunpack.c.0.s8 %v5200
    %v5202 = vlaneseq
    %v5203 = vshrl.u32 %v5202, 7
    %v5204 = vsub.s32 %v5201, %v5203
    %v5205 = vrot.slane %v5183, %v5204
    %v5207 = vunpack.c.l.s4 1966171168
    %v5208 = vunpack.c.0.s8 %v5207
    %v5209 = vlaneseq
    %v5210 = vshrl.u32 %v5209, 7
    %v5211 = vsub.s32 %v5208, %v5210
    %v5212 = vrot.slane %v5184, %v5211
    %v5213 = vcombine.high %v5191, %v5191
    %v5214 = vcombine.high %v5198, %v5198
    %v5215 = vcombine.high %v5205, %v5205
    %v5216 = vcombine.high %v5055, %v5055
    %v5218 = vunpack.c.l.s4 1966171168
    %v5219 = vunpack.c.0.s8 %v5218
    %v5220 = vlaneseq
    %v5221 = vshrl.u32 %v5220, 7
    %v5222 = vsub.s32 %v5219, %v5221
    %v5223 = vrot.slane %v5055, %v5222
    %v5225 = vunpack.c.l.s4 1966171168
    %v5226 = vunpack.c.0.s8 %v5225
    %v5227 = vlaneseq
    %v5228 = vshrl.u32 %v5227, 7
    %v5229 = vsub.s32 %v5226, %v5228
    %v5230 = vrot.slane %v5216, %v5229
    %v5231 = vcombine.high %v5223, %v5223
    %v5232 = vcombine.high %v5230, %v5230
    %v5234 = vunpack.c.l.s4 1966171168
    %v5235 = vunpack.c.0.s8 %v5234
    %v5236 = vlaneseq
    %v5237 = vshrl.u32 %v5236, 7
    %v5238 = vsub.s32 %v5235, %v5237
    %v5239 = vrot.slane %v5223, %v5238
    %v5241 = vunpack.c.l.s4 1966171168
    %v5242 = vunpack.c.0.s8 %v5241
    %v5243 = vlaneseq
    %v5244 = vshrl.u32 %v5243, 7
    %v5245 = vsub.s32 %v5242, %v5244
    %v5246 = vrot.slane %v5230, %v5245
    %v5248 = vunpack.c.l.s4 1966171168
    %v5249 = vunpack.c.0.s8 %v5248
    %v5250 = vlaneseq
    %v5251 = vshrl.u32 %v5250, 7
    %v5252 = vsub.s32 %v5249, %v5251
    %v5253 = vrot.slane %v5231, %v5252
    %v5255 = vunpack.c.l.s4 1966171168
    %v5256 = vunpack.c.0.s8 %v5255
    %v5257 = vlaneseq
    %v5258 = vshrl.u32 %v5257, 7
    %v5259 = vsub.s32 %v5256, %v5258
    %v5260 = vrot.slane %v5232, %v5259
    %v5261 = vcombine.high %v5239, %v5239
    %v5262 = vcombine.high %v5246, %v5246
    %v5263 = vcombine.high %v5253, %v5253
    %v5264 = vcombine.high %v5059, %v5059
    %v5266 = vunpack.c.l.s4 1966171168
    %v5267 = vunpack.c.0.s8 %v5266
    %v5268 = vlaneseq
    %v5269 = vshrl.u32 %v5268, 7
    %v5270 = vsub.s32 %v5267, %v5269
    %v5271 = vrot.slane %v5059, %v5270
    %v5273 = vunpack.c.l.s4 1966171168
    %v5274 = vunpack.c.0.s8 %v5273
    %v5275 = vlaneseq
    %v5276 = vshrl.u32 %v5275, 7
    %v5277 = vsub.s32 %v5274, %v5276
    %v5278 = vrot.slane %v5264, %v5277
    %v5279 = vcombine.high %v5271, %v5271
    %v5280 = vcombine.high %v5278, %v5278
    %v5282 = vunpack.c.l.s4 1966171168
    %v5283 = vunpack.c.0.s8 %v5282
    %v5284 = vlaneseq
    %v5285 = vshrl.u32 %v5284, 7
    %v5286 = vsub.s32 %v5283, %v5285
    %v5287 = vrot.slane %v5271, %v5286
    %v5289 = vunpack.c.l.s4 1966171168
    %v5290 = vunpack.c.0.s8 %v5289
    %v5291 = vlaneseq
    %v5292 = vshrl.u32 %v5291, 7
    %v5293 = vsub.s32 %v5290, %v5292
    %v5294 = vrot.slane %v5278, %v5293
    %v5296 = vunpack.c.l.s4 1966171168
    %v5297 = vunpack.c.0.s8 %v5296
    %v5298 = vlaneseq
    %v5299 = vshrl.u32 %v5298, 7
    %v5300 = vsub.s32 %v5297, %v5299
    %v5301 = vrot.slane %v5279, %v5300
    %v5303 = vunpack.c.l.s4 1966171168
    %v5304 = vunpack.c.0.s8 %v5303
    %v5305 = vlaneseq
    %v5306 = vshrl.u32 %v5305, 7
    %v5307 = vsub.s32 %v5304, %v5306
    %v5308 = vrot.slane %v5280, %v5307
    %v5309 = vcombine.high %v5287, %v5287
    %v5310 = vcombine.high %v5294, %v5294
    %v5311 = vcombine.high %v5301, %v5301
    %v5312 = vcombine.high %v5063, %v5063
    %v5314 = vunpack.c.l.s4 1966171168
    %v5315 = vunpack.c.0.s8 %v5314
    %v5316 = vlaneseq
    %v5317 = vshrl.u32 %v5316, 7
    %v5318 = vsub.s32 %v5315, %v5317
    %v5319 = vrot.slane %v5063, %v5318
    %v5321 = vunpack.c.l.s4 1966171168
    %v5322 = vunpack.c.0.s8 %v5321
    %v5323 = vlaneseq
    %v5324 = vshrl.u32 %v5323, 7
    %v5325 = vsub.s32 %v5322, %v5324
    %v5326 = vrot.slane %v5312, %v5325
    %v5327 = vcombine.high %v5319, %v5319
    %v5328 = vcombine.high %v5326, %v5326
    %v5330 = vunpack.c.l.s4 1966171168
    %v5331 = vunpack.c.0.s8 %v5330
    %v5332 = vlaneseq
    %v5333 = vshrl.u32 %v5332, 7
    %v5334 = vsub.s32 %v5331, %v5333
    %v5335 = vrot.slane %v5319, %v5334
    %v5337 = vunpack.c.l.s4 1966171168
    %v5338 = vunpack.c.0.s8 %v5337
    %v5339 = vlaneseq
    %v5340 = vshrl.u32 %v5339, 7
    %v5341 = vsub.s32 %v5338, %v5340
    %v5342 = vrot.slane %v5326, %v5341
    %v5344 = vunpack.c.l.s4 1966171168
    %v5345 = vunpack.c.0.s8 %v5344
    %v5346 = vlaneseq
    %v5347 = vshrl.u32 %v5346, 7
    %v5348 = vsub.s32 %v5345, %v5347
    %v5349 = vrot.slane %v5327, %v5348
    %v5351 = vunpack.c.l.s4 1966171168
    %v5352 = vunpack.c.0.s8 %v5351
    %v5353 = vlaneseq
    %v5354 = vshrl.u32 %v5353, 7
    %v5355 = vsub.s32 %v5352, %v5354
    %v5356 = vrot.slane %v5328, %v5355
    %v5357 = vcombine.high %v5335, %v5335
    %v5358 = vcombine.high %v5342, %v5342
    %v5359 = vcombine.high %v5349, %v5349
    %v5360 = vcombine.high %v5067, %v5067
    %v5362 = vunpack.c.l.s4 1966171168
    %v5363 = vunpack.c.0.s8 %v5362
    %v5364 = vlaneseq
    %v5365 = vshrl.u32 %v5364, 7
    %v5366 = vsub.s32 %v5363, %v5365
    %v5367 = vrot.slane %v5067, %v5366
    %v5369 = vunpack.c.l.s4 1966171168
    %v5370 = vunpack.c.0.s8 %v5369
    %v5371 = vlaneseq
    %v5372 = vshrl.u32 %v5371, 7
    %v5373 = vsub.s32 %v5370, %v5372
    %v5374 = vrot.slane %v5360, %v5373
    %v5375 = vcombine.high %v5367, %v5367
    %v5376 = vcombine.high %v5374, %v5374
    %v5378 = vunpack.c.l.s4 1966171168
    %v5379 = vunpack.c.0.s8 %v5378
    %v5380 = vlaneseq
    %v5381 = vshrl.u32 %v5380, 7
    %v5382 = vsub.s32 %v5379, %v5381
    %v5383 = vrot.slane %v5367, %v5382
    %v5385 = vunpack.c.l.s4 1966171168
    %v5386 = vunpack.c.0.s8 %v5385
    %v5387 = vlaneseq
    %v5388 = vshrl.u32 %v5387, 7
    %v5389 = vsub.s32 %v5386, %v5388
    %v5390 = vrot.slane %v5374, %v5389
    %v5392 = vunpack.c.l.s4 1966171168
    %v5393 = vunpack.c.0.s8 %v5392
    %v5394 = vlaneseq
    %v5395 = vshrl.u32 %v5394, 7
    %v5396 = vsub.s32 %v5393, %v5395
    %v5397 = vrot.slane %v5375, %v5396
    %v5399 = vunpack.c.l.s4 1966171168
    %v5400 = vunpack.c.0.s8 %v5399
    %v5401 = vlaneseq
    %v5402 = vshrl.u32 %v5401, 7
    %v5403 = vsub.s32 %v5400, %v5402
    %v5404 = vrot.slane %v5376, %v5403
    %v5405 = vcombine.high %v5383, %v5383
    %v5406 = vcombine.high %v5390, %v5390
    %v5407 = vcombine.high %v5397, %v5397
    %v5408 = vcombine.high %v5071, %v5071
    %v5410 = vunpack.c.l.s4 1966171168
    %v5411 = vunpack.c.0.s8 %v5410
    %v5412 = vlaneseq
    %v5413 = vshrl.u32 %v5412, 7
    %v5414 = vsub.s32 %v5411, %v5413
    %v5415 = vrot.slane %v5071, %v5414
    %v5417 = vunpack.c.l.s4 1966171168
    %v5418 = vunpack.c.0.s8 %v5417
    %v5419 = vlaneseq
    %v5420 = vshrl.u32 %v5419, 7
    %v5421 = vsub.s32 %v5418, %v5420
    %v5422 = vrot.slane %v5408, %v5421
    %v5423 = vcombine.high %v5415, %v5415
    %v5424 = vcombine.high %v5422, %v5422
    %v5426 = vunpack.c.l.s4 1966171168
    %v5427 = vunpack.c.0.s8 %v5426
    %v5428 = vlaneseq
    %v5429 = vshrl.u32 %v5428, 7
    %v5430 = vsub.s32 %v5427, %v5429
    %v5431 = vrot.slane %v5415, %v5430
    %v5433 = vunpack.c.l.s4 1966171168
    %v5434 = vunpack.c.0.s8 %v5433
    %v5435 = vlaneseq
    %v5436 = vshrl.u32 %v5435, 7
    %v5437 = vsub.s32 %v5434, %v5436
    %v5438 = vrot.slane %v5422, %v5437
    %v5440 = vunpack.c.l.s4 1966171168
    %v5441 = vunpack.c.0.s8 %v5440
    %v5442 = vlaneseq
    %v5443 = vshrl.u32 %v5442, 7
    %v5444 = vsub.s32 %v5441, %v5443
    %v5445 = vrot.slane %v5423, %v5444
    %v5447 = vunpack.c.l.s4 1966171168
    %v5448 = vunpack.c.0.s8 %v5447
    %v5449 = vlaneseq
    %v5450 = vshrl.u32 %v5449, 7
    %v5451 = vsub.s32 %v5448, %v5450
    %v5452 = vrot.slane %v5424, %v5451
    %v5453 = vcombine.high %v5431, %v5431
    %v5454 = vcombine.high %v5438, %v5438
    %v5455 = vcombine.high %v5445, %v5445
    %v5512 = vmul.f32 %v4356, %v5095
    %v5513 = vmul.f32 %v4358, %v5109
    %v5514 = vmul.f32 %v4360, %v5117
    %v5515 = vmul.f32 %v4362, %v5119
    %v5516 = vmul.f32 %v4364, %v5102
    %v5517 = vmul.f32 %v4366, %v5116
    %v5518 = vmul.f32 %v4368, %v5118
    %v5519 = vmul.f32 %v4370, %v5143
    %v5520 = vmul.f32 %v4372, %v5157
    %v5521 = vmul.f32 %v4374, %v5165
    %v5522 = vmul.f32 %v4376, %v5167
    %v5523 = vmul.f32 %v4378, %v5150
    %v5524 = vmul.f32 %v4380, %v5164
    %v5525 = vmul.f32 %v4382, %v5166
    %v5526 = vmul.f32 %v4384, %v5191
    %v5527 = vmul.f32 %v4386, %v5205
    %v5528 = vmul.f32 %v4388, %v5213
    %v5529 = vmul.f32 %v4390, %v5215
    %v5530 = vmul.f32 %v4392, %v5198
    %v5531 = vmul.f32 %v4394, %v5212
    %v5532 = vmul.f32 %v4396, %v5214
    %v5533 = vmul.f32 %v4398, %v5239
    %v5534 = vmul.f32 %v4400, %v5253
    %v5535 = vmul.f32 %v4402, %v5261
    %v5536 = vmul.f32 %v4404, %v5263
    %v5537 = vmul.f32 %v4406, %v5246
    %v5538 = vmul.f32 %v4408, %v5260
    %v5539 = vmul.f32 %v4410, %v5262
    %v5540 = vmul.f32 %v4412, %v5287
    %v5541 = vmul.f32 %v4414, %v5301
    %v5542 = vmul.f32 %v4416, %v5309
    %v5543 = vmul.f32 %v4418, %v5311
    %v5544 = vmul.f32 %v4420, %v5294
    %v5545 = vmul.f32 %v4422, %v5308
    %v5546 = vmul.f32 %v4424, %v5310
    %v5547 = vmul.f32 %v4426, %v5335
    %v5548 = vmul.f32 %v4428, %v5349
    %v5549 = vmul.f32 %v4430, %v5357
    %v5550 = vmul.f32 %v4432, %v5359
    %v5551 = vmul.f32 %v4434, %v5342
    %v5552 = vmul.f32 %v4436, %v5356
    %v5553 = vmul.f32 %v4438, %v5358
    %v5554 = vmul.f32 %v4440, %v5383
    %v5555 = vmul.f32 %v4442, %v5397
    %v5556 = vmul.f32 %v4444, %v5405
    %v5557 = vmul.f32 %v4446, %v5407
    %v5558 = vmul.f32 %v4448, %v5390
    %v5559 = vmul.f32 %v4450, %v5404
    %v5560 = vmul.f32 %v4452, %v5406
    %v5561 = vmul.f32 %v4454, %v5431
    %v5562 = vmul.f32 %v4456, %v5445
    %v5563 = vmul.f32 %v4458, %v5453
    %v5564 = vmul.f32 %v4460, %v5455
    %v5565 = vmul.f32 %v4462, %v5438
    %v5566 = vmul.f32 %v4464, %v5452
    %v5567 = vmul.f32 %v4466, %v5454
    %vm5568 = vcmask 31744
    %v5570 = vsel %vm5568, %v4989, 0
    %vm5572 = vcmask 1043456
    %v5574 = vsel %vm5572, %v1333, 0
    %5576 = vmatprep.subr.mxu0 0.0
    %5577 = vmatpush1.msra.mxu0 %v5574
    %5578 = vmatprep.subr.mxu0 0.0
    %5579 = vmatpush1.msra.mxu0 0.0
    %5580 = vmatprep.subr.mxu0 0.0
    %5581 = vmatpush1.msra.mxu0 0.0
    %5582 = vmatprep.subr.mxu0 0.0
    %5583 = vmatpush1.msra.mxu0 0.0
    %5584 = vmatprep.subr.mxu0 0.0
    %5585 = vmatpush1.msra.mxu0 0.0
    %5586 = vmatprep.subr.mxu0 0.0
    %5587 = vmatpush1.msra.mxu0 0.0
    %5588 = vmatprep.subr.mxu0 0.0
    %5589 = vmatpush1.msra.mxu0 0.0
    %5590 = vmatprep.subr.mxu0 0.0
    %5591 = vmatpush1.msra.mxu0 0.0
    %5592 = vmatprep.subr.mxu0 0.0
    %5593 = vmatpush1.msra.mxu0 0.0
    %5594 = vmatprep.subr.mxu0 0.0
    %5595 = vmatpush1.msra.mxu0 0.0
    %5596 = vmatprep.subr.mxu0 0.0
    %5597 = vmatpush1.msra.mxu0 0.0
    %5598 = vmatprep.subr.mxu0 0.0
    %5599 = vmatpush1.msra.mxu0 0.0
    %5600 = vmatprep.subr.mxu0 0.0
    %5601 = vmatpush1.msra.mxu0 0.0
    %5602 = vmatprep.subr.mxu0 0.0
    %5603 = vmatpush1.msra.mxu0 0.0
    %5604 = vmatprep.subr.mxu0 0.0
    %5605 = vmatpush1.msra.mxu0 0.0
    %5606 = vmatprep.subr.mxu0 0.0
    %5607 = vmatpush1.msra.mxu0 0.0
    %5608 = vmatprep.subr.mxu0 0.0
    %5609 = vmatpush1.msra.mxu0 0.0
    %5610 = vmatprep.subr.mxu0 0.0
    %5611 = vmatpush1.msra.mxu0 0.0
    %5612 = vmatprep.subr.mxu0 0.0
    %5613 = vmatpush1.msra.mxu0 0.0
    %5614 = vmatprep.subr.mxu0 0.0
    %5615 = vmatpush1.msra.mxu0 0.0
    %5616 = vmatprep.subr.mxu0 0.0
    %5617 = vmatpush1.msra.mxu0 0.0
    %5618 = vmatprep.subr.mxu0 0.0
    %5619 = vmatpush1.msra.mxu0 0.0
    %5620 = vmatprep.subr.mxu0 0.0
    %5621 = vmatpush1.msra.mxu0 0.0
    %5622 = vmatprep.subr.mxu0 0.0
    %5623 = vmatpush1.msra.mxu0 0.0
    %5624 = vmatprep.subr.mxu0 0.0
    %5625 = vmatpush1.msra.mxu0 0.0
    %5626 = vmatprep.subr.mxu0 0.0
    %5627 = vmatpush1.msra.mxu0 0.0
    %5628 = vmatprep.subr.mxu0 0.0
    %5629 = vmatpush1.msra.mxu0 0.0
    %5630 = vmatprep.subr.mxu0 0.0
    %5631 = vmatpush1.msra.mxu0 0.0
    %5632 = vmatprep.subr.mxu0 0.0
    %5633 = vmatpush1.msra.mxu0 0.0
    %5634 = vmatprep.subr.mxu0 0.0
    %5635 = vmatpush1.msra.mxu0 0.0
    %5636 = vmatprep.subr.mxu0 0.0
    %5637 = vmatpush1.msra.mxu0 0.0
    %5638 = vmatprep.subr.mxu0 0.0
    %5639 = vmatpush1.msra.mxu0 0.0
    %5640 = vmatprep.mubr.f32.mxu0 0.0
    %5641 = vmatmul.mubr.f32.gmra.mrb[0].mxu0 %v5570
    %v5642 = vpop.f32.mrb[0].mxu0
    %v5643 = vadd.f32 0.0, %v5642
    %v5644 = vpop.f32.mrb[0].mxu0
    %5645 = vdwg.mxu0
    %v5702 = vcombine.low %v5512, %v5513
    %v5703 = vcombine.low %v5514, %v5515
    %v5704 = vcombine.low %v5516, %v5517
    %v5705 = vcombine.low %v5518, %v5519
    %v5707 = vunpack.c.l.s4 1966171168
    %v5708 = vunpack.c.0.s8 %v5707
    %v5709 = vlaneseq
    %v5710 = vshrl.u32 %v5709, 7
    %v5711 = vsub.s32 %v5708, %v5710
    %v5712 = vrot.slane %v5702, %v5711
    %v5714 = vunpack.c.l.s4 1966171168
    %v5715 = vunpack.c.0.s8 %v5714
    %v5716 = vlaneseq
    %v5717 = vshrl.u32 %v5716, 7
    %v5718 = vsub.s32 %v5715, %v5717
    %v5719 = vrot.slane %v5703, %v5718
    %v5721 = vunpack.c.l.s4 1966171168
    %v5722 = vunpack.c.0.s8 %v5721
    %v5723 = vlaneseq
    %v5724 = vshrl.u32 %v5723, 7
    %v5725 = vsub.s32 %v5722, %v5724
    %v5726 = vrot.slane %v5704, %v5725
    %v5728 = vunpack.c.l.s4 1966171168
    %v5729 = vunpack.c.0.s8 %v5728
    %v5730 = vlaneseq
    %v5731 = vshrl.u32 %v5730, 7
    %v5732 = vsub.s32 %v5729, %v5731
    %v5733 = vrot.slane %v5705, %v5732
    %v5734 = vcombine.low %v5712, %v5719
    %v5735 = vcombine.low %v5726, %v5733
    %v5737 = vunpack.c.l.s4 1966171168
    %v5738 = vunpack.c.0.s8 %v5737
    %v5739 = vlaneseq
    %v5740 = vshrl.u32 %v5739, 7
    %v5741 = vsub.s32 %v5738, %v5740
    %v5742 = vrot.slane %v5734, %v5741
    %v5744 = vunpack.c.l.s4 1966171168
    %v5745 = vunpack.c.0.s8 %v5744
    %v5746 = vlaneseq
    %v5747 = vshrl.u32 %v5746, 7
    %v5748 = vsub.s32 %v5745, %v5747
    %v5749 = vrot.slane %v5735, %v5748
    %v5750 = vcombine.low %v5742, %v5749
    %v5751 = vcombine.low %v5520, %v5521
    %v5752 = vcombine.low %v5522, %v5523
    %v5753 = vcombine.low %v5524, %v5525
    %v5754 = vcombine.low %v5526, %v5527
    %v5756 = vunpack.c.l.s4 1966171168
    %v5757 = vunpack.c.0.s8 %v5756
    %v5758 = vlaneseq
    %v5759 = vshrl.u32 %v5758, 7
    %v5760 = vsub.s32 %v5757, %v5759
    %v5761 = vrot.slane %v5751, %v5760
    %v5763 = vunpack.c.l.s4 1966171168
    %v5764 = vunpack.c.0.s8 %v5763
    %v5765 = vlaneseq
    %v5766 = vshrl.u32 %v5765, 7
    %v5767 = vsub.s32 %v5764, %v5766
    %v5768 = vrot.slane %v5752, %v5767
    %v5770 = vunpack.c.l.s4 1966171168
    %v5771 = vunpack.c.0.s8 %v5770
    %v5772 = vlaneseq
    %v5773 = vshrl.u32 %v5772, 7
    %v5774 = vsub.s32 %v5771, %v5773
    %v5775 = vrot.slane %v5753, %v5774
    %v5777 = vunpack.c.l.s4 1966171168
    %v5778 = vunpack.c.0.s8 %v5777
    %v5779 = vlaneseq
    %v5780 = vshrl.u32 %v5779, 7
    %v5781 = vsub.s32 %v5778, %v5780
    %v5782 = vrot.slane %v5754, %v5781
    %v5783 = vcombine.low %v5761, %v5768
    %v5784 = vcombine.low %v5775, %v5782
    %v5786 = vunpack.c.l.s4 1966171168
    %v5787 = vunpack.c.0.s8 %v5786
    %v5788 = vlaneseq
    %v5789 = vshrl.u32 %v5788, 7
    %v5790 = vsub.s32 %v5787, %v5789
    %v5791 = vrot.slane %v5783, %v5790
    %v5793 = vunpack.c.l.s4 1966171168
    %v5794 = vunpack.c.0.s8 %v5793
    %v5795 = vlaneseq
    %v5796 = vshrl.u32 %v5795, 7
    %v5797 = vsub.s32 %v5794, %v5796
    %v5798 = vrot.slane %v5784, %v5797
    %v5799 = vcombine.low %v5791, %v5798
    %v5800 = vcombine.low %v5528, %v5529
    %v5801 = vcombine.low %v5530, %v5531
    %v5802 = vcombine.low %v5532, %v5533
    %v5803 = vcombine.low %v5534, %v5535
    %v5805 = vunpack.c.l.s4 1966171168
    %v5806 = vunpack.c.0.s8 %v5805
    %v5807 = vlaneseq
    %v5808 = vshrl.u32 %v5807, 7
    %v5809 = vsub.s32 %v5806, %v5808
    %v5810 = vrot.slane %v5800, %v5809
    %v5812 = vunpack.c.l.s4 1966171168
    %v5813 = vunpack.c.0.s8 %v5812
    %v5814 = vlaneseq
    %v5815 = vshrl.u32 %v5814, 7
    %v5816 = vsub.s32 %v5813, %v5815
    %v5817 = vrot.slane %v5801, %v5816
    %v5819 = vunpack.c.l.s4 1966171168
    %v5820 = vunpack.c.0.s8 %v5819
    %v5821 = vlaneseq
    %v5822 = vshrl.u32 %v5821, 7
    %v5823 = vsub.s32 %v5820, %v5822
    %v5824 = vrot.slane %v5802, %v5823
    %v5826 = vunpack.c.l.s4 1966171168
    %v5827 = vunpack.c.0.s8 %v5826
    %v5828 = vlaneseq
    %v5829 = vshrl.u32 %v5828, 7
    %v5830 = vsub.s32 %v5827, %v5829
    %v5831 = vrot.slane %v5803, %v5830
    %v5832 = vcombine.low %v5810, %v5817
    %v5833 = vcombine.low %v5824, %v5831
    %v5835 = vunpack.c.l.s4 1966171168
    %v5836 = vunpack.c.0.s8 %v5835
    %v5837 = vlaneseq
    %v5838 = vshrl.u32 %v5837, 7
    %v5839 = vsub.s32 %v5836, %v5838
    %v5840 = vrot.slane %v5832, %v5839
    %v5842 = vunpack.c.l.s4 1966171168
    %v5843 = vunpack.c.0.s8 %v5842
    %v5844 = vlaneseq
    %v5845 = vshrl.u32 %v5844, 7
    %v5846 = vsub.s32 %v5843, %v5845
    %v5847 = vrot.slane %v5833, %v5846
    %v5848 = vcombine.low %v5840, %v5847
    %v5849 = vcombine.low %v5536, %v5537
    %v5850 = vcombine.low %v5538, %v5539
    %v5851 = vcombine.low %v5540, %v5541
    %v5852 = vcombine.low %v5542, %v5543
    %v5854 = vunpack.c.l.s4 1966171168
    %v5855 = vunpack.c.0.s8 %v5854
    %v5856 = vlaneseq
    %v5857 = vshrl.u32 %v5856, 7
    %v5858 = vsub.s32 %v5855, %v5857
    %v5859 = vrot.slane %v5849, %v5858
    %v5861 = vunpack.c.l.s4 1966171168
    %v5862 = vunpack.c.0.s8 %v5861
    %v5863 = vlaneseq
    %v5864 = vshrl.u32 %v5863, 7
    %v5865 = vsub.s32 %v5862, %v5864
    %v5866 = vrot.slane %v5850, %v5865
    %v5868 = vunpack.c.l.s4 1966171168
    %v5869 = vunpack.c.0.s8 %v5868
    %v5870 = vlaneseq
    %v5871 = vshrl.u32 %v5870, 7
    %v5872 = vsub.s32 %v5869, %v5871
    %v5873 = vrot.slane %v5851, %v5872
    %v5875 = vunpack.c.l.s4 1966171168
    %v5876 = vunpack.c.0.s8 %v5875
    %v5877 = vlaneseq
    %v5878 = vshrl.u32 %v5877, 7
    %v5879 = vsub.s32 %v5876, %v5878
    %v5880 = vrot.slane %v5852, %v5879
    %v5881 = vcombine.low %v5859, %v5866
    %v5882 = vcombine.low %v5873, %v5880
    %v5884 = vunpack.c.l.s4 1966171168
    %v5885 = vunpack.c.0.s8 %v5884
    %v5886 = vlaneseq
    %v5887 = vshrl.u32 %v5886, 7
    %v5888 = vsub.s32 %v5885, %v5887
    %v5889 = vrot.slane %v5881, %v5888
    %v5891 = vunpack.c.l.s4 1966171168
    %v5892 = vunpack.c.0.s8 %v5891
    %v5893 = vlaneseq
    %v5894 = vshrl.u32 %v5893, 7
    %v5895 = vsub.s32 %v5892, %v5894
    %v5896 = vrot.slane %v5882, %v5895
    %v5897 = vcombine.low %v5889, %v5896
    %v5898 = vcombine.low %v5544, %v5545
    %v5899 = vcombine.low %v5546, %v5547
    %v5900 = vcombine.low %v5548, %v5549
    %v5901 = vcombine.low %v5550, %v5551
    %v5903 = vunpack.c.l.s4 1966171168
    %v5904 = vunpack.c.0.s8 %v5903
    %v5905 = vlaneseq
    %v5906 = vshrl.u32 %v5905, 7
    %v5907 = vsub.s32 %v5904, %v5906
    %v5908 = vrot.slane %v5898, %v5907
    %v5910 = vunpack.c.l.s4 1966171168
    %v5911 = vunpack.c.0.s8 %v5910
    %v5912 = vlaneseq
    %v5913 = vshrl.u32 %v5912, 7
    %v5914 = vsub.s32 %v5911, %v5913
    %v5915 = vrot.slane %v5899, %v5914
    %v5917 = vunpack.c.l.s4 1966171168
    %v5918 = vunpack.c.0.s8 %v5917
    %v5919 = vlaneseq
    %v5920 = vshrl.u32 %v5919, 7
    %v5921 = vsub.s32 %v5918, %v5920
    %v5922 = vrot.slane %v5900, %v5921
    %v5924 = vunpack.c.l.s4 1966171168
    %v5925 = vunpack.c.0.s8 %v5924
    %v5926 = vlaneseq
    %v5927 = vshrl.u32 %v5926, 7
    %v5928 = vsub.s32 %v5925, %v5927
    %v5929 = vrot.slane %v5901, %v5928
    %v5930 = vcombine.low %v5908, %v5915
    %v5931 = vcombine.low %v5922, %v5929
    %v5933 = vunpack.c.l.s4 1966171168
    %v5934 = vunpack.c.0.s8 %v5933
    %v5935 = vlaneseq
    %v5936 = vshrl.u32 %v5935, 7
    %v5937 = vsub.s32 %v5934, %v5936
    %v5938 = vrot.slane %v5930, %v5937
    %v5940 = vunpack.c.l.s4 1966171168
    %v5941 = vunpack.c.0.s8 %v5940
    %v5942 = vlaneseq
    %v5943 = vshrl.u32 %v5942, 7
    %v5944 = vsub.s32 %v5941, %v5943
    %v5945 = vrot.slane %v5931, %v5944
    %v5946 = vcombine.low %v5938, %v5945
    %v5947 = vcombine.low %v5552, %v5553
    %v5948 = vcombine.low %v5554, %v5555
    %v5949 = vcombine.low %v5556, %v5557
    %v5950 = vcombine.low %v5558, %v5559
    %v5952 = vunpack.c.l.s4 1966171168
    %v5953 = vunpack.c.0.s8 %v5952
    %v5954 = vlaneseq
    %v5955 = vshrl.u32 %v5954, 7
    %v5956 = vsub.s32 %v5953, %v5955
    %v5957 = vrot.slane %v5947, %v5956
    %v5959 = vunpack.c.l.s4 1966171168
    %v5960 = vunpack.c.0.s8 %v5959
    %v5961 = vlaneseq
    %v5962 = vshrl.u32 %v5961, 7
    %v5963 = vsub.s32 %v5960, %v5962
    %v5964 = vrot.slane %v5948, %v5963
    %v5966 = vunpack.c.l.s4 1966171168
    %v5967 = vunpack.c.0.s8 %v5966
    %v5968 = vlaneseq
    %v5969 = vshrl.u32 %v5968, 7
    %v5970 = vsub.s32 %v5967, %v5969
    %v5971 = vrot.slane %v5949, %v5970
    %v5973 = vunpack.c.l.s4 1966171168
    %v5974 = vunpack.c.0.s8 %v5973
    %v5975 = vlaneseq
    %v5976 = vshrl.u32 %v5975, 7
    %v5977 = vsub.s32 %v5974, %v5976
    %v5978 = vrot.slane %v5950, %v5977
    %v5979 = vcombine.low %v5957, %v5964
    %v5980 = vcombine.low %v5971, %v5978
    %v5982 = vunpack.c.l.s4 1966171168
    %v5983 = vunpack.c.0.s8 %v5982
    %v5984 = vlaneseq
    %v5985 = vshrl.u32 %v5984, 7
    %v5986 = vsub.s32 %v5983, %v5985
    %v5987 = vrot.slane %v5979, %v5986
    %v5989 = vunpack.c.l.s4 1966171168
    %v5990 = vunpack.c.0.s8 %v5989
    %v5991 = vlaneseq
    %v5992 = vshrl.u32 %v5991, 7
    %v5993 = vsub.s32 %v5990, %v5992
    %v5994 = vrot.slane %v5980, %v5993
    %v5995 = vcombine.low %v5987, %v5994
    %v5996 = vcombine.low %v5560, %v5561
    %v5997 = vcombine.low %v5562, %v5563
    %v5998 = vcombine.low %v5564, %v5565
    %v5999 = vcombine.low %v5566, %v5567
    %v6001 = vunpack.c.l.s4 1966171168
    %v6002 = vunpack.c.0.s8 %v6001
    %v6003 = vlaneseq
    %v6004 = vshrl.u32 %v6003, 7
    %v6005 = vsub.s32 %v6002, %v6004
    %v6006 = vrot.slane %v5996, %v6005
    %v6008 = vunpack.c.l.s4 1966171168
    %v6009 = vunpack.c.0.s8 %v6008
    %v6010 = vlaneseq
    %v6011 = vshrl.u32 %v6010, 7
    %v6012 = vsub.s32 %v6009, %v6011
    %v6013 = vrot.slane %v5997, %v6012
    %v6015 = vunpack.c.l.s4 1966171168
    %v6016 = vunpack.c.0.s8 %v6015
    %v6017 = vlaneseq
    %v6018 = vshrl.u32 %v6017, 7
    %v6019 = vsub.s32 %v6016, %v6018
    %v6020 = vrot.slane %v5998, %v6019
    %v6022 = vunpack.c.l.s4 1966171168
    %v6023 = vunpack.c.0.s8 %v6022
    %v6024 = vlaneseq
    %v6025 = vshrl.u32 %v6024, 7
    %v6026 = vsub.s32 %v6023, %v6025
    %v6027 = vrot.slane %v5999, %v6026
    %v6028 = vcombine.low %v6006, %v6013
    %v6029 = vcombine.low %v6020, %v6027
    %v6031 = vunpack.c.l.s4 1966171168
    %v6032 = vunpack.c.0.s8 %v6031
    %v6033 = vlaneseq
    %v6034 = vshrl.u32 %v6033, 7
    %v6035 = vsub.s32 %v6032, %v6034
    %v6036 = vrot.slane %v6028, %v6035
    %v6038 = vunpack.c.l.s4 1966171168
    %v6039 = vunpack.c.0.s8 %v6038
    %v6040 = vlaneseq
    %v6041 = vshrl.u32 %v6040, 7
    %v6042 = vsub.s32 %v6039, %v6041
    %v6043 = vrot.slane %v6029, %v6042
    %v6044 = vcombine.low %v6036, %v6043
    %v6045 = vsel %vm5568, %v5750, 0
    %v6047 = vsel %vm5568, %v5799, 0
    %v6049 = vsel %vm5568, %v5848, 0
    %v6051 = vsel %vm5568, %v5897, 0
    %v6053 = vsel %vm5568, %v5946, 0
    %v6055 = vsel %vm5568, %v5995, 0
    %v6057 = vsel %vm5568, %v6044, 0
    %6059 = vmatprep.subr.mxu0 0.0
    %6060 = vmatpush1.msra.mxu0 %v5574
    %6061 = vmatprep.subr.mxu0 0.0
    %6062 = vmatpush1.msra.mxu0 0.0
    %6063 = vmatprep.subr.mxu0 0.0
    %6064 = vmatpush1.msra.mxu0 0.0
    %6065 = vmatprep.subr.mxu0 0.0
    %6066 = vmatpush1.msra.mxu0 0.0
    %6067 = vmatprep.subr.mxu0 0.0
    %6068 = vmatpush1.msra.mxu0 0.0
    %6069 = vmatprep.subr.mxu0 0.0
    %6070 = vmatpush1.msra.mxu0 0.0
    %6071 = vmatprep.subr.mxu0 0.0
    %6072 = vmatpush1.msra.mxu0 0.0
    %6073 = vmatprep.subr.mxu0 0.0
    %6074 = vmatpush1.msra.mxu0 0.0
    %6075 = vmatprep.subr.mxu0 0.0
    %6076 = vmatpush1.msra.mxu0 0.0
    %6077 = vmatprep.subr.mxu0 0.0
    %6078 = vmatpush1.msra.mxu0 0.0
    %6079 = vmatprep.subr.mxu0 0.0
    %6080 = vmatpush1.msra.mxu0 0.0
    %6081 = vmatprep.subr.mxu0 0.0
    %6082 = vmatpush1.msra.mxu0 0.0
    %6083 = vmatprep.subr.mxu0 0.0
    %6084 = vmatpush1.msra.mxu0 0.0
    %6085 = vmatprep.subr.mxu0 0.0
    %6086 = vmatpush1.msra.mxu0 0.0
    %6087 = vmatprep.subr.mxu0 0.0
    %6088 = vmatpush1.msra.mxu0 0.0
    %6089 = vmatprep.subr.mxu0 0.0
    %6090 = vmatpush1.msra.mxu0 0.0
    %6091 = vmatprep.subr.mxu0 0.0
    %6092 = vmatpush1.msra.mxu0 0.0
    %6093 = vmatprep.subr.mxu0 0.0
    %6094 = vmatpush1.msra.mxu0 0.0
    %6095 = vmatprep.subr.mxu0 0.0
    %6096 = vmatpush1.msra.mxu0 0.0
    %6097 = vmatprep.subr.mxu0 0.0
    %6098 = vmatpush1.msra.mxu0 0.0
    %6099 = vmatprep.subr.mxu0 0.0
    %6100 = vmatpush1.msra.mxu0 0.0
    %6101 = vmatprep.subr.mxu0 0.0
    %6102 = vmatpush1.msra.mxu0 0.0
    %6103 = vmatprep.subr.mxu0 0.0
    %6104 = vmatpush1.msra.mxu0 0.0
    %6105 = vmatprep.subr.mxu0 0.0
    %6106 = vmatpush1.msra.mxu0 0.0
    %6107 = vmatprep.subr.mxu0 0.0
    %6108 = vmatpush1.msra.mxu0 0.0
    %6109 = vmatprep.subr.mxu0 0.0
    %6110 = vmatpush1.msra.mxu0 0.0
    %6111 = vmatprep.subr.mxu0 0.0
    %6112 = vmatpush1.msra.mxu0 0.0
    %6113 = vmatprep.subr.mxu0 0.0
    %6114 = vmatpush1.msra.mxu0 0.0
    %6115 = vmatprep.subr.mxu0 0.0
    %6116 = vmatpush1.msra.mxu0 0.0
    %6117 = vmatprep.subr.mxu0 0.0
    %6118 = vmatpush1.msra.mxu0 0.0
    %6119 = vmatprep.subr.mxu0 0.0
    %6120 = vmatpush1.msra.mxu0 0.0
    %6121 = vmatprep.subr.mxu0 0.0
    %6122 = vmatpush1.msra.mxu0 0.0
    %6123 = vmatprep.mubr.f32.mxu0 0.0
    %6124 = vmatmul.mubr.f32.gmra.mrb[0].mxu0 %v6045
    %v6125 = vpop.f32.mrb[0].mxu0
    %v6126 = vadd.f32 0.0, %v6125
    %v6127 = vpop.f32.mrb[0].mxu0
    %6128 = vmatprep.mubr.f32.mxu0 0.0
    %6129 = vmatmul.mubr.f32.gmra.mrb[0].mxu0 %v6047
    %v6130 = vpop.f32.mrb[0].mxu0
    %v6131 = vadd.f32 0.0, %v6130
    %v6132 = vpop.f32.mrb[0].mxu0
    %6133 = vmatprep.mubr.f32.mxu0 0.0
    %6134 = vmatmul.mubr.f32.gmra.mrb[0].mxu0 %v6049
    %v6135 = vpop.f32.mrb[0].mxu0
    %v6136 = vadd.f32 0.0, %v6135
    %v6137 = vpop.f32.mrb[0].mxu0
    %6138 = vmatprep.mubr.f32.mxu0 0.0
    %6139 = vmatmul.mubr.f32.gmra.mrb[0].mxu0 %v6051
    %v6140 = vpop.f32.mrb[0].mxu0
    %v6141 = vadd.f32 0.0, %v6140
    %v6142 = vpop.f32.mrb[0].mxu0
    %6143 = vmatprep.mubr.f32.mxu0 0.0
    %6144 = vmatmul.mubr.f32.gmra.mrb[0].mxu0 %v6053
    %v6145 = vpop.f32.mrb[0].mxu0
    %v6146 = vadd.f32 0.0, %v6145
    %v6147 = vpop.f32.mrb[0].mxu0
    %6148 = vmatprep.mubr.f32.mxu0 0.0
    %6149 = vmatmul.mubr.f32.gmra.mrb[0].mxu0 %v6055
    %v6150 = vpop.f32.mrb[0].mxu0
    %v6151 = vadd.f32 0.0, %v6150
    %v6152 = vpop.f32.mrb[0].mxu0
    %6153 = vmatprep.mubr.f32.mxu0 0.0
    %6154 = vmatmul.mubr.f32.gmra.mrb[0].mxu0 %v6057
    %v6155 = vpop.f32.mrb[0].mxu0
    %v6156 = vadd.f32 0.0, %v6155
    %v6157 = vpop.f32.mrb[0].mxu0
    %6158 = vdwg.mxu0
    %v6166 = vcombine.high %v6126, %v6126
    %v6168 = vunpack.c.l.s4 1966171168
    %v6169 = vunpack.c.0.s8 %v6168
    %v6170 = vlaneseq
    %v6171 = vshrl.u32 %v6170, 7
    %v6172 = vsub.s32 %v6169, %v6171
    %v6173 = vrot.slane %v6126, %v6172
    %v6175 = vunpack.c.l.s4 1966171168
    %v6176 = vunpack.c.0.s8 %v6175
    %v6177 = vlaneseq
    %v6178 = vshrl.u32 %v6177, 7
    %v6179 = vsub.s32 %v6176, %v6178
    %v6180 = vrot.slane %v6166, %v6179
    %v6181 = vcombine.high %v6173, %v6173
    %v6182 = vcombine.high %v6180, %v6180
    %v6184 = vunpack.c.l.s4 1966171168
    %v6185 = vunpack.c.0.s8 %v6184
    %v6186 = vlaneseq
    %v6187 = vshrl.u32 %v6186, 7
    %v6188 = vsub.s32 %v6185, %v6187
    %v6189 = vrot.slane %v6173, %v6188
    %v6191 = vunpack.c.l.s4 1966171168
    %v6192 = vunpack.c.0.s8 %v6191
    %v6193 = vlaneseq
    %v6194 = vshrl.u32 %v6193, 7
    %v6195 = vsub.s32 %v6192, %v6194
    %v6196 = vrot.slane %v6180, %v6195
    %v6198 = vunpack.c.l.s4 1966171168
    %v6199 = vunpack.c.0.s8 %v6198
    %v6200 = vlaneseq
    %v6201 = vshrl.u32 %v6200, 7
    %v6202 = vsub.s32 %v6199, %v6201
    %v6203 = vrot.slane %v6181, %v6202
    %v6205 = vunpack.c.l.s4 1966171168
    %v6206 = vunpack.c.0.s8 %v6205
    %v6207 = vlaneseq
    %v6208 = vshrl.u32 %v6207, 7
    %v6209 = vsub.s32 %v6206, %v6208
    %v6210 = vrot.slane %v6182, %v6209
    %v6211 = vcombine.high %v6189, %v6189
    %v6212 = vcombine.high %v6196, %v6196
    %v6213 = vcombine.high %v6203, %v6203
    %v6214 = vcombine.high %v6210, %v6210
    %v6215 = vcombine.high %v6131, %v6131
    %v6217 = vunpack.c.l.s4 1966171168
    %v6218 = vunpack.c.0.s8 %v6217
    %v6219 = vlaneseq
    %v6220 = vshrl.u32 %v6219, 7
    %v6221 = vsub.s32 %v6218, %v6220
    %v6222 = vrot.slane %v6131, %v6221
    %v6224 = vunpack.c.l.s4 1966171168
    %v6225 = vunpack.c.0.s8 %v6224
    %v6226 = vlaneseq
    %v6227 = vshrl.u32 %v6226, 7
    %v6228 = vsub.s32 %v6225, %v6227
    %v6229 = vrot.slane %v6215, %v6228
    %v6230 = vcombine.high %v6222, %v6222
    %v6231 = vcombine.high %v6229, %v6229
    %v6233 = vunpack.c.l.s4 1966171168
    %v6234 = vunpack.c.0.s8 %v6233
    %v6235 = vlaneseq
    %v6236 = vshrl.u32 %v6235, 7
    %v6237 = vsub.s32 %v6234, %v6236
    %v6238 = vrot.slane %v6222, %v6237
    %v6240 = vunpack.c.l.s4 1966171168
    %v6241 = vunpack.c.0.s8 %v6240
    %v6242 = vlaneseq
    %v6243 = vshrl.u32 %v6242, 7
    %v6244 = vsub.s32 %v6241, %v6243
    %v6245 = vrot.slane %v6229, %v6244
    %v6247 = vunpack.c.l.s4 1966171168
    %v6248 = vunpack.c.0.s8 %v6247
    %v6249 = vlaneseq
    %v6250 = vshrl.u32 %v6249, 7
    %v6251 = vsub.s32 %v6248, %v6250
    %v6252 = vrot.slane %v6230, %v6251
    %v6254 = vunpack.c.l.s4 1966171168
    %v6255 = vunpack.c.0.s8 %v6254
    %v6256 = vlaneseq
    %v6257 = vshrl.u32 %v6256, 7
    %v6258 = vsub.s32 %v6255, %v6257
    %v6259 = vrot.slane %v6231, %v6258
    %v6260 = vcombine.high %v6238, %v6238
    %v6261 = vcombine.high %v6245, %v6245
    %v6262 = vcombine.high %v6252, %v6252
    %v6263 = vcombine.high %v6259, %v6259
    %v6264 = vcombine.high %v6136, %v6136
    %v6266 = vunpack.c.l.s4 1966171168
    %v6267 = vunpack.c.0.s8 %v6266
    %v6268 = vlaneseq
    %v6269 = vshrl.u32 %v6268, 7
    %v6270 = vsub.s32 %v6267, %v6269
    %v6271 = vrot.slane %v6136, %v6270
    %v6273 = vunpack.c.l.s4 1966171168
    %v6274 = vunpack.c.0.s8 %v6273
    %v6275 = vlaneseq
    %v6276 = vshrl.u32 %v6275, 7
    %v6277 = vsub.s32 %v6274, %v6276
    %v6278 = vrot.slane %v6264, %v6277
    %v6279 = vcombine.high %v6271, %v6271
    %v6280 = vcombine.high %v6278, %v6278
    %v6282 = vunpack.c.l.s4 1966171168
    %v6283 = vunpack.c.0.s8 %v6282
    %v6284 = vlaneseq
    %v6285 = vshrl.u32 %v6284, 7
    %v6286 = vsub.s32 %v6283, %v6285
    %v6287 = vrot.slane %v6271, %v6286
    %v6289 = vunpack.c.l.s4 1966171168
    %v6290 = vunpack.c.0.s8 %v6289
    %v6291 = vlaneseq
    %v6292 = vshrl.u32 %v6291, 7
    %v6293 = vsub.s32 %v6290, %v6292
    %v6294 = vrot.slane %v6278, %v6293
    %v6296 = vunpack.c.l.s4 1966171168
    %v6297 = vunpack.c.0.s8 %v6296
    %v6298 = vlaneseq
    %v6299 = vshrl.u32 %v6298, 7
    %v6300 = vsub.s32 %v6297, %v6299
    %v6301 = vrot.slane %v6279, %v6300
    %v6303 = vunpack.c.l.s4 1966171168
    %v6304 = vunpack.c.0.s8 %v6303
    %v6305 = vlaneseq
    %v6306 = vshrl.u32 %v6305, 7
    %v6307 = vsub.s32 %v6304, %v6306
    %v6308 = vrot.slane %v6280, %v6307
    %v6309 = vcombine.high %v6287, %v6287
    %v6310 = vcombine.high %v6294, %v6294
    %v6311 = vcombine.high %v6301, %v6301
    %v6312 = vcombine.high %v6308, %v6308
    %v6313 = vcombine.high %v6141, %v6141
    %v6315 = vunpack.c.l.s4 1966171168
    %v6316 = vunpack.c.0.s8 %v6315
    %v6317 = vlaneseq
    %v6318 = vshrl.u32 %v6317, 7
    %v6319 = vsub.s32 %v6316, %v6318
    %v6320 = vrot.slane %v6141, %v6319
    %v6322 = vunpack.c.l.s4 1966171168
    %v6323 = vunpack.c.0.s8 %v6322
    %v6324 = vlaneseq
    %v6325 = vshrl.u32 %v6324, 7
    %v6326 = vsub.s32 %v6323, %v6325
    %v6327 = vrot.slane %v6313, %v6326
    %v6328 = vcombine.high %v6320, %v6320
    %v6329 = vcombine.high %v6327, %v6327
    %v6331 = vunpack.c.l.s4 1966171168
    %v6332 = vunpack.c.0.s8 %v6331
    %v6333 = vlaneseq
    %v6334 = vshrl.u32 %v6333, 7
    %v6335 = vsub.s32 %v6332, %v6334
    %v6336 = vrot.slane %v6320, %v6335
    %v6338 = vunpack.c.l.s4 1966171168
    %v6339 = vunpack.c.0.s8 %v6338
    %v6340 = vlaneseq
    %v6341 = vshrl.u32 %v6340, 7
    %v6342 = vsub.s32 %v6339, %v6341
    %v6343 = vrot.slane %v6327, %v6342
    %v6345 = vunpack.c.l.s4 1966171168
    %v6346 = vunpack.c.0.s8 %v6345
    %v6347 = vlaneseq
    %v6348 = vshrl.u32 %v6347, 7
    %v6349 = vsub.s32 %v6346, %v6348
    %v6350 = vrot.slane %v6328, %v6349
    %v6352 = vunpack.c.l.s4 1966171168
    %v6353 = vunpack.c.0.s8 %v6352
    %v6354 = vlaneseq
    %v6355 = vshrl.u32 %v6354, 7
    %v6356 = vsub.s32 %v6353, %v6355
    %v6357 = vrot.slane %v6329, %v6356
    %v6358 = vcombine.high %v6336, %v6336
    %v6359 = vcombine.high %v6343, %v6343
    %v6360 = vcombine.high %v6350, %v6350
    %v6361 = vcombine.high %v6357, %v6357
    %v6362 = vcombine.high %v6146, %v6146
    %v6364 = vunpack.c.l.s4 1966171168
    %v6365 = vunpack.c.0.s8 %v6364
    %v6366 = vlaneseq
    %v6367 = vshrl.u32 %v6366, 7
    %v6368 = vsub.s32 %v6365, %v6367
    %v6369 = vrot.slane %v6146, %v6368
    %v6371 = vunpack.c.l.s4 1966171168
    %v6372 = vunpack.c.0.s8 %v6371
    %v6373 = vlaneseq
    %v6374 = vshrl.u32 %v6373, 7
    %v6375 = vsub.s32 %v6372, %v6374
    %v6376 = vrot.slane %v6362, %v6375
    %v6377 = vcombine.high %v6369, %v6369
    %v6378 = vcombine.high %v6376, %v6376
    %v6380 = vunpack.c.l.s4 1966171168
    %v6381 = vunpack.c.0.s8 %v6380
    %v6382 = vlaneseq
    %v6383 = vshrl.u32 %v6382, 7
    %v6384 = vsub.s32 %v6381, %v6383
    %v6385 = vrot.slane %v6369, %v6384
    %v6387 = vunpack.c.l.s4 1966171168
    %v6388 = vunpack.c.0.s8 %v6387
    %v6389 = vlaneseq
    %v6390 = vshrl.u32 %v6389, 7
    %v6391 = vsub.s32 %v6388, %v6390
    %v6392 = vrot.slane %v6376, %v6391
    %v6394 = vunpack.c.l.s4 1966171168
    %v6395 = vunpack.c.0.s8 %v6394
    %v6396 = vlaneseq
    %v6397 = vshrl.u32 %v6396, 7
    %v6398 = vsub.s32 %v6395, %v6397
    %v6399 = vrot.slane %v6377, %v6398
    %v6401 = vunpack.c.l.s4 1966171168
    %v6402 = vunpack.c.0.s8 %v6401
    %v6403 = vlaneseq
    %v6404 = vshrl.u32 %v6403, 7
    %v6405 = vsub.s32 %v6402, %v6404
    %v6406 = vrot.slane %v6378, %v6405
    %v6407 = vcombine.high %v6385, %v6385
    %v6408 = vcombine.high %v6392, %v6392
    %v6409 = vcombine.high %v6399, %v6399
    %v6410 = vcombine.high %v6406, %v6406
    %v6411 = vcombine.high %v6151, %v6151
    %v6413 = vunpack.c.l.s4 1966171168
    %v6414 = vunpack.c.0.s8 %v6413
    %v6415 = vlaneseq
    %v6416 = vshrl.u32 %v6415, 7
    %v6417 = vsub.s32 %v6414, %v6416
    %v6418 = vrot.slane %v6151, %v6417
    %v6420 = vunpack.c.l.s4 1966171168
    %v6421 = vunpack.c.0.s8 %v6420
    %v6422 = vlaneseq
    %v6423 = vshrl.u32 %v6422, 7
    %v6424 = vsub.s32 %v6421, %v6423
    %v6425 = vrot.slane %v6411, %v6424
    %v6426 = vcombine.high %v6418, %v6418
    %v6427 = vcombine.high %v6425, %v6425
    %v6429 = vunpack.c.l.s4 1966171168
    %v6430 = vunpack.c.0.s8 %v6429
    %v6431 = vlaneseq
    %v6432 = vshrl.u32 %v6431, 7
    %v6433 = vsub.s32 %v6430, %v6432
    %v6434 = vrot.slane %v6418, %v6433
    %v6436 = vunpack.c.l.s4 1966171168
    %v6437 = vunpack.c.0.s8 %v6436
    %v6438 = vlaneseq
    %v6439 = vshrl.u32 %v6438, 7
    %v6440 = vsub.s32 %v6437, %v6439
    %v6441 = vrot.slane %v6425, %v6440
    %v6443 = vunpack.c.l.s4 1966171168
    %v6444 = vunpack.c.0.s8 %v6443
    %v6445 = vlaneseq
    %v6446 = vshrl.u32 %v6445, 7
    %v6447 = vsub.s32 %v6444, %v6446
    %v6448 = vrot.slane %v6426, %v6447
    %v6450 = vunpack.c.l.s4 1966171168
    %v6451 = vunpack.c.0.s8 %v6450
    %v6452 = vlaneseq
    %v6453 = vshrl.u32 %v6452, 7
    %v6454 = vsub.s32 %v6451, %v6453
    %v6455 = vrot.slane %v6427, %v6454
    %v6456 = vcombine.high %v6434, %v6434
    %v6457 = vcombine.high %v6441, %v6441
    %v6458 = vcombine.high %v6448, %v6448
    %v6459 = vcombine.high %v6455, %v6455
    %v6460 = vcombine.high %v6156, %v6156
    %v6462 = vunpack.c.l.s4 1966171168
    %v6463 = vunpack.c.0.s8 %v6462
    %v6464 = vlaneseq
    %v6465 = vshrl.u32 %v6464, 7
    %v6466 = vsub.s32 %v6463, %v6465
    %v6467 = vrot.slane %v6156, %v6466
    %v6469 = vunpack.c.l.s4 1966171168
    %v6470 = vunpack.c.0.s8 %v6469
    %v6471 = vlaneseq
    %v6472 = vshrl.u32 %v6471, 7
    %v6473 = vsub.s32 %v6470, %v6472
    %v6474 = vrot.slane %v6460, %v6473
    %v6475 = vcombine.high %v6467, %v6467
    %v6476 = vcombine.high %v6474, %v6474
    %v6478 = vunpack.c.l.s4 1966171168
    %v6479 = vunpack.c.0.s8 %v6478
    %v6480 = vlaneseq
    %v6481 = vshrl.u32 %v6480, 7
    %v6482 = vsub.s32 %v6479, %v6481
    %v6483 = vrot.slane %v6467, %v6482
    %v6485 = vunpack.c.l.s4 1966171168
    %v6486 = vunpack.c.0.s8 %v6485
    %v6487 = vlaneseq
    %v6488 = vshrl.u32 %v6487, 7
    %v6489 = vsub.s32 %v6486, %v6488
    %v6490 = vrot.slane %v6474, %v6489
    %v6492 = vunpack.c.l.s4 1966171168
    %v6493 = vunpack.c.0.s8 %v6492
    %v6494 = vlaneseq
    %v6495 = vshrl.u32 %v6494, 7
    %v6496 = vsub.s32 %v6493, %v6495
    %v6497 = vrot.slane %v6475, %v6496
    %v6499 = vunpack.c.l.s4 1966171168
    %v6500 = vunpack.c.0.s8 %v6499
    %v6501 = vlaneseq
    %v6502 = vshrl.u32 %v6501, 7
    %v6503 = vsub.s32 %v6500, %v6502
    %v6504 = vrot.slane %v6476, %v6503
    %v6505 = vcombine.high %v6483, %v6483
    %v6506 = vcombine.high %v6490, %v6490
    %v6507 = vcombine.high %v6497, %v6497
    %v6508 = vcombine.high %v6504, %v6504
    %6565 = vrot.lane.b32.xlu0 %v109, 32
    %v6566 = vpop.permute.xlu0 %6565
    %v6568 = vmul.f32 %v5643, %v6566
    %6569 = vrot.lane.b32.xlu0 %v1009, 96
    %v6570 = vpop.permute.xlu0 %6569
    %6571 = vrot.lane.b32.xlu0 %v1023, 96
    %v6572 = vpop.permute.xlu0 %6571
    %6573 = vrot.lane.b32.xlu0 %v1031, 96
    %v6574 = vpop.permute.xlu0 %6573
    %6575 = vrot.lane.b32.xlu0 %v1033, 96
    %v6576 = vpop.permute.xlu0 %6575
    %6577 = vrot.lane.b32.xlu0 %v1016, 96
    %v6578 = vpop.permute.xlu0 %6577
    %6579 = vrot.lane.b32.xlu0 %v1030, 96
    %v6580 = vpop.permute.xlu0 %6579
    %6581 = vrot.lane.b32.xlu0 %v1032, 96
    %v6582 = vpop.permute.xlu0 %6581
    %6583 = vrot.lane.b32.xlu0 %v1034, 96
    %v6584 = vpop.permute.xlu0 %6583
    %6585 = vrot.lane.b32.xlu0 %v1058, 96
    %v6586 = vpop.permute.xlu0 %6585
    %6587 = vrot.lane.b32.xlu0 %v1072, 96
    %v6588 = vpop.permute.xlu0 %6587
    %6589 = vrot.lane.b32.xlu0 %v1080, 96
    %v6590 = vpop.permute.xlu0 %6589
    %6591 = vrot.lane.b32.xlu0 %v1082, 96
    %v6592 = vpop.permute.xlu0 %6591
    %6593 = vrot.lane.b32.xlu0 %v1065, 96
    %v6594 = vpop.permute.xlu0 %6593
    %6595 = vrot.lane.b32.xlu0 %v1079, 96
    %v6596 = vpop.permute.xlu0 %6595
    %6597 = vrot.lane.b32.xlu0 %v1081, 96
    %v6598 = vpop.permute.xlu0 %6597
    %6599 = vrot.lane.b32.xlu0 %v1083, 96
    %v6600 = vpop.permute.xlu0 %6599
    %6601 = vrot.lane.b32.xlu0 %v1107, 96
    %v6602 = vpop.permute.xlu0 %6601
    %6603 = vrot.lane.b32.xlu0 %v1121, 96
    %v6604 = vpop.permute.xlu0 %6603
    %6605 = vrot.lane.b32.xlu0 %v1129, 96
    %v6606 = vpop.permute.xlu0 %6605
    %6607 = vrot.lane.b32.xlu0 %v1131, 96
    %v6608 = vpop.permute.xlu0 %6607
    %6609 = vrot.lane.b32.xlu0 %v1114, 96
    %v6610 = vpop.permute.xlu0 %6609
    %6611 = vrot.lane.b32.xlu0 %v1128, 96
    %v6612 = vpop.permute.xlu0 %6611
    %6613 = vrot.lane.b32.xlu0 %v1130, 96
    %v6614 = vpop.permute.xlu0 %6613
    %6615 = vrot.lane.b32.xlu0 %v1132, 96
    %v6616 = vpop.permute.xlu0 %6615
    %6617 = vrot.lane.b32.xlu0 %v1156, 96
    %v6618 = vpop.permute.xlu0 %6617
    %6619 = vrot.lane.b32.xlu0 %v1170, 96
    %v6620 = vpop.permute.xlu0 %6619
    %6621 = vrot.lane.b32.xlu0 %v1178, 96
    %v6622 = vpop.permute.xlu0 %6621
    %6623 = vrot.lane.b32.xlu0 %v1180, 96
    %v6624 = vpop.permute.xlu0 %6623
    %6625 = vrot.lane.b32.xlu0 %v1163, 96
    %v6626 = vpop.permute.xlu0 %6625
    %6627 = vrot.lane.b32.xlu0 %v1177, 96
    %v6628 = vpop.permute.xlu0 %6627
    %6629 = vrot.lane.b32.xlu0 %v1179, 96
    %v6630 = vpop.permute.xlu0 %6629
    %6631 = vrot.lane.b32.xlu0 %v1181, 96
    %v6632 = vpop.permute.xlu0 %6631
    %6633 = vrot.lane.b32.xlu0 %v1205, 96
    %v6634 = vpop.permute.xlu0 %6633
    %6635 = vrot.lane.b32.xlu0 %v1219, 96
    %v6636 = vpop.permute.xlu0 %6635
    %6637 = vrot.lane.b32.xlu0 %v1227, 96
    %v6638 = vpop.permute.xlu0 %6637
    %6639 = vrot.lane.b32.xlu0 %v1229, 96
    %v6640 = vpop.permute.xlu0 %6639
    %6641 = vrot.lane.b32.xlu0 %v1212, 96
    %v6642 = vpop.permute.xlu0 %6641
    %6643 = vrot.lane.b32.xlu0 %v1226, 96
    %v6644 = vpop.permute.xlu0 %6643
    %6645 = vrot.lane.b32.xlu0 %v1228, 96
    %v6646 = vpop.permute.xlu0 %6645
    %6647 = vrot.lane.b32.xlu0 %v1230, 96
    %v6648 = vpop.permute.xlu0 %6647
    %6649 = vrot.lane.b32.xlu0 %v1254, 96
    %v6650 = vpop.permute.xlu0 %6649
    %6651 = vrot.lane.b32.xlu0 %v1268, 96
    %v6652 = vpop.permute.xlu0 %6651
    %6653 = vrot.lane.b32.xlu0 %v1276, 96
    %v6654 = vpop.permute.xlu0 %6653
    %6655 = vrot.lane.b32.xlu0 %v1278, 96
    %v6656 = vpop.permute.xlu0 %6655
    %6657 = vrot.lane.b32.xlu0 %v1261, 96
    %v6658 = vpop.permute.xlu0 %6657
    %6659 = vrot.lane.b32.xlu0 %v1275, 96
    %v6660 = vpop.permute.xlu0 %6659
    %6661 = vrot.lane.b32.xlu0 %v1277, 96
    %v6662 = vpop.permute.xlu0 %6661
    %6663 = vrot.lane.b32.xlu0 %v1279, 96
    %v6664 = vpop.permute.xlu0 %6663
    %6665 = vrot.lane.b32.xlu0 %v1303, 96
    %v6666 = vpop.permute.xlu0 %6665
    %6667 = vrot.lane.b32.xlu0 %v1317, 96
    %v6668 = vpop.permute.xlu0 %6667
    %6669 = vrot.lane.b32.xlu0 %v1325, 96
    %v6670 = vpop.permute.xlu0 %6669
    %6671 = vrot.lane.b32.xlu0 %v1327, 96
    %v6672 = vpop.permute.xlu0 %6671
    %6673 = vrot.lane.b32.xlu0 %v1310, 96
    %v6674 = vpop.permute.xlu0 %6673
    %6675 = vrot.lane.b32.xlu0 %v1324, 96
    %v6676 = vpop.permute.xlu0 %6675
    %6677 = vrot.lane.b32.xlu0 %v1326, 96
    %v6678 = vpop.permute.xlu0 %6677
    %6679 = vrot.lane.b32.xlu0 %v1328, 96
    %v6680 = vpop.permute.xlu0 %6679
    %v6737 = vmul.f32 %v6189, %v6570
    %v6738 = vmul.f32 %v6203, %v6572
    %v6739 = vmul.f32 %v6211, %v6574
    %v6740 = vmul.f32 %v6213, %v6576
    %v6741 = vmul.f32 %v6196, %v6578
    %v6742 = vmul.f32 %v6210, %v6580
    %v6743 = vmul.f32 %v6212, %v6582
    %v6744 = vmul.f32 %v6214, %v6584
    %v6745 = vmul.f32 %v6238, %v6586
    %v6746 = vmul.f32 %v6252, %v6588
    %v6747 = vmul.f32 %v6260, %v6590
    %v6748 = vmul.f32 %v6262, %v6592
    %v6749 = vmul.f32 %v6245, %v6594
    %v6750 = vmul.f32 %v6259, %v6596
    %v6751 = vmul.f32 %v6261, %v6598
    %v6752 = vmul.f32 %v6263, %v6600
    %v6753 = vmul.f32 %v6287, %v6602
    %v6754 = vmul.f32 %v6301, %v6604
    %v6755 = vmul.f32 %v6309, %v6606
    %v6756 = vmul.f32 %v6311, %v6608
    %v6757 = vmul.f32 %v6294, %v6610
    %v6758 = vmul.f32 %v6308, %v6612
    %v6759 = vmul.f32 %v6310, %v6614
    %v6760 = vmul.f32 %v6312, %v6616
    %v6761 = vmul.f32 %v6336, %v6618
    %v6762 = vmul.f32 %v6350, %v6620
    %v6763 = vmul.f32 %v6358, %v6622
    %v6764 = vmul.f32 %v6360, %v6624
    %v6765 = vmul.f32 %v6343, %v6626
    %v6766 = vmul.f32 %v6357, %v6628
    %v6767 = vmul.f32 %v6359, %v6630
    %v6768 = vmul.f32 %v6361, %v6632
    %v6769 = vmul.f32 %v6385, %v6634
    %v6770 = vmul.f32 %v6399, %v6636
    %v6771 = vmul.f32 %v6407, %v6638
    %v6772 = vmul.f32 %v6409, %v6640
    %v6773 = vmul.f32 %v6392, %v6642
    %v6774 = vmul.f32 %v6406, %v6644
    %v6775 = vmul.f32 %v6408, %v6646
    %v6776 = vmul.f32 %v6410, %v6648
    %v6777 = vmul.f32 %v6434, %v6650
    %v6778 = vmul.f32 %v6448, %v6652
    %v6779 = vmul.f32 %v6456, %v6654
    %v6780 = vmul.f32 %v6458, %v6656
    %v6781 = vmul.f32 %v6441, %v6658
    %v6782 = vmul.f32 %v6455, %v6660
    %v6783 = vmul.f32 %v6457, %v6662
    %v6784 = vmul.f32 %v6459, %v6664
    %v6785 = vmul.f32 %v6483, %v6666
    %v6786 = vmul.f32 %v6497, %v6668
    %v6787 = vmul.f32 %v6505, %v6670
    %v6788 = vmul.f32 %v6507, %v6672
    %v6789 = vmul.f32 %v6490, %v6674
    %v6790 = vmul.f32 %v6504, %v6676
    %v6791 = vmul.f32 %v6506, %v6678
    %v6792 = vmul.f32 %v6508, %v6680
    %v6849 = vcombine.low %v6737, %v6738
    %v6850 = vcombine.low %v6739, %v6740
    %v6851 = vcombine.low %v6741, %v6742
    %v6853 = vunpack.c.l.s4 1966171168
    %v6854 = vunpack.c.0.s8 %v6853
    %v6855 = vlaneseq
    %v6856 = vshrl.u32 %v6855, 7
    %v6857 = vsub.s32 %v6854, %v6856
    %v6858 = vrot.slane %v6849, %v6857
    %v6860 = vunpack.c.l.s4 1966171168
    %v6861 = vunpack.c.0.s8 %v6860
    %v6862 = vlaneseq
    %v6863 = vshrl.u32 %v6862, 7
    %v6864 = vsub.s32 %v6861, %v6863
    %v6865 = vrot.slane %v6850, %v6864
    %v6867 = vunpack.c.l.s4 1966171168
    %v6868 = vunpack.c.0.s8 %v6867
    %v6869 = vlaneseq
    %v6870 = vshrl.u32 %v6869, 7
    %v6871 = vsub.s32 %v6868, %v6870
    %v6872 = vrot.slane %v6851, %v6871
    %v6874 = vunpack.c.l.s4 1966171168
    %v6875 = vunpack.c.0.s8 %v6874
    %v6876 = vlaneseq
    %v6877 = vshrl.u32 %v6876, 7
    %v6878 = vsub.s32 %v6875, %v6877
    %v6879 = vrot.slane %v6743, %v6878
    %v6880 = vcombine.low %v6858, %v6865
    %v6881 = vcombine.low %v6872, %v6879
    %v6883 = vunpack.c.l.s4 1966171168
    %v6884 = vunpack.c.0.s8 %v6883
    %v6885 = vlaneseq
    %v6886 = vshrl.u32 %v6885, 7
    %v6887 = vsub.s32 %v6884, %v6886
    %v6888 = vrot.slane %v6880, %v6887
    %v6890 = vunpack.c.l.s4 1966171168
    %v6891 = vunpack.c.0.s8 %v6890
    %v6892 = vlaneseq
    %v6893 = vshrl.u32 %v6892, 7
    %v6894 = vsub.s32 %v6891, %v6893
    %v6895 = vrot.slane %v6881, %v6894
    %v6896 = vcombine.low %v6888, %v6895
    %v6897 = vcombine.low %v6744, %v6745
    %v6898 = vcombine.low %v6746, %v6747
    %v6899 = vcombine.low %v6748, %v6749
    %v6901 = vunpack.c.l.s4 1966171168
    %v6902 = vunpack.c.0.s8 %v6901
    %v6903 = vlaneseq
    %v6904 = vshrl.u32 %v6903, 7
    %v6905 = vsub.s32 %v6902, %v6904
    %v6906 = vrot.slane %v6897, %v6905
    %v6908 = vunpack.c.l.s4 1966171168
    %v6909 = vunpack.c.0.s8 %v6908
    %v6910 = vlaneseq
    %v6911 = vshrl.u32 %v6910, 7
    %v6912 = vsub.s32 %v6909, %v6911
    %v6913 = vrot.slane %v6898, %v6912
    %v6915 = vunpack.c.l.s4 1966171168
    %v6916 = vunpack.c.0.s8 %v6915
    %v6917 = vlaneseq
    %v6918 = vshrl.u32 %v6917, 7
    %v6919 = vsub.s32 %v6916, %v6918
    %v6920 = vrot.slane %v6899, %v6919
    %v6922 = vunpack.c.l.s4 1966171168
    %v6923 = vunpack.c.0.s8 %v6922
    %v6924 = vlaneseq
    %v6925 = vshrl.u32 %v6924, 7
    %v6926 = vsub.s32 %v6923, %v6925
    %v6927 = vrot.slane %v6750, %v6926
    %v6928 = vcombine.low %v6906, %v6913
    %v6929 = vcombine.low %v6920, %v6927
    %v6931 = vunpack.c.l.s4 1966171168
    %v6932 = vunpack.c.0.s8 %v6931
    %v6933 = vlaneseq
    %v6934 = vshrl.u32 %v6933, 7
    %v6935 = vsub.s32 %v6932, %v6934
    %v6936 = vrot.slane %v6928, %v6935
    %v6938 = vunpack.c.l.s4 1966171168
    %v6939 = vunpack.c.0.s8 %v6938
    %v6940 = vlaneseq
    %v6941 = vshrl.u32 %v6940, 7
    %v6942 = vsub.s32 %v6939, %v6941
    %v6943 = vrot.slane %v6929, %v6942
    %v6944 = vcombine.low %v6936, %v6943
    %v6945 = vcombine.low %v6751, %v6752
    %v6946 = vcombine.low %v6753, %v6754
    %v6947 = vcombine.low %v6755, %v6756
    %v6949 = vunpack.c.l.s4 1966171168
    %v6950 = vunpack.c.0.s8 %v6949
    %v6951 = vlaneseq
    %v6952 = vshrl.u32 %v6951, 7
    %v6953 = vsub.s32 %v6950, %v6952
    %v6954 = vrot.slane %v6945, %v6953
    %v6956 = vunpack.c.l.s4 1966171168
    %v6957 = vunpack.c.0.s8 %v6956
    %v6958 = vlaneseq
    %v6959 = vshrl.u32 %v6958, 7
    %v6960 = vsub.s32 %v6957, %v6959
    %v6961 = vrot.slane %v6946, %v6960
    %v6963 = vunpack.c.l.s4 1966171168
    %v6964 = vunpack.c.0.s8 %v6963
    %v6965 = vlaneseq
    %v6966 = vshrl.u32 %v6965, 7
    %v6967 = vsub.s32 %v6964, %v6966
    %v6968 = vrot.slane %v6947, %v6967
    %v6970 = vunpack.c.l.s4 1966171168
    %v6971 = vunpack.c.0.s8 %v6970
    %v6972 = vlaneseq
    %v6973 = vshrl.u32 %v6972, 7
    %v6974 = vsub.s32 %v6971, %v6973
    %v6975 = vrot.slane %v6757, %v6974
    %v6976 = vcombine.low %v6954, %v6961
    %v6977 = vcombine.low %v6968, %v6975
    %v6979 = vunpack.c.l.s4 1966171168
    %v6980 = vunpack.c.0.s8 %v6979
    %v6981 = vlaneseq
    %v6982 = vshrl.u32 %v6981, 7
    %v6983 = vsub.s32 %v6980, %v6982
    %v6984 = vrot.slane %v6976, %v6983
    %v6986 = vunpack.c.l.s4 1966171168
    %v6987 = vunpack.c.0.s8 %v6986
    %v6988 = vlaneseq
    %v6989 = vshrl.u32 %v6988, 7
    %v6990 = vsub.s32 %v6987, %v6989
    %v6991 = vrot.slane %v6977, %v6990
    %v6992 = vcombine.low %v6984, %v6991
    %v6993 = vcombine.low %v6758, %v6759
    %v6994 = vcombine.low %v6760, %v6761
    %v6995 = vcombine.low %v6762, %v6763
    %v6997 = vunpack.c.l.s4 1966171168
    %v6998 = vunpack.c.0.s8 %v6997
    %v6999 = vlaneseq
    %v7000 = vshrl.u32 %v6999, 7
    %v7001 = vsub.s32 %v6998, %v7000
    %v7002 = vrot.slane %v6993, %v7001
    %v7004 = vunpack.c.l.s4 1966171168
    %v7005 = vunpack.c.0.s8 %v7004
    %v7006 = vlaneseq
    %v7007 = vshrl.u32 %v7006, 7
    %v7008 = vsub.s32 %v7005, %v7007
    %v7009 = vrot.slane %v6994, %v7008
    %v7011 = vunpack.c.l.s4 1966171168
    %v7012 = vunpack.c.0.s8 %v7011
    %v7013 = vlaneseq
    %v7014 = vshrl.u32 %v7013, 7
    %v7015 = vsub.s32 %v7012, %v7014
    %v7016 = vrot.slane %v6995, %v7015
    %v7018 = vunpack.c.l.s4 1966171168
    %v7019 = vunpack.c.0.s8 %v7018
    %v7020 = vlaneseq
    %v7021 = vshrl.u32 %v7020, 7
    %v7022 = vsub.s32 %v7019, %v7021
    %v7023 = vrot.slane %v6764, %v7022
    %v7024 = vcombine.low %v7002, %v7009
    %v7025 = vcombine.low %v7016, %v7023
    %v7027 = vunpack.c.l.s4 1966171168
    %v7028 = vunpack.c.0.s8 %v7027
    %v7029 = vlaneseq
    %v7030 = vshrl.u32 %v7029, 7
    %v7031 = vsub.s32 %v7028, %v7030
    %v7032 = vrot.slane %v7024, %v7031
    %v7034 = vunpack.c.l.s4 1966171168
    %v7035 = vunpack.c.0.s8 %v7034
    %v7036 = vlaneseq
    %v7037 = vshrl.u32 %v7036, 7
    %v7038 = vsub.s32 %v7035, %v7037
    %v7039 = vrot.slane %v7025, %v7038
    %v7040 = vcombine.low %v7032, %v7039
    %v7041 = vcombine.low %v6765, %v6766
    %v7042 = vcombine.low %v6767, %v6768
    %v7043 = vcombine.low %v6769, %v6770
    %v7045 = vunpack.c.l.s4 1966171168
    %v7046 = vunpack.c.0.s8 %v7045
    %v7047 = vlaneseq
    %v7048 = vshrl.u32 %v7047, 7
    %v7049 = vsub.s32 %v7046, %v7048
    %v7050 = vrot.slane %v7041, %v7049
    %v7052 = vunpack.c.l.s4 1966171168
    %v7053 = vunpack.c.0.s8 %v7052
    %v7054 = vlaneseq
    %v7055 = vshrl.u32 %v7054, 7
    %v7056 = vsub.s32 %v7053, %v7055
    %v7057 = vrot.slane %v7042, %v7056
    %v7059 = vunpack.c.l.s4 1966171168
    %v7060 = vunpack.c.0.s8 %v7059
    %v7061 = vlaneseq
    %v7062 = vshrl.u32 %v7061, 7
    %v7063 = vsub.s32 %v7060, %v7062
    %v7064 = vrot.slane %v7043, %v7063
    %v7066 = vunpack.c.l.s4 1966171168
    %v7067 = vunpack.c.0.s8 %v7066
    %v7068 = vlaneseq
    %v7069 = vshrl.u32 %v7068, 7
    %v7070 = vsub.s32 %v7067, %v7069
    %v7071 = vrot.slane %v6771, %v7070
    %v7072 = vcombine.low %v7050, %v7057
    %v7073 = vcombine.low %v7064, %v7071
    %v7075 = vunpack.c.l.s4 1966171168
    %v7076 = vunpack.c.0.s8 %v7075
    %v7077 = vlaneseq
    %v7078 = vshrl.u32 %v7077, 7
    %v7079 = vsub.s32 %v7076, %v7078
    %v7080 = vrot.slane %v7072, %v7079
    %v7082 = vunpack.c.l.s4 1966171168
    %v7083 = vunpack.c.0.s8 %v7082
    %v7084 = vlaneseq
    %v7085 = vshrl.u32 %v7084, 7
    %v7086 = vsub.s32 %v7083, %v7085
    %v7087 = vrot.slane %v7073, %v7086
    %v7088 = vcombine.low %v7080, %v7087
    %v7089 = vcombine.low %v6772, %v6773
    %v7090 = vcombine.low %v6774, %v6775
    %v7091 = vcombine.low %v6776, %v6777
    %v7093 = vunpack.c.l.s4 1966171168
    %v7094 = vunpack.c.0.s8 %v7093
    %v7095 = vlaneseq
    %v7096 = vshrl.u32 %v7095, 7
    %v7097 = vsub.s32 %v7094, %v7096
    %v7098 = vrot.slane %v7089, %v7097
    %v7100 = vunpack.c.l.s4 1966171168
    %v7101 = vunpack.c.0.s8 %v7100
    %v7102 = vlaneseq
    %v7103 = vshrl.u32 %v7102, 7
    %v7104 = vsub.s32 %v7101, %v7103
    %v7105 = vrot.slane %v7090, %v7104
    %v7107 = vunpack.c.l.s4 1966171168
    %v7108 = vunpack.c.0.s8 %v7107
    %v7109 = vlaneseq
    %v7110 = vshrl.u32 %v7109, 7
    %v7111 = vsub.s32 %v7108, %v7110
    %v7112 = vrot.slane %v7091, %v7111
    %v7114 = vunpack.c.l.s4 1966171168
    %v7115 = vunpack.c.0.s8 %v7114
    %v7116 = vlaneseq
    %v7117 = vshrl.u32 %v7116, 7
    %v7118 = vsub.s32 %v7115, %v7117
    %v7119 = vrot.slane %v6778, %v7118
    %v7120 = vcombine.low %v7098, %v7105
    %v7121 = vcombine.low %v7112, %v7119
    %v7123 = vunpack.c.l.s4 1966171168
    %v7124 = vunpack.c.0.s8 %v7123
    %v7125 = vlaneseq
    %v7126 = vshrl.u32 %v7125, 7
    %v7127 = vsub.s32 %v7124, %v7126
    %v7128 = vrot.slane %v7120, %v7127
    %v7130 = vunpack.c.l.s4 1966171168
    %v7131 = vunpack.c.0.s8 %v7130
    %v7132 = vlaneseq
    %v7133 = vshrl.u32 %v7132, 7
    %v7134 = vsub.s32 %v7131, %v7133
    %v7135 = vrot.slane %v7121, %v7134
    %v7136 = vcombine.low %v7128, %v7135
    %v7137 = vcombine.low %v6779, %v6780
    %v7138 = vcombine.low %v6781, %v6782
    %v7139 = vcombine.low %v6783, %v6784
    %v7141 = vunpack.c.l.s4 1966171168
    %v7142 = vunpack.c.0.s8 %v7141
    %v7143 = vlaneseq
    %v7144 = vshrl.u32 %v7143, 7
    %v7145 = vsub.s32 %v7142, %v7144
    %v7146 = vrot.slane %v7137, %v7145
    %v7148 = vunpack.c.l.s4 1966171168
    %v7149 = vunpack.c.0.s8 %v7148
    %v7150 = vlaneseq
    %v7151 = vshrl.u32 %v7150, 7
    %v7152 = vsub.s32 %v7149, %v7151
    %v7153 = vrot.slane %v7138, %v7152
    %v7155 = vunpack.c.l.s4 1966171168
    %v7156 = vunpack.c.0.s8 %v7155
    %v7157 = vlaneseq
    %v7158 = vshrl.u32 %v7157, 7
    %v7159 = vsub.s32 %v7156, %v7158
    %v7160 = vrot.slane %v7139, %v7159
    %v7162 = vunpack.c.l.s4 1966171168
    %v7163 = vunpack.c.0.s8 %v7162
    %v7164 = vlaneseq
    %v7165 = vshrl.u32 %v7164, 7
    %v7166 = vsub.s32 %v7163, %v7165
    %v7167 = vrot.slane %v6785, %v7166
    %v7168 = vcombine.low %v7146, %v7153
    %v7169 = vcombine.low %v7160, %v7167
    %v7171 = vunpack.c.l.s4 1966171168
    %v7172 = vunpack.c.0.s8 %v7171
    %v7173 = vlaneseq
    %v7174 = vshrl.u32 %v7173, 7
    %v7175 = vsub.s32 %v7172, %v7174
    %v7176 = vrot.slane %v7168, %v7175
    %v7178 = vunpack.c.l.s4 1966171168
    %v7179 = vunpack.c.0.s8 %v7178
    %v7180 = vlaneseq
    %v7181 = vshrl.u32 %v7180, 7
    %v7182 = vsub.s32 %v7179, %v7181
    %v7183 = vrot.slane %v7169, %v7182
    %v7184 = vcombine.low %v7176, %v7183
    %v7185 = vcombine.low %v6786, %v6787
    %v7186 = vcombine.low %v6788, %v6789
    %v7187 = vcombine.low %v6790, %v6791
    %v7189 = vunpack.c.l.s4 1966171168
    %v7190 = vunpack.c.0.s8 %v7189
    %v7191 = vlaneseq
    %v7192 = vshrl.u32 %v7191, 7
    %v7193 = vsub.s32 %v7190, %v7192
    %v7194 = vrot.slane %v7185, %v7193
    %v7196 = vunpack.c.l.s4 1966171168
    %v7197 = vunpack.c.0.s8 %v7196
    %v7198 = vlaneseq
    %v7199 = vshrl.u32 %v7198, 7
    %v7200 = vsub.s32 %v7197, %v7199
    %v7201 = vrot.slane %v7186, %v7200
    %v7203 = vunpack.c.l.s4 1966171168
    %v7204 = vunpack.c.0.s8 %v7203
    %v7205 = vlaneseq
    %v7206 = vshrl.u32 %v7205, 7
    %v7207 = vsub.s32 %v7204, %v7206
    %v7208 = vrot.slane %v7187, %v7207
    %v7210 = vunpack.c.l.s4 1966171168
    %v7211 = vunpack.c.0.s8 %v7210
    %v7212 = vlaneseq
    %v7213 = vshrl.u32 %v7212, 7
    %v7214 = vsub.s32 %v7211, %v7213
    %v7215 = vrot.slane %v6792, %v7214
    %v7216 = vcombine.low %v7194, %v7201
    %v7217 = vcombine.low %v7208, %v7215
    %v7219 = vunpack.c.l.s4 1966171168
    %v7220 = vunpack.c.0.s8 %v7219
    %v7221 = vlaneseq
    %v7222 = vshrl.u32 %v7221, 7
    %v7223 = vsub.s32 %v7220, %v7222
    %v7224 = vrot.slane %v7216, %v7223
    %v7226 = vunpack.c.l.s4 1966171168
    %v7227 = vunpack.c.0.s8 %v7226
    %v7228 = vlaneseq
    %v7229 = vshrl.u32 %v7228, 7
    %v7230 = vsub.s32 %v7227, %v7229
    %v7231 = vrot.slane %v7217, %v7230
    %v7232 = vcombine.low %v7224, %v7231
    %vm7241 = vcmask 260096
    %v7242 = vsel %vm7241, %v6896, 0.0
    %v7243 = vrot.slane %v7242, 4
    %v7244 = vadd.f32 %v7242, %v7243
    %v7245 = vrot.slane %v7244, 2
    %v7246 = vadd.f32 %v7244, %v7245
    %v7247 = vrot.slane %v7246, 1
    %v7248 = vadd.f32 %v7246, %v7247
    %v7249 = vsel %vm7241, %v6944, 0.0
    %v7250 = vrot.slane %v7249, 4
    %v7251 = vadd.f32 %v7249, %v7250
    %v7252 = vrot.slane %v7251, 2
    %v7253 = vadd.f32 %v7251, %v7252
    %v7254 = vrot.slane %v7253, 1
    %v7255 = vadd.f32 %v7253, %v7254
    %v7256 = vsel %vm7241, %v6992, 0.0
    %v7257 = vrot.slane %v7256, 4
    %v7258 = vadd.f32 %v7256, %v7257
    %v7259 = vrot.slane %v7258, 2
    %v7260 = vadd.f32 %v7258, %v7259
    %v7261 = vrot.slane %v7260, 1
    %v7262 = vadd.f32 %v7260, %v7261
    %v7263 = vsel %vm7241, %v7040, 0.0
    %v7264 = vrot.slane %v7263, 4
    %v7265 = vadd.f32 %v7263, %v7264
    %v7266 = vrot.slane %v7265, 2
    %v7267 = vadd.f32 %v7265, %v7266
    %v7268 = vrot.slane %v7267, 1
    %v7269 = vadd.f32 %v7267, %v7268
    %v7270 = vsel %vm7241, %v7088, 0.0
    %v7271 = vrot.slane %v7270, 4
    %v7272 = vadd.f32 %v7270, %v7271
    %v7273 = vrot.slane %v7272, 2
    %v7274 = vadd.f32 %v7272, %v7273
    %v7275 = vrot.slane %v7274, 1
    %v7276 = vadd.f32 %v7274, %v7275
    %v7277 = vsel %vm7241, %v7136, 0.0
    %v7278 = vrot.slane %v7277, 4
    %v7279 = vadd.f32 %v7277, %v7278
    %v7280 = vrot.slane %v7279, 2
    %v7281 = vadd.f32 %v7279, %v7280
    %v7282 = vrot.slane %v7281, 1
    %v7283 = vadd.f32 %v7281, %v7282
    %v7284 = vsel %vm7241, %v7184, 0.0
    %v7285 = vrot.slane %v7284, 4
    %v7286 = vadd.f32 %v7284, %v7285
    %v7287 = vrot.slane %v7286, 2
    %v7288 = vadd.f32 %v7286, %v7287
    %v7289 = vrot.slane %v7288, 1
    %v7290 = vadd.f32 %v7288, %v7289
    %v7291 = vsel %vm7241, %v7232, 0.0
    %v7292 = vrot.slane %v7291, 4
    %v7293 = vadd.f32 %v7291, %v7292
    %v7294 = vrot.slane %v7293, 2
    %v7295 = vadd.f32 %v7293, %v7294
    %v7296 = vrot.slane %v7295, 1
    %v7297 = vadd.f32 %v7295, %v7296
    %v7306 = vsel %vm3758, %v7255, %v7248
    %v7307 = vsel %vm3760, %v7262, %v7306
    %v7308 = vsel %vm3762, %v7269, %v7307
    %v7309 = vsel %vm3764, %v7276, %v7308
    %v7310 = vsel %vm3766, %v7283, %v7309
    %v7311 = vsel %vm3768, %v7290, %v7310
    %v7312 = vsel %vm3770, %v7297, %v7311
    %v7314 = vadd.f32 %v6568, %v7312
    %v7315 = vld [vmem:[#allocation2 + $0x38] sm:$0xff]
    %v7316 = vld [vmem:[#allocation2 + $0x40] sm:$0xff]
    %v7317 = vld [vmem:[#allocation2 + $0x48] sm:$0xff]
    %v7318 = vld [vmem:[#allocation2 + $0x50] sm:$0xff]
    %v7319 = vld [vmem:[#allocation2 + $0x110] sm:$0x1]
    %v7320 = vlaneseq
    %v7321 = vshrl.u32 %v7320, 7
    %v7322 = vsub.s32 0, %v7321
    %v7323 = vrot.slane %v7319, %v7322
    %v7325 = vsel %vm864, %v7314, 0
    %7327 = vmatprep.subr.mxu0 0.0
    %7328 = vmatpush1.msra.mxu0 %v7315
    %7329 = vmatprep.subr.mxu0 0.0
    %7330 = vmatpush1.msra.mxu0 %v7316
    %7331 = vmatprep.subr.mxu0 0.0
    %7332 = vmatpush1.msra.mxu0 %v7317
    %7333 = vmatprep.subr.mxu0 0.0
    %7334 = vmatpush1.msra.mxu0 %v7318
    %7335 = vmatprep.subr.mxu0 0.0
    %7336 = vmatpush1.msra.mxu0 0.0
    %7337 = vmatprep.subr.mxu0 0.0
    %7338 = vmatpush1.msra.mxu0 0.0
    %7339 = vmatprep.subr.mxu0 0.0
    %7340 = vmatpush1.msra.mxu0 0.0
    %7341 = vmatprep.subr.mxu0 0.0
    %7342 = vmatpush1.msra.mxu0 0.0
    %7343 = vmatprep.subr.mxu0 0.0
    %7344 = vmatpush1.msra.mxu0 0.0
    %7345 = vmatprep.subr.mxu0 0.0
    %7346 = vmatpush1.msra.mxu0 0.0
    %7347 = vmatprep.subr.mxu0 0.0
    %7348 = vmatpush1.msra.mxu0 0.0
    %7349 = vmatprep.subr.mxu0 0.0
    %7350 = vmatpush1.msra.mxu0 0.0
    %7351 = vmatprep.subr.mxu0 0.0
    %7352 = vmatpush1.msra.mxu0 0.0
    %7353 = vmatprep.subr.mxu0 0.0
    %7354 = vmatpush1.msra.mxu0 0.0
    %7355 = vmatprep.subr.mxu0 0.0
    %7356 = vmatpush1.msra.mxu0 0.0
    %7357 = vmatprep.subr.mxu0 0.0
    %7358 = vmatpush1.msra.mxu0 0.0
    %7359 = vmatprep.subr.mxu0 0.0
    %7360 = vmatpush1.msra.mxu0 0.0
    %7361 = vmatprep.subr.mxu0 0.0
    %7362 = vmatpush1.msra.mxu0 0.0
    %7363 = vmatprep.subr.mxu0 0.0
    %7364 = vmatpush1.msra.mxu0 0.0
    %7365 = vmatprep.subr.mxu0 0.0
    %7366 = vmatpush1.msra.mxu0 0.0
    %7367 = vmatprep.subr.mxu0 0.0
    %7368 = vmatpush1.msra.mxu0 0.0
    %7369 = vmatprep.subr.mxu0 0.0
    %7370 = vmatpush1.msra.mxu0 0.0
    %7371 = vmatprep.subr.mxu0 0.0
    %7372 = vmatpush1.msra.mxu0 0.0
    %7373 = vmatprep.subr.mxu0 0.0
    %7374 = vmatpush1.msra.mxu0 0.0
    %7375 = vmatprep.subr.mxu0 0.0
    %7376 = vmatpush1.msra.mxu0 0.0
    %7377 = vmatprep.subr.mxu0 0.0
    %7378 = vmatpush1.msra.mxu0 0.0
    %7379 = vmatprep.subr.mxu0 0.0
    %7380 = vmatpush1.msra.mxu0 0.0
    %7381 = vmatprep.subr.mxu0 0.0
    %7382 = vmatpush1.msra.mxu0 0.0
    %7383 = vmatprep.subr.mxu0 0.0
    %7384 = vmatpush1.msra.mxu0 0.0
    %7385 = vmatprep.subr.mxu0 0.0
    %7386 = vmatpush1.msra.mxu0 0.0
    %7387 = vmatprep.subr.mxu0 0.0
    %7388 = vmatpush1.msra.mxu0 0.0
    %7389 = vmatprep.subr.mxu0 0.0
    %7390 = vmatpush1.msra.mxu0 0.0
    %7391 = vmatprep.mubr.f32.mxu0 0.0
    %7392 = vmatmul.mubr.f32.gmra.mrb[0].mxu0 %v7325
    %v7393 = vpop.f32.mrb[0].mxu0
    %v7394 = vadd.f32 %v7323, %v7393
    %v7395 = vpop.f32.mrb[0].mxu0
    %7396 = vdwg.mxu0
    %v7397 = vadd.f32 %v109, %v7394
    %v7398 = vld [vmem:[#allocation2 + $0x118] sm:$0x1]
    %v7399 = vld [vmem:[#allocation2 + $0x120] sm:$0x1]
    %v7400 = vsel %vm864, %v7397, 0.0
    %7401 = vadd.xlane.f32.xlu0 %v7400
    %v7402 = vpop.xlane.xlu0 %7401
    %v7403 = vrcp.pop 32.0
    %v7404 = vmul.f32 %v7402, %v7403
    %v7405 = vsub.f32 %v7397, %v7404
    %v7406 = vmul.f32 %v7405, %v7405
    %v7407 = vsel %vm864, %v7406, 0.0
    %7408 = vadd.xlane.f32.xlu0 %v7407
    %v7409 = vpop.xlane.xlu0 %7408
    %v7410 = vmul.f32 %v7409, %v7403
    %v7411 = vadd.f32 %v7410, 1e-05
    %v7412 = vrsqrt.pop %v7411
    %v7413 = vmul.f32 %v7405, %v7412
    %v7414 = vlaneseq
    %v7415 = vshrl.u32 %v7414, 7
    %v7416 = vsub.s32 0, %v7415
    %v7417 = vrot.slane %v7398, %v7416
    %v7418 = vmul.f32 %v7413, %v7417
    %v7419 = vlaneseq
    %v7420 = vshrl.u32 %v7419, 7
    %v7421 = vsub.s32 0, %v7420
    %v7422 = vrot.slane %v7399, %v7421
    %v7423 = vadd.f32 %v7418, %v7422
    %v7424 = vld [vmem:[#allocation2 + $0x58] sm:$0xff]
    %v7425 = vld [vmem:[#allocation2 + $0x60] sm:$0xff]
    %v7426 = vld [vmem:[#allocation2 + $0x68] sm:$0xff]
    %v7427 = vld [vmem:[#allocation2 + $0x70] sm:$0xff]
    %v7428 = vld [vmem:[#allocation2 + $0x128] sm:$0x1]
    %v7429 = vlaneseq
    %v7430 = vshrl.u32 %v7429, 7
    %v7431 = vsub.s32 0, %v7430
    %v7432 = vrot.slane %v7428, %v7431
    %v7434 = vsel %vm864, %v7423, 0
    %7436 = vmatprep.subr.mxu0 0.0
    %7437 = vmatpush1.msra.mxu0 %v7424
    %7438 = vmatprep.subr.mxu0 0.0
    %7439 = vmatpush1.msra.mxu0 %v7425
    %7440 = vmatprep.subr.mxu0 0.0
    %7441 = vmatpush1.msra.mxu0 %v7426
    %7442 = vmatprep.subr.mxu0 0.0
    %7443 = vmatpush1.msra.mxu0 %v7427
    %7444 = vmatprep.subr.mxu0 0.0
    %7445 = vmatpush1.msra.mxu0 0.0
    %7446 = vmatprep.subr.mxu0 0.0
    %7447 = vmatpush1.msra.mxu0 0.0
    %7448 = vmatprep.subr.mxu0 0.0
    %7449 = vmatpush1.msra.mxu0 0.0
    %7450 = vmatprep.subr.mxu0 0.0
    %7451 = vmatpush1.msra.mxu0 0.0
    %7452 = vmatprep.subr.mxu0 0.0
    %7453 = vmatpush1.msra.mxu0 0.0
    %7454 = vmatprep.subr.mxu0 0.0
    %7455 = vmatpush1.msra.mxu0 0.0
    %7456 = vmatprep.subr.mxu0 0.0
    %7457 = vmatpush1.msra.mxu0 0.0
    %7458 = vmatprep.subr.mxu0 0.0
    %7459 = vmatpush1.msra.mxu0 0.0
    %7460 = vmatprep.subr.mxu0 0.0
    %7461 = vmatpush1.msra.mxu0 0.0
    %7462 = vmatprep.subr.mxu0 0.0
    %7463 = vmatpush1.msra.mxu0 0.0
    %7464 = vmatprep.subr.mxu0 0.0
    %7465 = vmatpush1.msra.mxu0 0.0
    %7466 = vmatprep.subr.mxu0 0.0
    %7467 = vmatpush1.msra.mxu0 0.0
    %7468 = vmatprep.subr.mxu0 0.0
    %7469 = vmatpush1.msra.mxu0 0.0
    %7470 = vmatprep.subr.mxu0 0.0
    %7471 = vmatpush1.msra.mxu0 0.0
    %7472 = vmatprep.subr.mxu0 0.0
    %7473 = vmatpush1.msra.mxu0 0.0
    %7474 = vmatprep.subr.mxu0 0.0
    %7475 = vmatpush1.msra.mxu0 0.0
    %7476 = vmatprep.subr.mxu0 0.0
    %7477 = vmatpush1.msra.mxu0 0.0
    %7478 = vmatprep.subr.mxu0 0.0
    %7479 = vmatpush1.msra.mxu0 0.0
    %7480 = vmatprep.subr.mxu0 0.0
    %7481 = vmatpush1.msra.mxu0 0.0
    %7482 = vmatprep.subr.mxu0 0.0
    %7483 = vmatpush1.msra.mxu0 0.0
    %7484 = vmatprep.subr.mxu0 0.0
    %7485 = vmatpush1.msra.mxu0 0.0
    %7486 = vmatprep.subr.mxu0 0.0
    %7487 = vmatpush1.msra.mxu0 0.0
    %7488 = vmatprep.subr.mxu0 0.0
    %7489 = vmatpush1.msra.mxu0 0.0
    %7490 = vmatprep.subr.mxu0 0.0
    %7491 = vmatpush1.msra.mxu0 0.0
    %7492 = vmatprep.subr.mxu0 0.0
    %7493 = vmatpush1.msra.mxu0 0.0
    %7494 = vmatprep.subr.mxu0 0.0
    %7495 = vmatpush1.msra.mxu0 0.0
    %7496 = vmatprep.subr.mxu0 0.0
    %7497 = vmatpush1.msra.mxu0 0.0
    %7498 = vmatprep.subr.mxu0 0.0
    %7499 = vmatpush1.msra.mxu0 0.0
    %7500 = vmatprep.mubr.f32.mxu0 0.0
    %7501 = vmatmul.mubr.f32.gmra.mrb[0].mxu0 %v7434
    %v7502 = vpop.f32.mrb[0].mxu0
    %v7503 = vadd.f32 %v7432, %v7502
    %v7504 = vpop.f32.mrb[0].mxu0
    %7505 = vdwg.mxu0
    %v7506 = vmax.f32 %v7503, 0.0
    %v7507 = vld [vmem:[#allocation2 + $0x78] sm:$0xff]
    %v7508 = vld [vmem:[#allocation2 + $0x80] sm:$0xff]
    %v7509 = vld [vmem:[#allocation2 + $0x88] sm:$0xff]
    %v7510 = vld [vmem:[#allocation2 + $0x90] sm:$0xff]
    %v7511 = vld [vmem:[#allocation2 + $0x98] sm:$0xff]
    %v7512 = vld [vmem:[#allocation2 + $0xa0] sm:$0xff]
    %v7513 = vld [vmem:[#allocation2 + $0xa8] sm:$0xff]
    %v7514 = vld [vmem:[#allocation2 + $0xb0] sm:$0xff]
    %v7515 = vld [vmem:[#allocation2 + $0x130] sm:$0x1]
    %v7516 = vlaneseq
    %v7517 = vshrl.u32 %v7516, 7
    %v7518 = vsub.s32 0, %v7517
    %v7519 = vrot.slane %v7515, %v7518
    %vm7520 = vcmask 523264
    %v7522 = vsel %vm7520, %v7506, 0
    %7524 = vmatprep.subr.mxu0 0.0
    %7525 = vmatpush1.msra.mxu0 %v7507
    %7526 = vmatprep.subr.mxu0 0.0
    %7527 = vmatpush1.msra.mxu0 %v7508
    %7528 = vmatprep.subr.mxu0 0.0
    %7529 = vmatpush1.msra.mxu0 %v7509
    %7530 = vmatprep.subr.mxu0 0.0
    %7531 = vmatpush1.msra.mxu0 %v7510
    %7532 = vmatprep.subr.mxu0 0.0
    %7533 = vmatpush1.msra.mxu0 %v7511
    %7534 = vmatprep.subr.mxu0 0.0
    %7535 = vmatpush1.msra.mxu0 %v7512
    %7536 = vmatprep.subr.mxu0 0.0
    %7537 = vmatpush1.msra.mxu0 %v7513
    %7538 = vmatprep.subr.mxu0 0.0
    %7539 = vmatpush1.msra.mxu0 %v7514
    %7540 = vmatprep.subr.mxu0 0.0
    %7541 = vmatpush1.msra.mxu0 0.0
    %7542 = vmatprep.subr.mxu0 0.0
    %7543 = vmatpush1.msra.mxu0 0.0
    %7544 = vmatprep.subr.mxu0 0.0
    %7545 = vmatpush1.msra.mxu0 0.0
    %7546 = vmatprep.subr.mxu0 0.0
    %7547 = vmatpush1.msra.mxu0 0.0
    %7548 = vmatprep.subr.mxu0 0.0
    %7549 = vmatpush1.msra.mxu0 0.0
    %7550 = vmatprep.subr.mxu0 0.0
    %7551 = vmatpush1.msra.mxu0 0.0
    %7552 = vmatprep.subr.mxu0 0.0
    %7553 = vmatpush1.msra.mxu0 0.0
    %7554 = vmatprep.subr.mxu0 0.0
    %7555 = vmatpush1.msra.mxu0 0.0
    %7556 = vmatprep.subr.mxu0 0.0
    %7557 = vmatpush1.msra.mxu0 0.0
    %7558 = vmatprep.subr.mxu0 0.0
    %7559 = vmatpush1.msra.mxu0 0.0
    %7560 = vmatprep.subr.mxu0 0.0
    %7561 = vmatpush1.msra.mxu0 0.0
    %7562 = vmatprep.subr.mxu0 0.0
    %7563 = vmatpush1.msra.mxu0 0.0
    %7564 = vmatprep.subr.mxu0 0.0
    %7565 = vmatpush1.msra.mxu0 0.0
    %7566 = vmatprep.subr.mxu0 0.0
    %7567 = vmatpush1.msra.mxu0 0.0
    %7568 = vmatprep.subr.mxu0 0.0
    %7569 = vmatpush1.msra.mxu0 0.0
    %7570 = vmatprep.subr.mxu0 0.0
    %7571 = vmatpush1.msra.mxu0 0.0
    %7572 = vmatprep.subr.mxu0 0.0
    %7573 = vmatpush1.msra.mxu0 0.0
    %7574 = vmatprep.subr.mxu0 0.0
    %7575 = vmatpush1.msra.mxu0 0.0
    %7576 = vmatprep.subr.mxu0 0.0
    %7577 = vmatpush1.msra.mxu0 0.0
    %7578 = vmatprep.subr.mxu0 0.0
    %7579 = vmatpush1.msra.mxu0 0.0
    %7580 = vmatprep.subr.mxu0 0.0
    %7581 = vmatpush1.msra.mxu0 0.0
    %7582 = vmatprep.subr.mxu0 0.0
    %7583 = vmatpush1.msra.mxu0 0.0
    %7584 = vmatprep.subr.mxu0 0.0
    %7585 = vmatpush1.msra.mxu0 0.0
    %7586 = vmatprep.subr.mxu0 0.0
    %7587 = vmatpush1.msra.mxu0 0.0
    %7588 = vmatprep.mubr.f32.mxu0 0.0
    %7589 = vmatmul.mubr.f32.gmra.mrb[0].mxu0 %v7522
    %v7590 = vpop.f32.mrb[0].mxu0
    %v7591 = vadd.f32 %v7519, %v7590
    %v7592 = vpop.f32.mrb[0].mxu0
    %7593 = vdwg.mxu0
    %v7594 = vadd.f32 %v7423, %v7591
    %v7595 = vld [vmem:[#allocation2 + $0x138] sm:$0x1]
    %v7596 = vld [vmem:[#allocation2 + $0x140] sm:$0x1]
    %v7597 = vsel %vm864, %v7594, 0.0
    %7598 = vadd.xlane.f32.xlu0 %v7597
    %v7599 = vpop.xlane.xlu0 %7598
    %v7600 = vmul.f32 %v7599, %v7403
    %v7601 = vsub.f32 %v7594, %v7600
    %v7602 = vmul.f32 %v7601, %v7601
    %v7603 = vsel %vm864, %v7602, 0.0
    %7604 = vadd.xlane.f32.xlu0 %v7603
    %v7605 = vpop.xlane.xlu0 %7604
    %v7606 = vmul.f32 %v7605, %v7403
    %v7607 = vadd.f32 %v7606, 1e-05
    %v7608 = vrsqrt.pop %v7607
    %v7609 = vmul.f32 %v7601, %v7608
    %v7610 = vlaneseq
    %v7611 = vshrl.u32 %v7610, 7
    %v7612 = vsub.s32 0, %v7611
    %v7613 = vrot.slane %v7595, %v7612
    %v7614 = vmul.f32 %v7609, %v7613
    %v7615 = vlaneseq
    %v7616 = vshrl.u32 %v7615, 7
    %v7617 = vsub.s32 0, %v7616
    %v7618 = vrot.slane %v7596, %v7617
    %v7619 = vadd.f32 %v7614, %v7618
    %v7620 = vld [vmem:[#allocation2 + $0xb8] sm:$0xff]
    %v7621 = vld [vmem:[#allocation2 + $0xc0] sm:$0xff]
    %v7622 = vld [vmem:[#allocation2 + $0xc8] sm:$0xff]
    %v7623 = vld [vmem:[#allocation2 + $0xd0] sm:$0xff]
    %v7624 = vld [vmem:[#allocation2 + $0x148] sm:$0x1]
    %v7625 = vlaneseq
    %v7626 = vshrl.u32 %v7625, 7
    %v7627 = vsub.s32 0, %v7626
    %v7628 = vrot.slane %v7624, %v7627
    %v7630 = vsel %vm864, %v7619, 0
    %7632 = vmatprep.subr.mxu0 0.0
    %7633 = vmatpush1.msra.mxu0 %v7620
    %7634 = vmatprep.subr.mxu0 0.0
    %7635 = vmatpush1.msra.mxu0 %v7621
    %7636 = vmatprep.subr.mxu0 0.0
    %7637 = vmatpush1.msra.mxu0 %v7622
    %7638 = vmatprep.subr.mxu0 0.0
    %7639 = vmatpush1.msra.mxu0 %v7623
    %7640 = vmatprep.subr.mxu0 0.0
    %7641 = vmatpush1.msra.mxu0 0.0
    %7642 = vmatprep.subr.mxu0 0.0
    %7643 = vmatpush1.msra.mxu0 0.0
    %7644 = vmatprep.subr.mxu0 0.0
    %7645 = vmatpush1.msra.mxu0 0.0
    %7646 = vmatprep.subr.mxu0 0.0
    %7647 = vmatpush1.msra.mxu0 0.0
    %7648 = vmatprep.subr.mxu0 0.0
    %7649 = vmatpush1.msra.mxu0 0.0
    %7650 = vmatprep.subr.mxu0 0.0
    %7651 = vmatpush1.msra.mxu0 0.0
    %7652 = vmatprep.subr.mxu0 0.0
    %7653 = vmatpush1.msra.mxu0 0.0
    %7654 = vmatprep.subr.mxu0 0.0
    %7655 = vmatpush1.msra.mxu0 0.0
    %7656 = vmatprep.subr.mxu0 0.0
    %7657 = vmatpush1.msra.mxu0 0.0
    %7658 = vmatprep.subr.mxu0 0.0
    %7659 = vmatpush1.msra.mxu0 0.0
    %7660 = vmatprep.subr.mxu0 0.0
    %7661 = vmatpush1.msra.mxu0 0.0
    %7662 = vmatprep.subr.mxu0 0.0
    %7663 = vmatpush1.msra.mxu0 0.0
    %7664 = vmatprep.subr.mxu0 0.0
    %7665 = vmatpush1.msra.mxu0 0.0
    %7666 = vmatprep.subr.mxu0 0.0
    %7667 = vmatpush1.msra.mxu0 0.0
    %7668 = vmatprep.subr.mxu0 0.0
    %7669 = vmatpush1.msra.mxu0 0.0
    %7670 = vmatprep.subr.mxu0 0.0
    %7671 = vmatpush1.msra.mxu0 0.0
    %7672 = vmatprep.subr.mxu0 0.0
    %7673 = vmatpush1.msra.mxu0 0.0
    %7674 = vmatprep.subr.mxu0 0.0
    %7675 = vmatpush1.msra.mxu0 0.0
    %7676 = vmatprep.subr.mxu0 0.0
    %7677 = vmatpush1.msra.mxu0 0.0
    %7678 = vmatprep.subr.mxu0 0.0
    %7679 = vmatpush1.msra.mxu0 0.0
    %7680 = vmatprep.subr.mxu0 0.0
    %7681 = vmatpush1.msra.mxu0 0.0
    %7682 = vmatprep.subr.mxu0 0.0
    %7683 = vmatpush1.msra.mxu0 0.0
    %7684 = vmatprep.subr.mxu0 0.0
    %7685 = vmatpush1.msra.mxu0 0.0
    %7686 = vmatprep.subr.mxu0 0.0
    %7687 = vmatpush1.msra.mxu0 0.0
    %7688 = vmatprep.subr.mxu0 0.0
    %7689 = vmatpush1.msra.mxu0 0.0
    %7690 = vmatprep.subr.mxu0 0.0
    %7691 = vmatpush1.msra.mxu0 0.0
    %7692 = vmatprep.subr.mxu0 0.0
    %7693 = vmatpush1.msra.mxu0 0.0
    %7694 = vmatprep.subr.mxu0 0.0
    %7695 = vmatpush1.msra.mxu0 0.0
    %7696 = vmatprep.mubr.f32.mxu0 0.0
    %7697 = vmatmul.mubr.f32.gmra.mrb[0].mxu0 %v7630
    %v7698 = vpop.f32.mrb[0].mxu0
    %v7699 = vadd.f32 %v7628, %v7698
    %v7700 = vpop.f32.mrb[0].mxu0
    %7701 = vdwg.mxu0
    %7702 = vst [vmem:[#allocation5] sm:$0xff] %v7699
    // Predicated region
    $region18: #{tpu_custom_call.1} parent=1 // pred_check
      _
    $region19: #{tpu_custom_call.1} parent=1 // pred_check_branch
      %7704 = sbr.rel (0) target = $region21
    $region20: #{tpu_custom_call.1} parent=1 // pred_region
      %s7706 = ssub.s32 128, 128
      %7707 = vsyncadd [#allocation4], %s7706
      %s7709 = sshll.u32 [#allocation5], 4
      %s7710 = int_to_ptr.vmem [resolvable:$true] %s7709
      %7712 = dma.vmem_to_hbm [thread:$0]  %s7710, 128, %s3, [#allocation4]
    $region21: #{tpu_custom_call.1} parent=1 // pred_fallthru
      _
    // Predicated region
    $region22: #{tpu_custom_call.1} parent=1 // pred_check
      _
    $region23: #{tpu_custom_call.1} parent=1 // pred_check_branch
      %7714 = sbr.rel (0) target = $region25
    $region24: #{tpu_custom_call.1} parent=1 // pred_region
      %7715 = dma.done [#allocation4], 128
    $region25: #{tpu_custom_call.1} parent=1 // pred_fallthru
      _
    %7716 = vsyncpa [#allocation3], 1
    %7717 = vsyncpa [#allocation4], 1

</llo_original>
